<compile_context>
chip_gen: v6e
topology: v6e:2x2x1
jax: 0.10.0
libtpu: 0.0.40
codegen_flags: <defaults>
</compile_context>

<pallas_src>
import math
import functools

import jax
import jax.numpy as jnp
from jax.experimental import pallas as pl
from jax.experimental.pallas import tpu as pltpu

PAD_ID = 1     # '<pad>' in SEQUENCE_VOCAB
CLS_ID = 0
EOS_ID = 2
VOCAB = 64     # ESMC embedding / output vocab size

LN_EPS = 1e-5
NEG_INF = -1e30
VMEM_LIMIT = 48 * 1024 * 1024   # explicit scoped-VMEM budget (fits v5e/v6e/v7x)


# ----------------------------- tiling helpers -----------------------------

def _tile(dim, pref, align):
    """Largest divisor of `dim` that is <= pref and a multiple of `align`;
    falls back to `dim` itself (single block) if none exists."""
    if dim <= pref:
        return dim
    t = (pref // align) * align
    while t >= align:
        if dim % t == 0:
            return t
        t -= align
    return dim


def _cparams(semantics):
    return pltpu.CompilerParams(dimension_semantics=semantics,
                                vmem_limit_bytes=VMEM_LIMIT)


# ----------------------------- Pallas kernels -----------------------------

def _ln_kernel(x_ref, w_ref, *rest, has_bias):
    """Plain LayerNorm over the last dim (torch eps=1e-5); optional bias."""
    b_ref = rest[0] if has_bias else None
    o_ref = rest[-1]
    x = x_ref[...].astype(jnp.float32)
    mu = jnp.mean(x, axis=-1, keepdims=True)
    xc = x - mu
    var = jnp.mean(xc * xc, axis=-1, keepdims=True)
    y = xc * jax.lax.rsqrt(var + LN_EPS) * w_ref[...]
    if has_bias:
        y = y + b_ref[...]
    o_ref[...] = y.astype(o_ref.dtype)


def pallas_layernorm(x, w, b=None, out_dtype=jnp.float32, tm_pref=512):
    M, D = x.shape
    tm = _tile(M, tm_pref, 16)
    has_bias = b is not None
    args = [x, w.reshape(1, D).astype(jnp.float32)]
    in_specs = [pl.BlockSpec((tm, D), lambda m: (m, 0)),
                pl.BlockSpec((1, D), lambda m: (0, 0))]
    if has_bias:
        args.append(b.reshape(1, D).astype(jnp.float32))
        in_specs.append(pl.BlockSpec((1, D), lambda m: (0, 0)))
    return pl.pallas_call(
        functools.partial(_ln_kernel, has_bias=has_bias),
        out_shape=jax.ShapeDtypeStruct((M, D), out_dtype),
        grid=(M // tm,),
        in_specs=in_specs,
        out_specs=pl.BlockSpec((tm, D), lambda m: (m, 0)),
        compiler_params=_cparams(("parallel",)),
    )(*args)


def _ln_matmul_kernel(x_ref, lnw_ref, *rest, has_ln_bias, has_bias):
    """o = (LayerNorm(x) * lnw [+ lnb]) @ w [+ b].
    LN is computed once per m-tile (cached in bf16 VMEM scratch) and reused
    across the (arbitrary) n axis; matmul bf16 -> f32 accumulation."""
    i = 0
    lnb_ref = rest[i] if has_ln_bias else None
    if has_ln_bias:
        i += 1
    w_ref = rest[i]; i += 1
    b_ref = rest[i] if has_bias else None
    if has_bias:
        i += 1
    o_ref = rest[i]; i += 1
    h_sc = rest[i]

    @pl.when(pl.program_id(1) == 0)
    def _():
        x = x_ref[...].astype(jnp.float32)
        mu = jnp.mean(x, axis=-1, keepdims=True)
        xc = x - mu
        var = jnp.mean(xc * xc, axis=-1, keepdims=True)
        h = xc * jax.lax.rsqrt(var + LN_EPS) * lnw_ref[...]
        if has_ln_bias:
            h = h + lnb_ref[...]
        h_sc[...] = h.astype(h_sc.dtype)

    acc = jnp.dot(h_sc[...], w_ref[...], preferred_element_type=jnp.float32)
    if has_bias:
        acc = acc + b_ref[...]
    o_ref[...] = acc.astype(o_ref.dtype)


def pallas_ln_matmul(x, ln_w, ln_b, w, b=None, out_dtype=jnp.bfloat16,
                     tm_pref=512, tn_pref=2048):
    M, K = x.shape
    K2, N = w.shape
    assert K == K2
    tm = _tile(M, tm_pref, 16)
    tn = _tile(N, tn_pref, 128)
    has_ln_bias = ln_b is not None
    has_bias = b is not None

    args = [x, ln_w.reshape(1, K).astype(jnp.float32)]
    in_specs = [pl.BlockSpec((tm, K), lambda m, n: (m, 0)),
                pl.BlockSpec((1, K), lambda m, n: (0, 0))]
    if has_ln_bias:
        args.append(ln_b.reshape(1, K).astype(jnp.float32))
        in_specs.append(pl.BlockSpec((1, K), lambda m, n: (0, 0)))
    args.append(w)
    in_specs.append(pl.BlockSpec((K, tn), lambda m, n: (0, n)))
    if has_bias:
        args.append(b.reshape(1, N).astype(jnp.float32))
        in_specs.append(pl.BlockSpec((1, tn), lambda m, n: (0, n)))

    return pl.pallas_call(
        functools.partial(_ln_matmul_kernel, has_ln_bias=has_ln_bias, has_bias=has_bias),
        out_shape=jax.ShapeDtypeStruct((M, N), out_dtype),
        grid=(M // tm, N // tn),
        in_specs=in_specs,
        out_specs=pl.BlockSpec((tm, tn), lambda m, n: (m, n)),
        scratch_shapes=[pltpu.VMEM((tm, K), jnp.bfloat16)],
        compiler_params=_cparams(("parallel", "arbitrary")),
    )(*args)


def _ln_matmul_swiglu_kernel(x_ref, lnw_ref, lnb_ref, wg_ref, wu_ref, o_ref, h_sc):
    """o = silu(LN(x) @ Wg) * (LN(x) @ Wu); LN cached per m-tile in VMEM scratch."""
    @pl.when(pl.program_id(1) == 0)
    def _():
        x = x_ref[...].astype(jnp.float32)
        mu = jnp.mean(x, axis=-1, keepdims=True)
        xc = x - mu
        var = jnp.mean(xc * xc, axis=-1, keepdims=True)
        h_sc[...] = (xc * jax.lax.rsqrt(var + LN_EPS) * lnw_ref[...]
                     + lnb_ref[...]).astype(h_sc.dtype)

    h = h_sc[...]
    g = jnp.dot(h, wg_ref[...], preferred_element_type=jnp.float32)
    u = jnp.dot(h, wu_ref[...], preferred_element_type=jnp.float32)
    o_ref[...] = (g * jax.nn.sigmoid(g) * u).astype(o_ref.dtype)


def pallas_ln_matmul_swiglu(x, ln_w, ln_b, wg, wu, out_dtype=jnp.bfloat16,
                            tm_pref=512, tn_pref=2048):
    M, K = x.shape
    K2, N = wg.shape
    assert K == K2 and wu.shape == wg.shape
    tm = _tile(M, tm_pref, 16)
    tn = _tile(N, tn_pref, 128)
    return pl.pallas_call(
        _ln_matmul_swiglu_kernel,
        out_shape=jax.ShapeDtypeStruct((M, N), out_dtype),
        grid=(M // tm, N // tn),
        in_specs=[pl.BlockSpec((tm, K), lambda m, n: (m, 0)),
                  pl.BlockSpec((1, K), lambda m, n: (0, 0)),
                  pl.BlockSpec((1, K), lambda m, n: (0, 0)),
                  pl.BlockSpec((K, tn), lambda m, n: (0, n)),
                  pl.BlockSpec((K, tn), lambda m, n: (0, n))],
        out_specs=pl.BlockSpec((tm, tn), lambda m, n: (m, n)),
        scratch_shapes=[pltpu.VMEM((tm, K), jnp.bfloat16)],
        compiler_params=_cparams(("parallel", "arbitrary")),
    )(x, ln_w.reshape(1, K).astype(jnp.float32),
      ln_b.reshape(1, K).astype(jnp.float32), wg, wu)


def _matmul_res_kernel(x_ref, w_ref, r_ref, o_ref, *, scale):
    """o = r + scale * (x @ w); residual scaling applied on the f32 accumulator."""
    acc = jnp.dot(x_ref[...], w_ref[...], preferred_element_type=jnp.float32)
    o_ref[...] = (r_ref[...].astype(jnp.float32) + scale * acc).astype(o_ref.dtype)


def pallas_matmul_residual(x, w, res, scale=1.0, out_dtype=jnp.bfloat16,
                           tm_pref=512, tn_pref=2048):
    M, K = x.shape
    K2, N = w.shape
    assert K == K2 and res.shape == (M, N)
    tm = _tile(M, tm_pref, 16)
    tn = _tile(N, tn_pref, 128)
    return pl.pallas_call(
        functools.partial(_matmul_res_kernel, scale=float(scale)),
        out_shape=jax.ShapeDtypeStruct((M, N), out_dtype),
        grid=(M // tm, N // tn),
        in_specs=[pl.BlockSpec((tm, K), lambda m, n: (m, 0)),
                  pl.BlockSpec((K, tn), lambda m, n: (0, n)),
                  pl.BlockSpec((tm, tn), lambda m, n: (m, n))],
        out_specs=pl.BlockSpec((tm, tn), lambda m, n: (m, n)),
        compiler_params=_cparams(("parallel", "parallel")),
    )(x, w, res)


def _qk_ln_rope_split_kernel(qkv_ref, qw_ref, kw_ref, cos_ref, sin_ref,
                             qo_ref, ko_ref, vo_ref, *, d_model, d_head):
    """Reads qkv once; emits RoPE(q-LN(q)), RoPE(k-LN(k)) and v.
    q/k LayerNorms are bias-free over d_model; 1/sqrt(Dh) is pre-folded into qw.
    RoPE: x*cos + swap_half_within_head(x)*sin_signed (sign folded into sin table).
    The per-head half swap is done with two lane rolls + a lane select."""
    D, Dh = d_model, d_head
    half = Dh // 2
    x = qkv_ref[...].astype(jnp.float32)

    def ln(v, w):
        mu = jnp.mean(v, axis=-1, keepdims=True)
        vc = v - mu
        var = jnp.mean(vc * vc, axis=-1, keepdims=True)
        return vc * jax.lax.rsqrt(var + LN_EPS) * w

    cos = cos_ref[...]       # (tm, D) f32
    sin_s = sin_ref[...]     # (tm, D) f32, per-head sign-folded: [-sin, +sin]

    lane = jax.lax.broadcasted_iota(jnp.int32, (1, D), 1)
    first_half = (lane % Dh) < half

    def roll_lanes(v, shift):
        # output[:, i] = v[:, (i - shift) mod D]  (explicit slice+concat; unambiguous)
        s = shift % D
        if s == 0:
            return v
        return jnp.concatenate([v[:, D - s:], v[:, :D - s]], axis=1)

    def rope(v):
        swapped = jnp.where(first_half, roll_lanes(v, -half), roll_lanes(v, half))
        return v * cos + swapped * sin_s

    qo_ref[...] = rope(ln(x[:, :D], qw_ref[...])).astype(qo_ref.dtype)
    ko_ref[...] = rope(ln(x[:, D:2 * D], kw_ref[...])).astype(ko_ref.dtype)
    vo_ref[...] = x[:, 2 * D:].astype(vo_ref.dtype)


def pallas_qk_ln_rope_split(qkv, q_ln_w, k_ln_w, cos, sin_s, d_model, d_head,
                            seq_len, tm_pref=256):
    M, threeD = qkv.shape
    D = d_model
    assert threeD == 3 * D
    tm = _tile(seq_len, tm_pref, 16)           # tm divides L (hence M = B*L too)
    nrep = seq_len // tm
    cs_map = (lambda m: (0, 0)) if nrep == 1 else (lambda m: (m % nrep, 0))
    out_sds = jax.ShapeDtypeStruct((M, D), jnp.bfloat16)
    return pl.pallas_call(
        functools.partial(_qk_ln_rope_split_kernel, d_model=D, d_head=d_head),
        out_shape=(out_sds, out_sds, out_sds),
        grid=(M // tm,),
        in_specs=[pl.BlockSpec((tm, threeD), lambda m: (m, 0)),
                  pl.BlockSpec((1, D), lambda m: (0, 0)),
                  pl.BlockSpec((1, D), lambda m: (0, 0)),
                  pl.BlockSpec((tm, D), cs_map),
                  pl.BlockSpec((tm, D), cs_map)],
        out_specs=(pl.BlockSpec((tm, D), lambda m: (m, 0)),
                   pl.BlockSpec((tm, D), lambda m: (m, 0)),
                   pl.BlockSpec((tm, D), lambda m: (m, 0))),
        compiler_params=_cparams(("parallel",)),
    )(qkv, q_ln_w.reshape(1, D).astype(jnp.float32),
      k_ln_w.reshape(1, D).astype(jnp.float32), cos, sin_s)


def _flash_attn_kernel(q_ref, k_ref, v_ref, sq_ref, sk_ref, o_ref, m_sc, l_sc, acc_sc):
    """Flash attention with online softmax; seq-id equality mask built in-kernel.
    q is pre-scaled (1/sqrt(Dh) folded into q-LN).  Stats/acc kept in f32."""
    ki = pl.program_id(3)

    @pl.when(ki == 0)
    def _():
        m_sc[...] = jnp.full(m_sc.shape, NEG_INF, m_sc.dtype)
        l_sc[...] = jnp.zeros(l_sc.shape, l_sc.dtype)
        acc_sc[...] = jnp.zeros(acc_sc.shape, acc_sc.dtype)

    q = q_ref[0, 0]                                   # (tq, Dh) bf16
    k = k_ref[0, 0]                                   # (tk, Dh) bf16
    s = jax.lax.dot_general(q, k, (((1,), (1,)), ((), ())),
                            preferred_element_type=jnp.float32)       # (tq, tk)

    mask = sq_ref[0] == sk_ref[0]                     # (tq,1) == (1,tk) -> (tq,tk)
    s = jnp.where(mask, s, NEG_INF)

    m_prev = m_sc[...]
    m_new = jnp.maximum(m_prev, jnp.max(s, axis=-1, keepdims=True))
    alpha = jnp.exp(m_prev - m_new)
    p = jnp.where(mask, jnp.exp(s - m_new), 0.0)      # robust to fully-masked kv tiles
    l_sc[...] = alpha * l_sc[...] + jnp.sum(p, axis=-1, keepdims=True)
    acc_sc[...] = alpha * acc_sc[...] + jnp.dot(
        p.astype(v_ref.dtype), v_ref[0, 0], preferred_element_type=jnp.float32)
    m_sc[...] = m_new

    @pl.when(ki == pl.num_programs(3) - 1)
    def _():
        o_ref[0, 0] = (acc_sc[...] * pl.reciprocal(l_sc[...], approx=True)
                       ).astype(o_ref.dtype)


def pallas_flash_attention(q, k, v, seg_q, seg_k):
    """q,k,v: (B, H, L, Dh) bf16 (q pre-scaled); seg_q: (B,L,1) i32; seg_k: (B,1,L) i32."""
    B, H, L, Dh = q.shape
    tq = _tile(L, 256, 16)
    tk = _tile(L, 1024, 128)
    grid = (B, H, L // tq, L // tk)
    return pl.pallas_call(
        _flash_attn_kernel,
        out_shape=jax.ShapeDtypeStruct((B, H, L, Dh), q.dtype),
        grid=grid,
        in_specs=[pl.BlockSpec((1, 1, tq, Dh), lambda b, h, qi, ki: (b, h, qi, 0)),
                  pl.BlockSpec((1, 1, tk, Dh), lambda b, h, qi, ki: (b, h, ki, 0)),
                  pl.BlockSpec((1, 1, tk, Dh), lambda b, h, qi, ki: (b, h, ki, 0)),
                  pl.BlockSpec((1, tq, 1), lambda b, h, qi, ki: (b, qi, 0)),
                  pl.BlockSpec((1, 1, tk), lambda b, h, qi, ki: (b, 0, ki))],
        out_specs=pl.BlockSpec((1, 1, tq, Dh), lambda b, h, qi, ki: (b, h, qi, 0)),
        scratch_shapes=[pltpu.VMEM((tq, 1), jnp.float32),
                        pltpu.VMEM((tq, 1), jnp.float32),
                        pltpu.VMEM((tq, Dh), jnp.float32)],
        compiler_params=_cparams(("parallel", "parallel", "parallel", "arbitrary")),
    )(q, k, v, seg_q, seg_k)


# ----------------------------- JAX glue -----------------------------

def _rope_tables_packed(L, H, Dh):
    """ESM rotary tables (non-interleaved, base 10000), packed over heads.
    Returns cos, sin_signed of shape (L, H*Dh); sin's first half per head is negated
    so the in-kernel RoPE is x*cos + swap_halves(x)*sin_signed."""
    inv_freq = 1.0 / (10000.0 ** (jnp.arange(0, Dh, 2, dtype=jnp.float32) / Dh))
    t = jnp.arange(L, dtype=jnp.float32)
    freqs = jnp.outer(t, inv_freq)                                   # (L, Dh/2)
    cos_h = jnp.concatenate([jnp.cos(freqs), jnp.cos(freqs)], axis=-1)   # (L, Dh)
    sin_h = jnp.concatenate([-jnp.sin(freqs), jnp.sin(freqs)], axis=-1)  # sign-folded
    cos = jnp.tile(cos_h, (1, H))                                    # (L, H*Dh)
    sin_s = jnp.tile(sin_h, (1, H))
    return cos, sin_s


def init_params(key, d_model, n_heads, n_layers, ffn_hidden, vocab):
    def init(k, shape, scale=0.02):
        return scale * jax.random.normal(k, shape, jnp.float32)

    keys = jax.random.split(key, 4 + n_layers)
    params = {'embed': init(keys[0], (vocab, d_model))}

    layers = []
    for li in range(n_layers):
        lk = jax.random.split(keys[4 + li], 4)
        layers.append(dict(
            attn_ln_w=jnp.ones((d_model,), jnp.float32),
            attn_ln_b=jnp.zeros((d_model,), jnp.float32),
            w_qkv=init(lk[0], (d_model, 3 * d_model)),      # bias=False in ESMC
            q_ln_w=jnp.ones((d_model,), jnp.float32),       # q/k LayerNorm, bias=False
            k_ln_w=jnp.ones((d_model,), jnp.float32),
            w_out=init(lk[1], (d_model, d_model)),
            ffn_ln_w=jnp.ones((d_model,), jnp.float32),
            ffn_ln_b=jnp.zeros((d_model,), jnp.float32),
            w_ffn1=init(lk[2], (d_model, 2 * ffn_hidden)),
            w_ffn2=init(lk[3], (ffn_hidden, d_model)),
        ))
    params['layers'] = layers
    params['final_ln_w'] = jnp.ones((d_model,), jnp.float32)          # final LN, bias=False

    hk = jax.random.split(keys[1], 2)
    params['head_w1'] = init(hk[0], (d_model, d_model))
    params['head_b1'] = jnp.zeros((d_model,), jnp.float32)
    params['head_ln_w'] = jnp.ones((d_model,), jnp.float32)
    params['head_ln_b'] = jnp.zeros((d_model,), jnp.float32)
    params['head_w2'] = init(hk[1], (d_model, VOCAB))
    params['head_b2'] = jnp.zeros((VOCAB,), jnp.float32)
    return params


def prepare_params(params, n_heads):
    """One-time prep: cast matmul weights to bf16, fold 1/sqrt(Dh) into q-LN gamma (f32),
    split w_ffn1 into gate/up halves, pad LM head to a lane-dense 128-wide output."""
    d_model = params['embed'].shape[1]
    d_head = d_model // n_heads
    q_scale = 1.0 / math.sqrt(d_head)
    bf = lambda t: t.astype(jnp.bfloat16)

    out = {'embed': params['embed'].astype(jnp.float32)}
    layers = []
    for lyr in params['layers']:
        hid = lyr['w_ffn1'].shape[1] // 2
        layers.append(dict(
            attn_ln_w=lyr['attn_ln_w'], attn_ln_b=lyr['attn_ln_b'],
            w_qkv=bf(lyr['w_qkv']),
            q_ln_w=lyr['q_ln_w'] * q_scale,           # 1/sqrt(Dh) folded in (f32, exact)
            k_ln_w=lyr['k_ln_w'],
            w_out=bf(lyr['w_out']),
            ffn_ln_w=lyr['ffn_ln_w'], ffn_ln_b=lyr['ffn_ln_b'],
            w_ffn_gate=bf(lyr['w_ffn1'][:, :hid]),
            w_ffn_up=bf(lyr['w_ffn1'][:, hid:]),
            w_ffn2=bf(lyr['w_ffn2']),
        ))
    out['layers'] = layers
    out['final_ln_w'] = params['final_ln_w']
    out['head_w1'] = bf(params['head_w1']); out['head_b1'] = params['head_b1']
    out['head_ln_w'] = params['head_ln_w']; out['head_ln_b'] = params['head_ln_b']
    pad = (-params['head_w2'].shape[1]) % 128
    out['head_w2'] = bf(jnp.pad(params['head_w2'], ((0, 0), (0, pad))))
    out['head_b2'] = jnp.pad(params['head_b2'], ((0, pad),))
    return out


@functools.partial(jax.jit, static_argnames=("d_model", "n_heads", "n_layers"))
def esmc_forward(params, input_ids, *, d_model, n_heads, n_layers):
    """Mirrors EsmcForDPLM.forward: returns logits / embeddings / last_hidden_state."""
    B, L = input_ids.shape
    H = n_heads
    Dh = d_model // H
    res_scale = 1.0 / math.sqrt(n_layers / 36.0)

    # sequence_id = input_ids != pad ; attention allowed where seq_id[i] == seq_id[j]
    seq_id = (input_ids != PAD_ID).astype(jnp.int32)
    seg_q = seq_id[:, :, None]                      # (B, L, 1)
    seg_k = seq_id[:, None, :]                      # (B, 1, L)

    cos, sin_s = _rope_tables_packed(L, H, Dh)      # (L, d_model) f32, shared by layers

    # TODO(synk): embedding table lookup (gather) stays in XLA glue.
    x = jnp.take(params['embed'], input_ids, axis=0).reshape(B * L, d_model)
    x = x.astype(jnp.bfloat16)                      # residual stream in bf16

    for lyr in params['layers']:
        # ---- attention: LN+QKV, qk-LN+RoPE+split, flash, out-proj + scaled residual
        qkv = pallas_ln_matmul(x, lyr['attn_ln_w'], lyr['attn_ln_b'], lyr['w_qkv'])
        q, k, v = pallas_qk_ln_rope_split(qkv, lyr['q_ln_w'], lyr['k_ln_w'],
                                          cos, sin_s, d_model, Dh, L)

        # TODO(synk): head-layout transposes kept in XLA (bf16); a (B,L,H,Dh)-native
        # flash kernel would remove them but needs sub-8 second-minor blocks.
        qh = q.reshape(B, L, H, Dh).transpose(0, 2, 1, 3)             # (B, H, L, Dh)
        kh = k.reshape(B, L, H, Dh).transpose(0, 2, 1, 3)
        vh = v.reshape(B, L, H, Dh).transpose(0, 2, 1, 3)

        ctx = pallas_flash_attention(qh, kh, vh, seg_q, seg_k)        # (B, H, L, Dh)
        ctx = ctx.transpose(0, 2, 1, 3).reshape(B * L, d_model)
        x = pallas_matmul_residual(ctx, lyr['w_out'], x, scale=res_scale)

        # ---- SwiGLU FFN: LN+ffn1+SwiGLU, ffn2 + scaled residual
        h = pallas_ln_matmul_swiglu(x, lyr['ffn_ln_w'], lyr['ffn_ln_b'],
                                    lyr['w_ffn_gate'], lyr['w_ffn_up'])
        x = pallas_matmul_residual(h, lyr['w_ffn2'], x, scale=res_scale)

    last_hidden_state = x.reshape(B, L, d_model).astype(jnp.float32)  # pre final-norm

    emb = pallas_layernorm(x, params['final_ln_w'], None, out_dtype=jnp.float32)

    # sequence head: Linear -> GELU (exact) -> LayerNorm -> Linear (vocab padded to 128)
    h = pallas_ln_matmul(x, params['final_ln_w'], None,
                         params['head_w1'], params['head_b1'], out_dtype=jnp.float32)
    h = jax.nn.gelu(h, approximate=False)   # TODO(synk): exact erf GELU kept in XLA glue
    h = h.astype(jnp.bfloat16)
    logits_p = pallas_ln_matmul(h, params['head_ln_w'], params['head_ln_b'],
                                params['head_w2'], params['head_b2'],
                                out_dtype=jnp.float32)
    logits = logits_p[:, :VOCAB]

    return {
        'logits': logits.reshape(B, L, VOCAB),
        'embeddings': emb.reshape(B, L, d_model),
        'last_hidden_state': last_hidden_state,
    }


# ----------------------------- demo -----------------------------

if __name__ == "__main__":
    B, L = 2, 8
    d_model, n_heads, n_layers = 128, 2, 2
    # ESMC swiglu_correction_fn(8/3, d_model): round up to multiple of 256
    ffn_hidden = int(((8.0 / 3.0 * d_model) + 255) // 256 * 256)

    key = jax.random.PRNGKey(0)
    pkey, tkey = jax.random.split(key)
    raw_params = init_params(pkey, d_model, n_heads, n_layers, ffn_hidden, VOCAB)
    params = prepare_params(raw_params, n_heads)

    # tokens: <cls> aa...aa <eos> <pad>
    body = jax.random.randint(tkey, (B, L - 3), 4, 28).astype(jnp.int32)
    input_ids = jnp.concatenate([
        jnp.full((B, 1), CLS_ID, jnp.int32),
        body,
        jnp.full((B, 1), EOS_ID, jnp.int32),
        jnp.full((B, 1), PAD_ID, jnp.int32),
    ], axis=1)

    out = esmc_forward(params, input_ids, d_model=d_model,
                       n_heads=n_heads, n_layers=n_layers)
    jax.block_until_ready(out)

    assert out['logits'].shape == (B, L, VOCAB)
    assert out['embeddings'].shape == (B, L, d_model)
    assert out['last_hidden_state'].shape == (B, L, d_model)
    assert bool(jnp.all(jnp.isfinite(out['logits'])))
    assert bool(jnp.all(jnp.isfinite(out['embeddings'])))
    assert bool(jnp.all(jnp.isfinite(out['last_hidden_state'])))
    print("KERNEL_OK")
</pallas_src>

<mosaic_0001>
module attributes {stable_mosaic.version = 11 : i64} {
  func.func @_ln_matmul_kernel(%arg0: i32, %arg1: i32, %arg2: memref<16x128xbf16, #tpu.memory_space<vmem>>, %arg3: memref<1x128xf32, #tpu.memory_space<vmem>>, %arg4: memref<1x128xf32, #tpu.memory_space<vmem>>, %arg5: memref<128x384xbf16, #tpu.memory_space<vmem>>, %arg6: memref<16x384xbf16, #tpu.memory_space<vmem>>, %arg7: memref<16x128xbf16, #tpu.memory_space<vmem>>) attributes {dimension_semantics = [#tpu.dimension_semantics<parallel>, #tpu.dimension_semantics<arbitrary>], iteration_bounds = array<i64: 1, 1>, scalar_prefetch = 0 : i64, scratch_operands = 1 : i64, tpu.core_type = #tpu.core_type<tc>, window_params = [{transform_indices = @transform_0, window_bounds = array<i64: 16, 128>}, {pipeline_mode = #tpu.pipeline_mode<synchronous>, transform_indices = @transform_1, window_bounds = array<i64: 1, 128>}, {pipeline_mode = #tpu.pipeline_mode<synchronous>, transform_indices = @transform_2, window_bounds = array<i64: 1, 128>}, {transform_indices = @transform_3, window_bounds = array<i64: 128, 384>}, {transform_indices = @transform_4, window_bounds = array<i64: 16, 384>}]} {
    %c0_i32 = arith.constant 0 : i32
    %0 = arith.cmpi eq, %arg1, %c0_i32 : i32
    %1 = arith.extui %0 : i1 to i32
    %c0_i32_0 = arith.constant 0 : i32
    %2 = arith.cmpi ne, %1, %c0_i32_0 : i32
    scf.if %2 {
      %c0_6 = arith.constant 0 : index
      %c0_7 = arith.constant 0 : index
      %8 = vector.load %arg2[%c0_6, %c0_7] : memref<16x128xbf16, #tpu.memory_space<vmem>>, vector<16x128xbf16>
      %9 = arith.extf %8 : vector<16x128xbf16> to vector<16x128xf32>
      %cst_8 = arith.constant dense<0.000000e+00> : vector<16xf32>
      %10 = vector.multi_reduction <add>, %9, %cst_8 [1] : vector<16x128xf32> to vector<16xf32>
      %11 = vector.shape_cast %10 : vector<16xf32> to vector<16x1xf32>
      %cst_9 = arith.constant 1.280000e+02 : f32
      %12 = vector.broadcast %cst_9 : f32 to vector<16x1xf32>
      %13 = arith.divf %11, %12 : vector<16x1xf32>
      %14 = vector.broadcast %13 : vector<16x1xf32> to vector<16x128xf32>
      %15 = arith.subf %9, %14 : vector<16x128xf32>
      %16 = arith.mulf %15, %15 : vector<16x128xf32>
      %cst_10 = arith.constant dense<0.000000e+00> : vector<16xf32>
      %17 = vector.multi_reduction <add>, %16, %cst_10 [1] : vector<16x128xf32> to vector<16xf32>
      %18 = vector.shape_cast %17 : vector<16xf32> to vector<16x1xf32>
      %cst_11 = arith.constant 1.280000e+02 : f32
      %19 = vector.broadcast %cst_11 : f32 to vector<16x1xf32>
      %20 = arith.divf %18, %19 : vector<16x1xf32>
      %cst_12 = arith.constant 9.99999974E-6 : f32
      %21 = vector.broadcast %cst_12 : f32 to vector<16x1xf32>
      %22 = arith.addf %20, %21 : vector<16x1xf32>
      %23 = math.rsqrt %22 : vector<16x1xf32>
      %24 = vector.broadcast %23 : vector<16x1xf32> to vector<16x128xf32>
      %25 = arith.mulf %15, %24 : vector<16x128xf32>
      %c0_13 = arith.constant 0 : index
      %c0_14 = arith.constant 0 : index
      %26 = vector.load %arg3[%c0_13, %c0_14] : memref<1x128xf32, #tpu.memory_space<vmem>>, vector<1x128xf32>
      %27 = vector.broadcast %26 : vector<1x128xf32> to vector<16x128xf32>
      %28 = arith.mulf %25, %27 : vector<16x128xf32>
      %c0_15 = arith.constant 0 : index
      %c0_16 = arith.constant 0 : index
      %29 = vector.load %arg4[%c0_15, %c0_16] : memref<1x128xf32, #tpu.memory_space<vmem>>, vector<1x128xf32>
      %30 = vector.broadcast %29 : vector<1x128xf32> to vector<16x128xf32>
      %31 = arith.addf %28, %30 : vector<16x128xf32>
      %32 = arith.truncf %31 : vector<16x128xf32> to vector<16x128xbf16>
      %c0_17 = arith.constant 0 : index
      %c0_18 = arith.constant 0 : index
      %33 = vector.load %arg7[%c0_17, %c0_18] : memref<16x128xbf16, #tpu.memory_space<vmem>>, vector<16x128xbf16>
      tpu.vector_store %arg7[%c0_17, %c0_18], %32 {strides = array<i32>} : memref<16x128xbf16, #tpu.memory_space<vmem>>, vector<16x128xbf16>,
    } else {
    }
    %c0 = arith.constant 0 : index
    %c0_1 = arith.constant 0 : index
    %3 = vector.load %arg7[%c0, %c0_1] : memref<16x128xbf16, #tpu.memory_space<vmem>>, vector<16x128xbf16>
    %c0_2 = arith.constant 0 : index
    %c0_3 = arith.constant 0 : index
    %4 = vector.load %arg5[%c0_2, %c0_3] : memref<128x384xbf16, #tpu.memory_space<vmem>>, vector<128x384xbf16>
    %cst = arith.constant dense<0.000000e+00> : vector<16x384xf32>
    %5 = tpu.matmul %3, %4, %cst {dimension_numbers = #tpu.dot_dimension_numbers<[1], [0], [0], [1], [0, 0, 1, 1], [], []>} : vector<16x128xbf16>, vector<128x384xbf16>, vector<16x384xf32> -> vector<16x384xf32>
    %6 = arith.truncf %5 : vector<16x384xf32> to vector<16x384xbf16>
    %c0_4 = arith.constant 0 : index
    %c0_5 = arith.constant 0 : index
    %7 = vector.load %arg6[%c0_4, %c0_5] : memref<16x384xbf16, #tpu.memory_space<vmem>>, vector<16x384xbf16>
    tpu.vector_store %arg6[%c0_4, %c0_5], %6 {strides = array<i32>} : memref<16x384xbf16, #tpu.memory_space<vmem>>, vector<16x384xbf16>,
    return
  }
  func.func @transform_0(%arg0: i32, %arg1: i32) -> (i32, i32) {
    %c0_i32 = arith.constant 0 : i32
    %c0_i32_0 = arith.constant 0 : i32
    return %arg0, %c0_i32 : i32, i32
  }
  func.func @transform_1(%arg0: i32, %arg1: i32) -> (i32, i32) {
    %c0_i32 = arith.constant 0 : i32
    %c0_i32_0 = arith.constant 0 : i32
    %c0_i32_1 = arith.constant 0 : i32
    return %c0_i32, %c0_i32_0 : i32, i32
  }
  func.func @transform_2(%arg0: i32, %arg1: i32) -> (i32, i32) {
    %c0_i32 = arith.constant 0 : i32
    %c0_i32_0 = arith.constant 0 : i32
    %c0_i32_1 = arith.constant 0 : i32
    return %c0_i32, %c0_i32_0 : i32, i32
  }
  func.func @transform_3(%arg0: i32, %arg1: i32) -> (i32, i32) {
    %c0_i32 = arith.constant 0 : i32
    %c0_i32_0 = arith.constant 0 : i32
    return %c0_i32, %arg1 : i32, i32
  }
  func.func @transform_4(%arg0: i32, %arg1: i32) -> (i32, i32) {
    %c0_i32 = arith.constant 0 : i32
    return %arg0, %arg1 : i32, i32
  }
}

module attributes {stable_mosaic.version = 11 : i64} {
  func.func @_flash_attn_kernel(%arg0: i32, %arg1: i32, %arg2: i32, %arg3: i32, %arg4: memref<1x1x8x64xbf16, #tpu.memory_space<vmem>>, %arg5: memref<1x1x8x64xbf16, #tpu.memory_space<vmem>>, %arg6: memref<1x1x8x64xbf16, #tpu.memory_space<vmem>>, %arg7: memref<1x8x1xi32, #tpu.memory_space<vmem>>, %arg8: memref<1x1x8xi32, #tpu.memory_space<vmem>>, %arg9: memref<1x1x8x64xbf16, #tpu.memory_space<vmem>>, %arg10: memref<8x1xf32, #tpu.memory_space<vmem>>, %arg11: memref<8x1xf32, #tpu.memory_space<vmem>>, %arg12: memref<8x64xf32, #tpu.memory_space<vmem>>) attributes {dimension_semantics = [#tpu.dimension_semantics<parallel>, #tpu.dimension_semantics<parallel>, #tpu.dimension_semantics<parallel>, #tpu.dimension_semantics<arbitrary>], iteration_bounds = array<i64: 2, 2, 1, 1>, scalar_prefetch = 0 : i64, scratch_operands = 3 : i64, tpu.core_type = #tpu.core_type<tc>, window_params = [{transform_indices = @transform_0, window_bounds = array<i64: 1, 1, 8, 64>}, {transform_indices = @transform_1, window_bounds = array<i64: 1, 1, 8, 64>}, {transform_indices = @transform_2, window_bounds = array<i64: 1, 1, 8, 64>}, {transform_indices = @transform_3, window_bounds = array<i64: 1, 8, 1>}, {transform_indices = @transform_4, window_bounds = array<i64: 1, 1, 8>}, {transform_indices = @transform_5, window_bounds = array<i64: 1, 1, 8, 64>}]} {
    %c0_i32 = arith.constant 0 : i32
    %0 = arith.cmpi eq, %arg3, %c0_i32 : i32
    %1 = arith.extui %0 : i1 to i32
    %c0_i32_0 = arith.constant 0 : i32
    %2 = arith.cmpi ne, %1, %c0_i32_0 : i32
    scf.if %2 {
      %cst_37 = arith.constant -1.000000e+30 : f32
      %47 = vector.broadcast %cst_37 : f32 to vector<8x1xf32>
      %c0_38 = arith.constant 0 : index
      %c0_39 = arith.constant 0 : index
      %48 = vector.load %arg10[%c0_38, %c0_39] : memref<8x1xf32, #tpu.memory_space<vmem>>, vector<8x1xf32>
      tpu.vector_store %arg10[%c0_38, %c0_39], %47 {strides = array<i32>} : memref<8x1xf32, #tpu.memory_space<vmem>>, vector<8x1xf32>,
      %cst_40 = arith.constant 0.000000e+00 : f32
      %49 = vector.broadcast %cst_40 : f32 to vector<8x1xf32>
      %c0_41 = arith.constant 0 : index
      %c0_42 = arith.constant 0 : index
      %50 = vector.load %arg11[%c0_41, %c0_42] : memref<8x1xf32, #tpu.memory_space<vmem>>, vector<8x1xf32>
      tpu.vector_store %arg11[%c0_41, %c0_42], %49 {strides = array<i32>} : memref<8x1xf32, #tpu.memory_space<vmem>>, vector<8x1xf32>,
      %cst_43 = arith.constant 0.000000e+00 : f32
      %51 = vector.broadcast %cst_43 : f32 to vector<8x64xf32>
      %c0_44 = arith.constant 0 : index
      %c0_45 = arith.constant 0 : index
      %52 = vector.load %arg12[%c0_44, %c0_45] : memref<8x64xf32, #tpu.memory_space<vmem>>, vector<8x64xf32>
      tpu.vector_store %arg12[%c0_44, %c0_45], %51 {strides = array<i32>} : memref<8x64xf32, #tpu.memory_space<vmem>>, vector<8x64xf32>,
    } else {
    }
    %c0 = arith.constant 0 : index
    %c0_1 = arith.constant 0 : index
    %c0_2 = arith.constant 0 : index
    %c0_3 = arith.constant 0 : index
    %3 = vector.load %arg4[%c0, %c0_1, %c0_2, %c0_3] : memref<1x1x8x64xbf16, #tpu.memory_space<vmem>>, vector<1x1x8x64xbf16>
    %4 = vector.shape_cast %3 : vector<1x1x8x64xbf16> to vector<8x64xbf16>
    %c0_4 = arith.constant 0 : index
    %c0_5 = arith.constant 0 : index
    %c0_6 = arith.constant 0 : index
    %c0_7 = arith.constant 0 : index
    %5 = vector.load %arg5[%c0_4, %c0_5, %c0_6, %c0_7] : memref<1x1x8x64xbf16, #tpu.memory_space<vmem>>, vector<1x1x8x64xbf16>
    %6 = vector.shape_cast %5 : vector<1x1x8x64xbf16> to vector<8x64xbf16>
    %cst = arith.constant dense<0.000000e+00> : vector<8x8xf32>
    %7 = tpu.matmul %4, %6, %cst {dimension_numbers = #tpu.dot_dimension_numbers<[1], [1], [0], [0], [0, 0, 1, 0], [], []>} : vector<8x64xbf16>, vector<8x64xbf16>, vector<8x8xf32> -> vector<8x8xf32>
    %c0_8 = arith.constant 0 : index
    %c0_9 = arith.constant 0 : index
    %c0_10 = arith.constant 0 : index
    %8 = vector.load %arg7[%c0_8, %c0_9, %c0_10] : memref<1x8x1xi32, #tpu.memory_space<vmem>>, vector<1x8x1xi32>
    %9 = vector.shape_cast %8 : vector<1x8x1xi32> to vector<8x1xi32>
    %c0_11 = arith.constant 0 : index
    %c0_12 = arith.constant 0 : index
    %c0_13 = arith.constant 0 : index
    %10 = vector.load %arg8[%c0_11, %c0_12, %c0_13] : memref<1x1x8xi32, #tpu.memory_space<vmem>>, vector<1x1x8xi32>
    %11 = vector.shape_cast %10 : vector<1x1x8xi32> to vector<1x8xi32>
    %12 = vector.broadcast %9 : vector<8x1xi32> to vector<8x8xi32>
    %13 = vector.broadcast %11 : vector<1x8xi32> to vector<8x8xi32>
    %14 = arith.cmpi eq, %12, %13 : vector<8x8xi32>
    %cst_14 = arith.constant -1.000000e+30 : f32
    %15 = vector.broadcast %cst_14 : f32 to vector<8x8xf32>
    %16 = arith.select %14, %7, %15 : vector<8x8xi1>, vector<8x8xf32>
    %c0_15 = arith.constant 0 : index
    %c0_16 = arith.constant 0 : index
    %17 = vector.load %arg10[%c0_15, %c0_16] : memref<8x1xf32, #tpu.memory_space<vmem>>, vector<8x1xf32>
    %cst_17 = arith.constant dense<0xFF800000> : vector<8xf32>
    %18 = vector.multi_reduction <maximumf>, %16, %cst_17 [1] : vector<8x8xf32> to vector<8xf32>
    %19 = vector.shape_cast %18 : vector<8xf32> to vector<8x1xf32>
    %20 = arith.maximumf %17, %19 : vector<8x1xf32>
    %21 = arith.subf %17, %20 : vector<8x1xf32>
    %22 = math.exp %21 : vector<8x1xf32>
    %23 = vector.broadcast %20 : vector<8x1xf32> to vector<8x8xf32>
    %24 = arith.subf %16, %23 : vector<8x8xf32>
    %25 = math.exp %24 : vector<8x8xf32>
    %cst_18 = arith.constant 0.000000e+00 : f32
    %26 = vector.broadcast %cst_18 : f32 to vector<8x8xf32>
    %27 = arith.select %14, %25, %26 : vector<8x8xi1>, vector<8x8xf32>
    %c0_19 = arith.constant 0 : index
    %c0_20 = arith.constant 0 : index
    %28 = vector.load %arg11[%c0_19, %c0_20] : memref<8x1xf32, #tpu.memory_space<vmem>>, vector<8x1xf32>
    %29 = arith.mulf %22, %28 : vector<8x1xf32>
    %cst_21 = arith.constant dense<0.000000e+00> : vector<8xf32>
    %30 = vector.multi_reduction <add>, %27, %cst_21 [1] : vector<8x8xf32> to vector<8xf32>
    %31 = vector.shape_cast %30 : vector<8xf32> to vector<8x1xf32>
    %32 = arith.addf %29, %31 : vector<8x1xf32>
    %c0_22 = arith.constant 0 : index
    %c0_23 = arith.constant 0 : index
    %33 = vector.load %arg11[%c0_22, %c0_23] : memref<8x1xf32, #tpu.memory_space<vmem>>, vector<8x1xf32>
    tpu.vector_store %arg11[%c0_22, %c0_23], %32 {strides = array<i32>} : memref<8x1xf32, #tpu.memory_space<vmem>>, vector<8x1xf32>,
    %c0_24 = arith.constant 0 : index
    %c0_25 = arith.constant 0 : index
    %34 = vector.load %arg12[%c0_24, %c0_25] : memref<8x64xf32, #tpu.memory_space<vmem>>, vector<8x64xf32>
    %35 = vector.broadcast %22 : vector<8x1xf32> to vector<8x64xf32>
    %36 = arith.mulf %35, %34 : vector<8x64xf32>
    %37 = arith.truncf %27 : vector<8x8xf32> to vector<8x8xbf16>
    %c0_26 = arith.constant 0 : index
    %c0_27 = arith.constant 0 : index
    %c0_28 = arith.constant 0 : index
    %c0_29 = arith.constant 0 : index
    %38 = vector.load %arg6[%c0_26, %c0_27, %c0_28, %c0_29] : memref<1x1x8x64xbf16, #tpu.memory_space<vmem>>, vector<1x1x8x64xbf16>
    %39 = vector.shape_cast %38 : vector<1x1x8x64xbf16> to vector<8x64xbf16>
    %cst_30 = arith.constant dense<0.000000e+00> : vector<8x64xf32>
    %40 = tpu.matmul %37, %39, %cst_30 {dimension_numbers = #tpu.dot_dimension_numbers<[1], [0], [0], [1], [0, 0, 1, 1], [], []>} : vector<8x8xbf16>, vector<8x64xbf16>, vector<8x64xf32> -> vector<8x64xf32>
    %41 = arith.addf %36, %40 : vector<8x64xf32>
    %c0_31 = arith.constant 0 : index
    %c0_32 = arith.constant 0 : index
    %42 = vector.load %arg12[%c0_31, %c0_32] : memref<8x64xf32, #tpu.memory_space<vmem>>, vector<8x64xf32>
    tpu.vector_store %arg12[%c0_31, %c0_32], %41 {strides = array<i32>} : memref<8x64xf32, #tpu.memory_space<vmem>>, vector<8x64xf32>,
    %c0_33 = arith.constant 0 : index
    %c0_34 = arith.constant 0 : index
    %43 = vector.load %arg10[%c0_33, %c0_34] : memref<8x1xf32, #tpu.memory_space<vmem>>, vector<8x1xf32>
    tpu.vector_store %arg10[%c0_33, %c0_34], %20 {strides = array<i32>} : memref<8x1xf32, #tpu.memory_space<vmem>>, vector<8x1xf32>,
    %c0_i32_35 = arith.constant 0 : i32
    %44 = arith.cmpi eq, %arg3, %c0_i32_35 : i32
    %45 = arith.extui %44 : i1 to i32
    %c0_i32_36 = arith.constant 0 : i32
    %46 = arith.cmpi ne, %45, %c0_i32_36 : i32
    scf.if %46 {
      %c0_37 = arith.constant 0 : index
      %c0_38 = arith.constant 0 : index
      %47 = vector.load %arg12[%c0_37, %c0_38] : memref<8x64xf32, #tpu.memory_space<vmem>>, vector<8x64xf32>
      %c0_39 = arith.constant 0 : index
      %c0_40 = arith.constant 0 : index
      %48 = vector.load %arg11[%c0_39, %c0_40] : memref<8x1xf32, #tpu.memory_space<vmem>>, vector<8x1xf32>
      %49 = tpu.reciprocal %48 {approx = true} : vector<8x1xf32> -> vector<8x1xf32>
      %50 = vector.broadcast %49 : vector<8x1xf32> to vector<8x64xf32>
      %51 = arith.mulf %47, %50 : vector<8x64xf32>
      %52 = arith.truncf %51 : vector<8x64xf32> to vector<8x64xbf16>
      %c0_41 = arith.constant 0 : index
      %c0_42 = arith.constant 0 : index
      %c0_43 = arith.constant 0 : index
      %c0_44 = arith.constant 0 : index
      %53 = vector.load %arg9[%c0_41, %c0_42, %c0_43, %c0_44] : memref<1x1x8x64xbf16, #tpu.memory_space<vmem>>, vector<1x1x8x64xbf16>
      %54 = vector.shape_cast %53 : vector<1x1x8x64xbf16> to vector<8x64xbf16>
      %55 = vector.shape_cast %52 : vector<8x64xbf16> to vector<1x1x8x64xbf16>
      tpu.vector_store %arg9[%c0_41, %c0_42, %c0_43, %c0_44], %55 {strides = array<i32>} : memref<1x1x8x64xbf16, #tpu.memory_space<vmem>>, vector<1x1x8x64xbf16>,
    } else {
    }
    return
  }
  func.func @transform_0(%arg0: i32, %arg1: i32, %arg2: i32, %arg3: i32) -> (i32, i32, i32, i32) {
    %c0_i32 = arith.constant 0 : i32
    %c0_i32_0 = arith.constant 0 : i32
    return %arg0, %arg1, %arg2, %c0_i32 : i32, i32, i32, i32
  }
  func.func @transform_1(%arg0: i32, %arg1: i32, %arg2: i32, %arg3: i32) -> (i32, i32, i32, i32) {
    %c0_i32 = arith.constant 0 : i32
    %c0_i32_0 = arith.constant 0 : i32
    return %arg0, %arg1, %arg3, %c0_i32 : i32, i32, i32, i32
  }
  func.func @transform_2(%arg0: i32, %arg1: i32, %arg2: i32, %arg3: i32) -> (i32, i32, i32, i32) {
    %c0_i32 = arith.constant 0 : i32
    %c0_i32_0 = arith.constant 0 : i32
    return %arg0, %arg1, %arg3, %c0_i32 : i32, i32, i32, i32
  }
  func.func @transform_3(%arg0: i32, %arg1: i32, %arg2: i32, %arg3: i32) -> (i32, i32, i32) {
    %c0_i32 = arith.constant 0 : i32
    %c0_i32_0 = arith.constant 0 : i32
    return %arg0, %arg2, %c0_i32 : i32, i32, i32
  }
  func.func @transform_4(%arg0: i32, %arg1: i32, %arg2: i32, %arg3: i32) -> (i32, i32, i32) {
    %c0_i32 = arith.constant 0 : i32
    %c0_i32_0 = arith.constant 0 : i32
    return %arg0, %c0_i32, %arg3 : i32, i32, i32
  }
  func.func @transform_5(%arg0: i32, %arg1: i32, %arg2: i32, %arg3: i32) -> (i32, i32, i32, i32) {
    %c0_i32 = arith.constant 0 : i32
    %c0_i32_0 = arith.constant 0 : i32
    return %arg0, %arg1, %arg2, %c0_i32 : i32, i32, i32, i32
  }
}

module attributes {stable_mosaic.version = 11 : i64} {
  func.func @_qk_ln_rope_split_kernel(%arg0: i32, %arg1: memref<8x384xbf16, #tpu.memory_space<vmem>>, %arg2: memref<1x128xf32, #tpu.memory_space<vmem>>, %arg3: memref<1x128xf32, #tpu.memory_space<vmem>>, %arg4: memref<8x128xf32, #tpu.memory_space<vmem>>, %arg5: memref<8x128xf32, #tpu.memory_space<vmem>>, %arg6: memref<8x128xbf16, #tpu.memory_space<vmem>>, %arg7: memref<8x128xbf16, #tpu.memory_space<vmem>>, %arg8: memref<8x128xbf16, #tpu.memory_space<vmem>>) attributes {dimension_semantics = [#tpu.dimension_semantics<parallel>], iteration_bounds = array<i64: 2>, scalar_prefetch = 0 : i64, scratch_operands = 0 : i64, tpu.core_type = #tpu.core_type<tc>, window_params = [{transform_indices = @transform_0, window_bounds = array<i64: 8, 384>}, {pipeline_mode = #tpu.pipeline_mode<synchronous>, transform_indices = @transform_1, window_bounds = array<i64: 1, 128>}, {pipeline_mode = #tpu.pipeline_mode<synchronous>, transform_indices = @transform_2, window_bounds = array<i64: 1, 128>}, {pipeline_mode = #tpu.pipeline_mode<synchronous>, transform_indices = @transform_3, window_bounds = array<i64: 8, 128>}, {pipeline_mode = #tpu.pipeline_mode<synchronous>, transform_indices = @transform_4, window_bounds = array<i64: 8, 128>}, {transform_indices = @transform_5, window_bounds = array<i64: 8, 128>}, {transform_indices = @transform_6, window_bounds = array<i64: 8, 128>}, {transform_indices = @transform_7, window_bounds = array<i64: 8, 128>}]} {
    %c0 = arith.constant 0 : index
    %c0_0 = arith.constant 0 : index
    %0 = vector.load %arg1[%c0, %c0_0] : memref<8x384xbf16, #tpu.memory_space<vmem>>, vector<8x384xbf16>
    %1 = arith.extf %0 : vector<8x384xbf16> to vector<8x384xf32>
    %c0_1 = arith.constant 0 : index
    %c0_2 = arith.constant 0 : index
    %2 = vector.load %arg4[%c0_1, %c0_2] : memref<8x128xf32, #tpu.memory_space<vmem>>, vector<8x128xf32>
    %c0_3 = arith.constant 0 : index
    %c0_4 = arith.constant 0 : index
    %3 = vector.load %arg5[%c0_3, %c0_4] : memref<8x128xf32, #tpu.memory_space<vmem>>, vector<8x128xf32>
    %4 = tpu.iota {dimensions = array<i32: 1>} : vector<1x128xi32>
    %c64_i32 = arith.constant 64 : i32
    %c0_i32 = arith.constant 0 : i32
    %5 = arith.cmpi eq, %c64_i32, %c0_i32 : i32
    %c1_i32 = arith.constant 1 : i32
    %6 = arith.select %5, %c1_i32, %c64_i32 : i32
    %7 = vector.broadcast %6 : i32 to vector<1x128xi32>
    %8 = arith.remsi %4, %7 : vector<1x128xi32>
    %c0_i32_5 = arith.constant 0 : i32
    %9 = vector.broadcast %c0_i32_5 : i32 to vector<1x128xi32>
    %10 = arith.cmpi ne, %8, %9 : vector<1x128xi32>
    %c0_i32_6 = arith.constant 0 : i32
    %11 = vector.broadcast %c0_i32_6 : i32 to vector<1x128xi32>
    %12 = arith.cmpi slt, %8, %11 : vector<1x128xi32>
    %c0_i32_7 = arith.constant 0 : i32
    %13 = arith.cmpi slt, %6, %c0_i32_7 : i32
    %14 = vector.broadcast %13 : i1 to vector<1x128xi1>
    %15 = vector.broadcast %14 : vector<1x128xi1> to vector<1x128xi1>
    %16 = arith.xori %12, %15 : vector<1x128xi1>
    %17 = arith.andi %16, %10 : vector<1x128xi1>
    %18 = vector.broadcast %6 : i32 to vector<1x128xi32>
    %19 = arith.addi %8, %18 : vector<1x128xi32>
    %20 = arith.select %17, %19, %8 : vector<1x128xi1>, vector<1x128xi32>
    %c32_i32 = arith.constant 32 : i32
    %21 = vector.broadcast %c32_i32 : i32 to vector<1x128xi32>
    %22 = arith.cmpi slt, %20, %21 : vector<1x128xi32>
    %23 = vector.extract_strided_slice %1 {offsets = [0, 0], sizes = [8, 128], strides = [1, 1]} : vector<8x384xf32> to vector<8x128xf32>
    %c0_8 = arith.constant 0 : index
    %c0_9 = arith.constant 0 : index
    %24 = vector.load %arg2[%c0_8, %c0_9] : memref<1x128xf32, #tpu.memory_space<vmem>>, vector<1x128xf32>
    %cst = arith.constant dense<0.000000e+00> : vector<8xf32>
    %25 = vector.multi_reduction <add>, %23, %cst [1] : vector<8x128xf32> to vector<8xf32>
    %26 = vector.shape_cast %25 : vector<8xf32> to vector<8x1xf32>
    %cst_10 = arith.constant 1.280000e+02 : f32
    %27 = vector.broadcast %cst_10 : f32 to vector<8x1xf32>
    %28 = arith.divf %26, %27 : vector<8x1xf32>
    %29 = vector.broadcast %28 : vector<8x1xf32> to vector<8x128xf32>
    %30 = arith.subf %23, %29 : vector<8x128xf32>
    %31 = arith.mulf %30, %30 : vector<8x128xf32>
    %cst_11 = arith.constant dense<0.000000e+00> : vector<8xf32>
    %32 = vector.multi_reduction <add>, %31, %cst_11 [1] : vector<8x128xf32> to vector<8xf32>
    %33 = vector.shape_cast %32 : vector<8xf32> to vector<8x1xf32>
    %cst_12 = arith.constant 1.280000e+02 : f32
    %34 = vector.broadcast %cst_12 : f32 to vector<8x1xf32>
    %35 = arith.divf %33, %34 : vector<8x1xf32>
    %cst_13 = arith.constant 9.99999974E-6 : f32
    %36 = vector.broadcast %cst_13 : f32 to vector<8x1xf32>
    %37 = arith.addf %35, %36 : vector<8x1xf32>
    %38 = math.rsqrt %37 : vector<8x1xf32>
    %39 = vector.broadcast %38 : vector<8x1xf32> to vector<8x128xf32>
    %40 = arith.mulf %30, %39 : vector<8x128xf32>
    %41 = vector.broadcast %24 : vector<1x128xf32> to vector<8x128xf32>
    %42 = arith.mulf %40, %41 : vector<8x128xf32>
    %43 = vector.extract_strided_slice %42 {offsets = [0, 32], sizes = [8, 96], strides = [1, 1]} : vector<8x128xf32> to vector<8x96xf32>
    %44 = vector.extract_strided_slice %42 {offsets = [0, 0], sizes = [8, 32], strides = [1, 1]} : vector<8x128xf32> to vector<8x32xf32>
    %45 = tpu.concatenate %43, %44 in 1 : vector<8x96xf32>, vector<8x32xf32> -> vector<8x128xf32>
    %46 = vector.extract_strided_slice %42 {offsets = [0, 96], sizes = [8, 32], strides = [1, 1]} : vector<8x128xf32> to vector<8x32xf32>
    %47 = vector.extract_strided_slice %42 {offsets = [0, 0], sizes = [8, 96], strides = [1, 1]} : vector<8x128xf32> to vector<8x96xf32>
    %48 = tpu.concatenate %46, %47 in 1 : vector<8x32xf32>, vector<8x96xf32> -> vector<8x128xf32>
    %49 = vector.shape_cast %22 : vector<1x128xi1> to vector<1x128xi1>
    %50 = vector.broadcast %49 : vector<1x128xi1> to vector<8x128xi1>
    %51 = arith.select %50, %45, %48 : vector<8x128xi1>, vector<8x128xf32>
    %52 = arith.mulf %42, %2 : vector<8x128xf32>
    %53 = arith.mulf %51, %3 : vector<8x128xf32>
    %54 = arith.addf %52, %53 : vector<8x128xf32>
    %55 = arith.truncf %54 : vector<8x128xf32> to vector<8x128xbf16>
    %c0_14 = arith.constant 0 : index
    %c0_15 = arith.constant 0 : index
    %56 = vector.load %arg6[%c0_14, %c0_15] : memref<8x128xbf16, #tpu.memory_space<vmem>>, vector<8x128xbf16>
    tpu.vector_store %arg6[%c0_14, %c0_15], %55 {strides = array<i32>} : memref<8x128xbf16, #tpu.memory_space<vmem>>, vector<8x128xbf16>,
    %57 = vector.extract_strided_slice %1 {offsets = [0, 128], sizes = [8, 128], strides = [1, 1]} : vector<8x384xf32> to vector<8x128xf32>
    %c0_16 = arith.constant 0 : index
    %c0_17 = arith.constant 0 : index
    %58 = vector.load %arg3[%c0_16, %c0_17] : memref<1x128xf32, #tpu.memory_space<vmem>>, vector<1x128xf32>
    %cst_18 = arith.constant dense<0.000000e+00> : vector<8xf32>
    %59 = vector.multi_reduction <add>, %57, %cst_18 [1] : vector<8x128xf32> to vector<8xf32>
    %60 = vector.shape_cast %59 : vector<8xf32> to vector<8x1xf32>
    %cst_19 = arith.constant 1.280000e+02 : f32
    %61 = vector.broadcast %cst_19 : f32 to vector<8x1xf32>
    %62 = arith.divf %60, %61 : vector<8x1xf32>
    %63 = vector.broadcast %62 : vector<8x1xf32> to vector<8x128xf32>
    %64 = arith.subf %57, %63 : vector<8x128xf32>
    %65 = arith.mulf %64, %64 : vector<8x128xf32>
    %cst_20 = arith.constant dense<0.000000e+00> : vector<8xf32>
    %66 = vector.multi_reduction <add>, %65, %cst_20 [1] : vector<8x128xf32> to vector<8xf32>
    %67 = vector.shape_cast %66 : vector<8xf32> to vector<8x1xf32>
    %cst_21 = arith.constant 1.280000e+02 : f32
    %68 = vector.broadcast %cst_21 : f32 to vector<8x1xf32>
    %69 = arith.divf %67, %68 : vector<8x1xf32>
    %cst_22 = arith.constant 9.99999974E-6 : f32
    %70 = vector.broadcast %cst_22 : f32 to vector<8x1xf32>
    %71 = arith.addf %69, %70 : vector<8x1xf32>
    %72 = math.rsqrt %71 : vector<8x1xf32>
    %73 = vector.broadcast %72 : vector<8x1xf32> to vector<8x128xf32>
    %74 = arith.mulf %64, %73 : vector<8x128xf32>
    %75 = vector.broadcast %58 : vector<1x128xf32> to vector<8x128xf32>
    %76 = arith.mulf %74, %75 : vector<8x128xf32>
    %77 = vector.extract_strided_slice %76 {offsets = [0, 32], sizes = [8, 96], strides = [1, 1]} : vector<8x128xf32> to vector<8x96xf32>
    %78 = vector.extract_strided_slice %76 {offsets = [0, 0], sizes = [8, 32], strides = [1, 1]} : vector<8x128xf32> to vector<8x32xf32>
    %79 = tpu.concatenate %77, %78 in 1 : vector<8x96xf32>, vector<8x32xf32> -> vector<8x128xf32>
    %80 = vector.extract_strided_slice %76 {offsets = [0, 96], sizes = [8, 32], strides = [1, 1]} : vector<8x128xf32> to vector<8x32xf32>
    %81 = vector.extract_strided_slice %76 {offsets = [0, 0], sizes = [8, 96], strides = [1, 1]} : vector<8x128xf32> to vector<8x96xf32>
    %82 = tpu.concatenate %80, %81 in 1 : vector<8x32xf32>, vector<8x96xf32> -> vector<8x128xf32>
    %83 = vector.shape_cast %22 : vector<1x128xi1> to vector<1x128xi1>
    %84 = vector.broadcast %83 : vector<1x128xi1> to vector<8x128xi1>
    %85 = arith.select %84, %79, %82 : vector<8x128xi1>, vector<8x128xf32>
    %86 = arith.mulf %76, %2 : vector<8x128xf32>
    %87 = arith.mulf %85, %3 : vector<8x128xf32>
    %88 = arith.addf %86, %87 : vector<8x128xf32>
    %89 = arith.truncf %88 : vector<8x128xf32> to vector<8x128xbf16>
    %c0_23 = arith.constant 0 : index
    %c0_24 = arith.constant 0 : index
    %90 = vector.load %arg7[%c0_23, %c0_24] : memref<8x128xbf16, #tpu.memory_space<vmem>>, vector<8x128xbf16>
    tpu.vector_store %arg7[%c0_23, %c0_24], %89 {strides = array<i32>} : memref<8x128xbf16, #tpu.memory_space<vmem>>, vector<8x128xbf16>,
    %91 = vector.extract_strided_slice %1 {offsets = [0, 256], sizes = [8, 128], strides = [1, 1]} : vector<8x384xf32> to vector<8x128xf32>
    %92 = arith.truncf %91 : vector<8x128xf32> to vector<8x128xbf16>
    %c0_25 = arith.constant 0 : index
    %c0_26 = arith.constant 0 : index
    %93 = vector.load %arg8[%c0_25, %c0_26] : memref<8x128xbf16, #tpu.memory_space<vmem>>, vector<8x128xbf16>
    tpu.vector_store %arg8[%c0_25, %c0_26], %92 {strides = array<i32>} : memref<8x128xbf16, #tpu.memory_space<vmem>>, vector<8x128xbf16>,
    return
  }
  func.func @transform_0(%arg0: i32) -> (i32, i32) {
    %c0_i32 = arith.constant 0 : i32
    %c0_i32_0 = arith.constant 0 : i32
    return %arg0, %c0_i32 : i32, i32
  }
  func.func @transform_1(%arg0: i32) -> (i32, i32) {
    %c0_i32 = arith.constant 0 : i32
    %c0_i32_0 = arith.constant 0 : i32
    %c0_i32_1 = arith.constant 0 : i32
    return %c0_i32, %c0_i32_0 : i32, i32
  }
  func.func @transform_2(%arg0: i32) -> (i32, i32) {
    %c0_i32 = arith.constant 0 : i32
    %c0_i32_0 = arith.constant 0 : i32
    %c0_i32_1 = arith.constant 0 : i32
    return %c0_i32, %c0_i32_0 : i32, i32
  }
  func.func @transform_3(%arg0: i32) -> (i32, i32) {
    %c0_i32 = arith.constant 0 : i32
    %c0_i32_0 = arith.constant 0 : i32
    %c0_i32_1 = arith.constant 0 : i32
    return %c0_i32, %c0_i32_0 : i32, i32
  }
  func.func @transform_4(%arg0: i32) -> (i32, i32) {
    %c0_i32 = arith.constant 0 : i32
    %c0_i32_0 = arith.constant 0 : i32
    %c0_i32_1 = arith.constant 0 : i32
    return %c0_i32, %c0_i32_0 : i32, i32
  }
  func.func @transform_5(%arg0: i32) -> (i32, i32) {
    %c0_i32 = arith.constant 0 : i32
    %c0_i32_0 = arith.constant 0 : i32
    return %arg0, %c0_i32 : i32, i32
  }
  func.func @transform_6(%arg0: i32) -> (i32, i32) {
    %c0_i32 = arith.constant 0 : i32
    %c0_i32_0 = arith.constant 0 : i32
    return %arg0, %c0_i32 : i32, i32
  }
  func.func @transform_7(%arg0: i32) -> (i32, i32) {
    %c0_i32 = arith.constant 0 : i32
    %c0_i32_0 = arith.constant 0 : i32
    return %arg0, %c0_i32 : i32, i32
  }
}

module attributes {stable_mosaic.version = 11 : i64} {
  func.func @_matmul_res_kernel(%arg0: i32, %arg1: i32, %arg2: memref<16x128xbf16, #tpu.memory_space<vmem>>, %arg3: memref<128x128xbf16, #tpu.memory_space<vmem>>, %arg4: memref<16x128xbf16, #tpu.memory_space<vmem>>, %arg5: memref<16x128xbf16, #tpu.memory_space<vmem>>) attributes {dimension_semantics = [#tpu.dimension_semantics<parallel>, #tpu.dimension_semantics<parallel>], iteration_bounds = array<i64: 1, 1>, scalar_prefetch = 0 : i64, scratch_operands = 0 : i64, tpu.core_type = #tpu.core_type<tc>, window_params = [{transform_indices = @transform_0, window_bounds = array<i64: 16, 128>}, {transform_indices = @transform_1, window_bounds = array<i64: 128, 128>}, {transform_indices = @transform_2, window_bounds = array<i64: 16, 128>}, {transform_indices = @transform_3, window_bounds = array<i64: 16, 128>}]} {
    %c0 = arith.constant 0 : index
    %c0_0 = arith.constant 0 : index
    %0 = vector.load %arg2[%c0, %c0_0] : memref<16x128xbf16, #tpu.memory_space<vmem>>, vector<16x128xbf16>
    %c0_1 = arith.constant 0 : index
    %c0_2 = arith.constant 0 : index
    %1 = vector.load %arg3[%c0_1, %c0_2] : memref<128x128xbf16, #tpu.memory_space<vmem>>, vector<128x128xbf16>
    %cst = arith.constant dense<0.000000e+00> : vector<16x128xf32>
    %2 = tpu.matmul %0, %1, %cst {dimension_numbers = #tpu.dot_dimension_numbers<[1], [0], [0], [1], [0, 0, 1, 1], [], []>} : vector<16x128xbf16>, vector<128x128xbf16>, vector<16x128xf32> -> vector<16x128xf32>
    %c0_3 = arith.constant 0 : index
    %c0_4 = arith.constant 0 : index
    %3 = vector.load %arg4[%c0_3, %c0_4] : memref<16x128xbf16, #tpu.memory_space<vmem>>, vector<16x128xbf16>
    %4 = arith.extf %3 : vector<16x128xbf16> to vector<16x128xf32>
    %cst_5 = arith.constant 4.2426405 : f32
    %5 = vector.broadcast %cst_5 : f32 to vector<16x128xf32>
    %6 = arith.mulf %5, %2 : vector<16x128xf32>
    %7 = arith.addf %4, %6 : vector<16x128xf32>
    %8 = arith.truncf %7 : vector<16x128xf32> to vector<16x128xbf16>
    %c0_6 = arith.constant 0 : index
    %c0_7 = arith.constant 0 : index
    %9 = vector.load %arg5[%c0_6, %c0_7] : memref<16x128xbf16, #tpu.memory_space<vmem>>, vector<16x128xbf16>
    tpu.vector_store %arg5[%c0_6, %c0_7], %8 {strides = array<i32>} : memref<16x128xbf16, #tpu.memory_space<vmem>>, vector<16x128xbf16>,
    return
  }
  func.func @transform_0(%arg0: i32, %arg1: i32) -> (i32, i32) {
    %c0_i32 = arith.constant 0 : i32
    %c0_i32_0 = arith.constant 0 : i32
    return %arg0, %c0_i32 : i32, i32
  }
  func.func @transform_1(%arg0: i32, %arg1: i32) -> (i32, i32) {
    %c0_i32 = arith.constant 0 : i32
    %c0_i32_0 = arith.constant 0 : i32
    return %c0_i32, %arg1 : i32, i32
  }
  func.func @transform_2(%arg0: i32, %arg1: i32) -> (i32, i32) {
    %c0_i32 = arith.constant 0 : i32
    return %arg0, %arg1 : i32, i32
  }
  func.func @transform_3(%arg0: i32, %arg1: i32) -> (i32, i32) {
    %c0_i32 = arith.constant 0 : i32
    return %arg0, %arg1 : i32, i32
  }
}

module attributes {stable_mosaic.version = 11 : i64} {
  func.func @_matmul_res_kernel(%arg0: i32, %arg1: i32, %arg2: memref<16x512xbf16, #tpu.memory_space<vmem>>, %arg3: memref<512x128xbf16, #tpu.memory_space<vmem>>, %arg4: memref<16x128xbf16, #tpu.memory_space<vmem>>, %arg5: memref<16x128xbf16, #tpu.memory_space<vmem>>) attributes {dimension_semantics = [#tpu.dimension_semantics<parallel>, #tpu.dimension_semantics<parallel>], iteration_bounds = array<i64: 1, 1>, scalar_prefetch = 0 : i64, scratch_operands = 0 : i64, tpu.core_type = #tpu.core_type<tc>, window_params = [{transform_indices = @transform_0, window_bounds = array<i64: 16, 512>}, {transform_indices = @transform_1, window_bounds = array<i64: 512, 128>}, {transform_indices = @transform_2, window_bounds = array<i64: 16, 128>}, {transform_indices = @transform_3, window_bounds = array<i64: 16, 128>}]} {
    %c0 = arith.constant 0 : index
    %c0_0 = arith.constant 0 : index
    %0 = vector.load %arg2[%c0, %c0_0] : memref<16x512xbf16, #tpu.memory_space<vmem>>, vector<16x512xbf16>
    %c0_1 = arith.constant 0 : index
    %c0_2 = arith.constant 0 : index
    %1 = vector.load %arg3[%c0_1, %c0_2] : memref<512x128xbf16, #tpu.memory_space<vmem>>, vector<512x128xbf16>
    %cst = arith.constant dense<0.000000e+00> : vector<16x128xf32>
    %2 = tpu.matmul %0, %1, %cst {dimension_numbers = #tpu.dot_dimension_numbers<[1], [0], [0], [1], [0, 0, 1, 1], [], []>} : vector<16x512xbf16>, vector<512x128xbf16>, vector<16x128xf32> -> vector<16x128xf32>
    %c0_3 = arith.constant 0 : index
    %c0_4 = arith.constant 0 : index
    %3 = vector.load %arg4[%c0_3, %c0_4] : memref<16x128xbf16, #tpu.memory_space<vmem>>, vector<16x128xbf16>
    %4 = arith.extf %3 : vector<16x128xbf16> to vector<16x128xf32>
    %cst_5 = arith.constant 4.2426405 : f32
    %5 = vector.broadcast %cst_5 : f32 to vector<16x128xf32>
    %6 = arith.mulf %5, %2 : vector<16x128xf32>
    %7 = arith.addf %4, %6 : vector<16x128xf32>
    %8 = arith.truncf %7 : vector<16x128xf32> to vector<16x128xbf16>
    %c0_6 = arith.constant 0 : index
    %c0_7 = arith.constant 0 : index
    %9 = vector.load %arg5[%c0_6, %c0_7] : memref<16x128xbf16, #tpu.memory_space<vmem>>, vector<16x128xbf16>
    tpu.vector_store %arg5[%c0_6, %c0_7], %8 {strides = array<i32>} : memref<16x128xbf16, #tpu.memory_space<vmem>>, vector<16x128xbf16>,
    return
  }
  func.func @transform_0(%arg0: i32, %arg1: i32) -> (i32, i32) {
    %c0_i32 = arith.constant 0 : i32
    %c0_i32_0 = arith.constant 0 : i32
    return %arg0, %c0_i32 : i32, i32
  }
  func.func @transform_1(%arg0: i32, %arg1: i32) -> (i32, i32) {
    %c0_i32 = arith.constant 0 : i32
    %c0_i32_0 = arith.constant 0 : i32
    return %c0_i32, %arg1 : i32, i32
  }
  func.func @transform_2(%arg0: i32, %arg1: i32) -> (i32, i32) {
    %c0_i32 = arith.constant 0 : i32
    return %arg0, %arg1 : i32, i32
  }
  func.func @transform_3(%arg0: i32, %arg1: i32) -> (i32, i32) {
    %c0_i32 = arith.constant 0 : i32
    return %arg0, %arg1 : i32, i32
  }
}

module attributes {stable_mosaic.version = 11 : i64} {
  func.func @_ln_matmul_kernel(%arg0: i32, %arg1: i32, %arg2: memref<16x128xbf16, #tpu.memory_space<vmem>>, %arg3: memref<1x128xf32, #tpu.memory_space<vmem>>, %arg4: memref<128x128xbf16, #tpu.memory_space<vmem>>, %arg5: memref<1x128xf32, #tpu.memory_space<vmem>>, %arg6: memref<16x128xf32, #tpu.memory_space<vmem>>, %arg7: memref<16x128xbf16, #tpu.memory_space<vmem>>) attributes {dimension_semantics = [#tpu.dimension_semantics<parallel>, #tpu.dimension_semantics<arbitrary>], iteration_bounds = array<i64: 1, 1>, scalar_prefetch = 0 : i64, scratch_operands = 1 : i64, tpu.core_type = #tpu.core_type<tc>, window_params = [{transform_indices = @transform_0, window_bounds = array<i64: 16, 128>}, {pipeline_mode = #tpu.pipeline_mode<synchronous>, transform_indices = @transform_1, window_bounds = array<i64: 1, 128>}, {transform_indices = @transform_2, window_bounds = array<i64: 128, 128>}, {transform_indices = @transform_3, window_bounds = array<i64: 1, 128>}, {transform_indices = @transform_4, window_bounds = array<i64: 16, 128>}]} {
    %c0_i32 = arith.constant 0 : i32
    %0 = arith.cmpi eq, %arg1, %c0_i32 : i32
    %1 = arith.extui %0 : i1 to i32
    %c0_i32_0 = arith.constant 0 : i32
    %2 = arith.cmpi ne, %1, %c0_i32_0 : i32
    scf.if %2 {
      %c0_8 = arith.constant 0 : index
      %c0_9 = arith.constant 0 : index
      %10 = vector.load %arg2[%c0_8, %c0_9] : memref<16x128xbf16, #tpu.memory_space<vmem>>, vector<16x128xbf16>
      %11 = arith.extf %10 : vector<16x128xbf16> to vector<16x128xf32>
      %cst_10 = arith.constant dense<0.000000e+00> : vector<16xf32>
      %12 = vector.multi_reduction <add>, %11, %cst_10 [1] : vector<16x128xf32> to vector<16xf32>
      %13 = vector.shape_cast %12 : vector<16xf32> to vector<16x1xf32>
      %cst_11 = arith.constant 1.280000e+02 : f32
      %14 = vector.broadcast %cst_11 : f32 to vector<16x1xf32>
      %15 = arith.divf %13, %14 : vector<16x1xf32>
      %16 = vector.broadcast %15 : vector<16x1xf32> to vector<16x128xf32>
      %17 = arith.subf %11, %16 : vector<16x128xf32>
      %18 = arith.mulf %17, %17 : vector<16x128xf32>
      %cst_12 = arith.constant dense<0.000000e+00> : vector<16xf32>
      %19 = vector.multi_reduction <add>, %18, %cst_12 [1] : vector<16x128xf32> to vector<16xf32>
      %20 = vector.shape_cast %19 : vector<16xf32> to vector<16x1xf32>
      %cst_13 = arith.constant 1.280000e+02 : f32
      %21 = vector.broadcast %cst_13 : f32 to vector<16x1xf32>
      %22 = arith.divf %20, %21 : vector<16x1xf32>
      %cst_14 = arith.constant 9.99999974E-6 : f32
      %23 = vector.broadcast %cst_14 : f32 to vector<16x1xf32>
      %24 = arith.addf %22, %23 : vector<16x1xf32>
      %25 = math.rsqrt %24 : vector<16x1xf32>
      %26 = vector.broadcast %25 : vector<16x1xf32> to vector<16x128xf32>
      %27 = arith.mulf %17, %26 : vector<16x128xf32>
      %c0_15 = arith.constant 0 : index
      %c0_16 = arith.constant 0 : index
      %28 = vector.load %arg3[%c0_15, %c0_16] : memref<1x128xf32, #tpu.memory_space<vmem>>, vector<1x128xf32>
      %29 = vector.broadcast %28 : vector<1x128xf32> to vector<16x128xf32>
      %30 = arith.mulf %27, %29 : vector<16x128xf32>
      %31 = arith.truncf %30 : vector<16x128xf32> to vector<16x128xbf16>
      %c0_17 = arith.constant 0 : index
      %c0_18 = arith.constant 0 : index
      %32 = vector.load %arg7[%c0_17, %c0_18] : memref<16x128xbf16, #tpu.memory_space<vmem>>, vector<16x128xbf16>
      tpu.vector_store %arg7[%c0_17, %c0_18], %31 {strides = array<i32>} : memref<16x128xbf16, #tpu.memory_space<vmem>>, vector<16x128xbf16>,
    } else {
    }
    %c0 = arith.constant 0 : index
    %c0_1 = arith.constant 0 : index
    %3 = vector.load %arg7[%c0, %c0_1] : memref<16x128xbf16, #tpu.memory_space<vmem>>, vector<16x128xbf16>
    %c0_2 = arith.constant 0 : index
    %c0_3 = arith.constant 0 : index
    %4 = vector.load %arg4[%c0_2, %c0_3] : memref<128x128xbf16, #tpu.memory_space<vmem>>, vector<128x128xbf16>
    %cst = arith.constant dense<0.000000e+00> : vector<16x128xf32>
    %5 = tpu.matmul %3, %4, %cst {dimension_numbers = #tpu.dot_dimension_numbers<[1], [0], [0], [1], [0, 0, 1, 1], [], []>} : vector<16x128xbf16>, vector<128x128xbf16>, vector<16x128xf32> -> vector<16x128xf32>
    %c0_4 = arith.constant 0 : index
    %c0_5 = arith.constant 0 : index
    %6 = vector.load %arg5[%c0_4, %c0_5] : memref<1x128xf32, #tpu.memory_space<vmem>>, vector<1x128xf32>
    %7 = vector.broadcast %6 : vector<1x128xf32> to vector<16x128xf32>
    %8 = arith.addf %5, %7 : vector<16x128xf32>
    %c0_6 = arith.constant 0 : index
    %c0_7 = arith.constant 0 : index
    %9 = vector.load %arg6[%c0_6, %c0_7] : memref<16x128xf32, #tpu.memory_space<vmem>>, vector<16x128xf32>
    tpu.vector_store %arg6[%c0_6, %c0_7], %8 {strides = array<i32>} : memref<16x128xf32, #tpu.memory_space<vmem>>, vector<16x128xf32>,
    return
  }
  func.func @transform_0(%arg0: i32, %arg1: i32) -> (i32, i32) {
    %c0_i32 = arith.constant 0 : i32
    %c0_i32_0 = arith.constant 0 : i32
    return %arg0, %c0_i32 : i32, i32
  }
  func.func @transform_1(%arg0: i32, %arg1: i32) -> (i32, i32) {
    %c0_i32 = arith.constant 0 : i32
    %c0_i32_0 = arith.constant 0 : i32
    %c0_i32_1 = arith.constant 0 : i32
    return %c0_i32, %c0_i32_0 : i32, i32
  }
  func.func @transform_2(%arg0: i32, %arg1: i32) -> (i32, i32) {
    %c0_i32 = arith.constant 0 : i32
    %c0_i32_0 = arith.constant 0 : i32
    return %c0_i32, %arg1 : i32, i32
  }
  func.func @transform_3(%arg0: i32, %arg1: i32) -> (i32, i32) {
    %c0_i32 = arith.constant 0 : i32
    %c0_i32_0 = arith.constant 0 : i32
    return %c0_i32, %arg1 : i32, i32
  }
  func.func @transform_4(%arg0: i32, %arg1: i32) -> (i32, i32) {
    %c0_i32 = arith.constant 0 : i32
    return %arg0, %arg1 : i32, i32
  }
}

module attributes {stable_mosaic.version = 11 : i64} {
  func.func @_ln_matmul_swiglu_kernel(%arg0: i32, %arg1: i32, %arg2: memref<16x128xbf16, #tpu.memory_space<vmem>>, %arg3: memref<1x128xf32, #tpu.memory_space<vmem>>, %arg4: memref<1x128xf32, #tpu.memory_space<vmem>>, %arg5: memref<128x512xbf16, #tpu.memory_space<vmem>>, %arg6: memref<128x512xbf16, #tpu.memory_space<vmem>>, %arg7: memref<16x512xbf16, #tpu.memory_space<vmem>>, %arg8: memref<16x128xbf16, #tpu.memory_space<vmem>>) attributes {dimension_semantics = [#tpu.dimension_semantics<parallel>, #tpu.dimension_semantics<arbitrary>], iteration_bounds = array<i64: 1, 1>, scalar_prefetch = 0 : i64, scratch_operands = 1 : i64, tpu.core_type = #tpu.core_type<tc>, window_params = [{transform_indices = @transform_0, window_bounds = array<i64: 16, 128>}, {pipeline_mode = #tpu.pipeline_mode<synchronous>, transform_indices = @transform_1, window_bounds = array<i64: 1, 128>}, {pipeline_mode = #tpu.pipeline_mode<synchronous>, transform_indices = @transform_2, window_bounds = array<i64: 1, 128>}, {transform_indices = @transform_3, window_bounds = array<i64: 128, 512>}, {transform_indices = @transform_4, window_bounds = array<i64: 128, 512>}, {transform_indices = @transform_5, window_bounds = array<i64: 16, 512>}]} {
    %c0_i32 = arith.constant 0 : i32
    %0 = arith.cmpi eq, %arg1, %c0_i32 : i32
    %1 = arith.extui %0 : i1 to i32
    %c0_i32_0 = arith.constant 0 : i32
    %2 = arith.cmpi ne, %1, %c0_i32_0 : i32
    scf.if %2 {
      %c0_10 = arith.constant 0 : index
      %c0_11 = arith.constant 0 : index
      %17 = vector.load %arg2[%c0_10, %c0_11] : memref<16x128xbf16, #tpu.memory_space<vmem>>, vector<16x128xbf16>
      %18 = arith.extf %17 : vector<16x128xbf16> to vector<16x128xf32>
      %cst_12 = arith.constant dense<0.000000e+00> : vector<16xf32>
      %19 = vector.multi_reduction <add>, %18, %cst_12 [1] : vector<16x128xf32> to vector<16xf32>
      %20 = vector.shape_cast %19 : vector<16xf32> to vector<16x1xf32>
      %cst_13 = arith.constant 1.280000e+02 : f32
      %21 = vector.broadcast %cst_13 : f32 to vector<16x1xf32>
      %22 = arith.divf %20, %21 : vector<16x1xf32>
      %23 = vector.broadcast %22 : vector<16x1xf32> to vector<16x128xf32>
      %24 = arith.subf %18, %23 : vector<16x128xf32>
      %25 = arith.mulf %24, %24 : vector<16x128xf32>
      %cst_14 = arith.constant dense<0.000000e+00> : vector<16xf32>
      %26 = vector.multi_reduction <add>, %25, %cst_14 [1] : vector<16x128xf32> to vector<16xf32>
      %27 = vector.shape_cast %26 : vector<16xf32> to vector<16x1xf32>
      %cst_15 = arith.constant 1.280000e+02 : f32
      %28 = vector.broadcast %cst_15 : f32 to vector<16x1xf32>
      %29 = arith.divf %27, %28 : vector<16x1xf32>
      %cst_16 = arith.constant 9.99999974E-6 : f32
      %30 = vector.broadcast %cst_16 : f32 to vector<16x1xf32>
      %31 = arith.addf %29, %30 : vector<16x1xf32>
      %32 = math.rsqrt %31 : vector<16x1xf32>
      %33 = vector.broadcast %32 : vector<16x1xf32> to vector<16x128xf32>
      %34 = arith.mulf %24, %33 : vector<16x128xf32>
      %c0_17 = arith.constant 0 : index
      %c0_18 = arith.constant 0 : index
      %35 = vector.load %arg3[%c0_17, %c0_18] : memref<1x128xf32, #tpu.memory_space<vmem>>, vector<1x128xf32>
      %36 = vector.broadcast %35 : vector<1x128xf32> to vector<16x128xf32>
      %37 = arith.mulf %34, %36 : vector<16x128xf32>
      %c0_19 = arith.constant 0 : index
      %c0_20 = arith.constant 0 : index
      %38 = vector.load %arg4[%c0_19, %c0_20] : memref<1x128xf32, #tpu.memory_space<vmem>>, vector<1x128xf32>
      %39 = vector.broadcast %38 : vector<1x128xf32> to vector<16x128xf32>
      %40 = arith.addf %37, %39 : vector<16x128xf32>
      %41 = arith.truncf %40 : vector<16x128xf32> to vector<16x128xbf16>
      %c0_21 = arith.constant 0 : index
      %c0_22 = arith.constant 0 : index
      %42 = vector.load %arg8[%c0_21, %c0_22] : memref<16x128xbf16, #tpu.memory_space<vmem>>, vector<16x128xbf16>
      tpu.vector_store %arg8[%c0_21, %c0_22], %41 {strides = array<i32>} : memref<16x128xbf16, #tpu.memory_space<vmem>>, vector<16x128xbf16>,
    } else {
    }
    %c0 = arith.constant 0 : index
    %c0_1 = arith.constant 0 : index
    %3 = vector.load %arg8[%c0, %c0_1] : memref<16x128xbf16, #tpu.memory_space<vmem>>, vector<16x128xbf16>
    %c0_2 = arith.constant 0 : index
    %c0_3 = arith.constant 0 : index
    %4 = vector.load %arg5[%c0_2, %c0_3] : memref<128x512xbf16, #tpu.memory_space<vmem>>, vector<128x512xbf16>
    %cst = arith.constant dense<0.000000e+00> : vector<16x512xf32>
    %5 = tpu.matmul %3, %4, %cst {dimension_numbers = #tpu.dot_dimension_numbers<[1], [0], [0], [1], [0, 0, 1, 1], [], []>} : vector<16x128xbf16>, vector<128x512xbf16>, vector<16x512xf32> -> vector<16x512xf32>
    %c0_4 = arith.constant 0 : index
    %c0_5 = arith.constant 0 : index
    %6 = vector.load %arg6[%c0_4, %c0_5] : memref<128x512xbf16, #tpu.memory_space<vmem>>, vector<128x512xbf16>
    %cst_6 = arith.constant dense<0.000000e+00> : vector<16x512xf32>
    %7 = tpu.matmul %3, %6, %cst_6 {dimension_numbers = #tpu.dot_dimension_numbers<[1], [0], [0], [1], [0, 0, 1, 1], [], []>} : vector<16x128xbf16>, vector<128x512xbf16>, vector<16x512xf32> -> vector<16x512xf32>
    %8 = arith.negf %5 : vector<16x512xf32>
    %9 = math.exp %8 : vector<16x512xf32>
    %cst_7 = arith.constant 1.000000e+00 : f32
    %10 = vector.broadcast %cst_7 : f32 to vector<16x512xf32>
    %11 = arith.addf %10, %9 : vector<16x512xf32>
    %12 = arith.divf %10, %11 : vector<16x512xf32>
    %13 = arith.mulf %5, %12 : vector<16x512xf32>
    %14 = arith.mulf %13, %7 : vector<16x512xf32>
    %15 = arith.truncf %14 : vector<16x512xf32> to vector<16x512xbf16>
    %c0_8 = arith.constant 0 : index
    %c0_9 = arith.constant 0 : index
    %16 = vector.load %arg7[%c0_8, %c0_9] : memref<16x512xbf16, #tpu.memory_space<vmem>>, vector<16x512xbf16>
    tpu.vector_store %arg7[%c0_8, %c0_9], %15 {strides = array<i32>} : memref<16x512xbf16, #tpu.memory_space<vmem>>, vector<16x512xbf16>,
    return
  }
  func.func @transform_0(%arg0: i32, %arg1: i32) -> (i32, i32) {
    %c0_i32 = arith.constant 0 : i32
    %c0_i32_0 = arith.constant 0 : i32
    return %arg0, %c0_i32 : i32, i32
  }
  func.func @transform_1(%arg0: i32, %arg1: i32) -> (i32, i32) {
    %c0_i32 = arith.constant 0 : i32
    %c0_i32_0 = arith.constant 0 : i32
    %c0_i32_1 = arith.constant 0 : i32
    return %c0_i32, %c0_i32_0 : i32, i32
  }
  func.func @transform_2(%arg0: i32, %arg1: i32) -> (i32, i32) {
    %c0_i32 = arith.constant 0 : i32
    %c0_i32_0 = arith.constant 0 : i32
    %c0_i32_1 = arith.constant 0 : i32
    return %c0_i32, %c0_i32_0 : i32, i32
  }
  func.func @transform_3(%arg0: i32, %arg1: i32) -> (i32, i32) {
    %c0_i32 = arith.constant 0 : i32
    %c0_i32_0 = arith.constant 0 : i32
    return %c0_i32, %arg1 : i32, i32
  }
  func.func @transform_4(%arg0: i32, %arg1: i32) -> (i32, i32) {
    %c0_i32 = arith.constant 0 : i32
    %c0_i32_0 = arith.constant 0 : i32
    return %c0_i32, %arg1 : i32, i32
  }
  func.func @transform_5(%arg0: i32, %arg1: i32) -> (i32, i32) {
    %c0_i32 = arith.constant 0 : i32
    return %arg0, %arg1 : i32, i32
  }
}

module attributes {stable_mosaic.version = 11 : i64} {
  func.func @_ln_matmul_kernel(%arg0: i32, %arg1: i32, %arg2: memref<16x128xbf16, #tpu.memory_space<vmem>>, %arg3: memref<1x128xf32, #tpu.memory_space<vmem>>, %arg4: memref<1x128xf32, #tpu.memory_space<vmem>>, %arg5: memref<128x128xbf16, #tpu.memory_space<vmem>>, %arg6: memref<1x128xf32, #tpu.memory_space<vmem>>, %arg7: memref<16x128xf32, #tpu.memory_space<vmem>>, %arg8: memref<16x128xbf16, #tpu.memory_space<vmem>>) attributes {dimension_semantics = [#tpu.dimension_semantics<parallel>, #tpu.dimension_semantics<arbitrary>], iteration_bounds = array<i64: 1, 1>, scalar_prefetch = 0 : i64, scratch_operands = 1 : i64, tpu.core_type = #tpu.core_type<tc>, window_params = [{transform_indices = @transform_0, window_bounds = array<i64: 16, 128>}, {pipeline_mode = #tpu.pipeline_mode<synchronous>, transform_indices = @transform_1, window_bounds = array<i64: 1, 128>}, {pipeline_mode = #tpu.pipeline_mode<synchronous>, transform_indices = @transform_2, window_bounds = array<i64: 1, 128>}, {transform_indices = @transform_3, window_bounds = array<i64: 128, 128>}, {transform_indices = @transform_4, window_bounds = array<i64: 1, 128>}, {transform_indices = @transform_5, window_bounds = array<i64: 16, 128>}]} {
    %c0_i32 = arith.constant 0 : i32
    %0 = arith.cmpi eq, %arg1, %c0_i32 : i32
    %1 = arith.extui %0 : i1 to i32
    %c0_i32_0 = arith.constant 0 : i32
    %2 = arith.cmpi ne, %1, %c0_i32_0 : i32
    scf.if %2 {
      %c0_8 = arith.constant 0 : index
      %c0_9 = arith.constant 0 : index
      %10 = vector.load %arg2[%c0_8, %c0_9] : memref<16x128xbf16, #tpu.memory_space<vmem>>, vector<16x128xbf16>
      %11 = arith.extf %10 : vector<16x128xbf16> to vector<16x128xf32>
      %cst_10 = arith.constant dense<0.000000e+00> : vector<16xf32>
      %12 = vector.multi_reduction <add>, %11, %cst_10 [1] : vector<16x128xf32> to vector<16xf32>
      %13 = vector.shape_cast %12 : vector<16xf32> to vector<16x1xf32>
      %cst_11 = arith.constant 1.280000e+02 : f32
      %14 = vector.broadcast %cst_11 : f32 to vector<16x1xf32>
      %15 = arith.divf %13, %14 : vector<16x1xf32>
      %16 = vector.broadcast %15 : vector<16x1xf32> to vector<16x128xf32>
      %17 = arith.subf %11, %16 : vector<16x128xf32>
      %18 = arith.mulf %17, %17 : vector<16x128xf32>
      %cst_12 = arith.constant dense<0.000000e+00> : vector<16xf32>
      %19 = vector.multi_reduction <add>, %18, %cst_12 [1] : vector<16x128xf32> to vector<16xf32>
      %20 = vector.shape_cast %19 : vector<16xf32> to vector<16x1xf32>
      %cst_13 = arith.constant 1.280000e+02 : f32
      %21 = vector.broadcast %cst_13 : f32 to vector<16x1xf32>
      %22 = arith.divf %20, %21 : vector<16x1xf32>
      %cst_14 = arith.constant 9.99999974E-6 : f32
      %23 = vector.broadcast %cst_14 : f32 to vector<16x1xf32>
      %24 = arith.addf %22, %23 : vector<16x1xf32>
      %25 = math.rsqrt %24 : vector<16x1xf32>
      %26 = vector.broadcast %25 : vector<16x1xf32> to vector<16x128xf32>
      %27 = arith.mulf %17, %26 : vector<16x128xf32>
      %c0_15 = arith.constant 0 : index
      %c0_16 = arith.constant 0 : index
      %28 = vector.load %arg3[%c0_15, %c0_16] : memref<1x128xf32, #tpu.memory_space<vmem>>, vector<1x128xf32>
      %29 = vector.broadcast %28 : vector<1x128xf32> to vector<16x128xf32>
      %30 = arith.mulf %27, %29 : vector<16x128xf32>
      %c0_17 = arith.constant 0 : index
      %c0_18 = arith.constant 0 : index
      %31 = vector.load %arg4[%c0_17, %c0_18] : memref<1x128xf32, #tpu.memory_space<vmem>>, vector<1x128xf32>
      %32 = vector.broadcast %31 : vector<1x128xf32> to vector<16x128xf32>
      %33 = arith.addf %30, %32 : vector<16x128xf32>
      %34 = arith.truncf %33 : vector<16x128xf32> to vector<16x128xbf16>
      %c0_19 = arith.constant 0 : index
      %c0_20 = arith.constant 0 : index
      %35 = vector.load %arg8[%c0_19, %c0_20] : memref<16x128xbf16, #tpu.memory_space<vmem>>, vector<16x128xbf16>
      tpu.vector_store %arg8[%c0_19, %c0_20], %34 {strides = array<i32>} : memref<16x128xbf16, #tpu.memory_space<vmem>>, vector<16x128xbf16>,
    } else {
    }
    %c0 = arith.constant 0 : index
    %c0_1 = arith.constant 0 : index
    %3 = vector.load %arg8[%c0, %c0_1] : memref<16x128xbf16, #tpu.memory_space<vmem>>, vector<16x128xbf16>
    %c0_2 = arith.constant 0 : index
    %c0_3 = arith.constant 0 : index
    %4 = vector.load %arg5[%c0_2, %c0_3] : memref<128x128xbf16, #tpu.memory_space<vmem>>, vector<128x128xbf16>
    %cst = arith.constant dense<0.000000e+00> : vector<16x128xf32>
    %5 = tpu.matmul %3, %4, %cst {dimension_numbers = #tpu.dot_dimension_numbers<[1], [0], [0], [1], [0, 0, 1, 1], [], []>} : vector<16x128xbf16>, vector<128x128xbf16>, vector<16x128xf32> -> vector<16x128xf32>
    %c0_4 = arith.constant 0 : index
    %c0_5 = arith.constant 0 : index
    %6 = vector.load %arg6[%c0_4, %c0_5] : memref<1x128xf32, #tpu.memory_space<vmem>>, vector<1x128xf32>
    %7 = vector.broadcast %6 : vector<1x128xf32> to vector<16x128xf32>
    %8 = arith.addf %5, %7 : vector<16x128xf32>
    %c0_6 = arith.constant 0 : index
    %c0_7 = arith.constant 0 : index
    %9 = vector.load %arg7[%c0_6, %c0_7] : memref<16x128xf32, #tpu.memory_space<vmem>>, vector<16x128xf32>
    tpu.vector_store %arg7[%c0_6, %c0_7], %8 {strides = array<i32>} : memref<16x128xf32, #tpu.memory_space<vmem>>, vector<16x128xf32>,
    return
  }
  func.func @transform_0(%arg0: i32, %arg1: i32) -> (i32, i32) {
    %c0_i32 = arith.constant 0 : i32
    %c0_i32_0 = arith.constant 0 : i32
    return %arg0, %c0_i32 : i32, i32
  }
  func.func @transform_1(%arg0: i32, %arg1: i32) -> (i32, i32) {
    %c0_i32 = arith.constant 0 : i32
    %c0_i32_0 = arith.constant 0 : i32
    %c0_i32_1 = arith.constant 0 : i32
    return %c0_i32, %c0_i32_0 : i32, i32
  }
  func.func @transform_2(%arg0: i32, %arg1: i32) -> (i32, i32) {
    %c0_i32 = arith.constant 0 : i32
    %c0_i32_0 = arith.constant 0 : i32
    %c0_i32_1 = arith.constant 0 : i32
    return %c0_i32, %c0_i32_0 : i32, i32
  }
  func.func @transform_3(%arg0: i32, %arg1: i32) -> (i32, i32) {
    %c0_i32 = arith.constant 0 : i32
    %c0_i32_0 = arith.constant 0 : i32
    return %c0_i32, %arg1 : i32, i32
  }
  func.func @transform_4(%arg0: i32, %arg1: i32) -> (i32, i32) {
    %c0_i32 = arith.constant 0 : i32
    %c0_i32_0 = arith.constant 0 : i32
    return %c0_i32, %arg1 : i32, i32
  }
  func.func @transform_5(%arg0: i32, %arg1: i32) -> (i32, i32) {
    %c0_i32 = arith.constant 0 : i32
    return %arg0, %arg1 : i32, i32
  }
}

module attributes {stable_mosaic.version = 11 : i64} {
  func.func @_ln_kernel(%arg0: i32, %arg1: memref<16x128xbf16, #tpu.memory_space<vmem>>, %arg2: memref<1x128xf32, #tpu.memory_space<vmem>>, %arg3: memref<16x128xf32, #tpu.memory_space<vmem>>) attributes {dimension_semantics = [#tpu.dimension_semantics<parallel>], iteration_bounds = array<i64: 1>, scalar_prefetch = 0 : i64, scratch_operands = 0 : i64, tpu.core_type = #tpu.core_type<tc>, window_params = [{transform_indices = @transform_0, window_bounds = array<i64: 16, 128>}, {pipeline_mode = #tpu.pipeline_mode<synchronous>, transform_indices = @transform_1, window_bounds = array<i64: 1, 128>}, {transform_indices = @transform_2, window_bounds = array<i64: 16, 128>}]} {
    %c0 = arith.constant 0 : index
    %c0_0 = arith.constant 0 : index
    %0 = vector.load %arg1[%c0, %c0_0] : memref<16x128xbf16, #tpu.memory_space<vmem>>, vector<16x128xbf16>
    %1 = arith.extf %0 : vector<16x128xbf16> to vector<16x128xf32>
    %cst = arith.constant dense<0.000000e+00> : vector<16xf32>
    %2 = vector.multi_reduction <add>, %1, %cst [1] : vector<16x128xf32> to vector<16xf32>
    %3 = vector.shape_cast %2 : vector<16xf32> to vector<16x1xf32>
    %cst_1 = arith.constant 1.280000e+02 : f32
    %4 = vector.broadcast %cst_1 : f32 to vector<16x1xf32>
    %5 = arith.divf %3, %4 : vector<16x1xf32>
    %6 = vector.broadcast %5 : vector<16x1xf32> to vector<16x128xf32>
    %7 = arith.subf %1, %6 : vector<16x128xf32>
    %8 = arith.mulf %7, %7 : vector<16x128xf32>
    %cst_2 = arith.constant dense<0.000000e+00> : vector<16xf32>
    %9 = vector.multi_reduction <add>, %8, %cst_2 [1] : vector<16x128xf32> to vector<16xf32>
    %10 = vector.shape_cast %9 : vector<16xf32> to vector<16x1xf32>
    %cst_3 = arith.constant 1.280000e+02 : f32
    %11 = vector.broadcast %cst_3 : f32 to vector<16x1xf32>
    %12 = arith.divf %10, %11 : vector<16x1xf32>
    %cst_4 = arith.constant 9.99999974E-6 : f32
    %13 = vector.broadcast %cst_4 : f32 to vector<16x1xf32>
    %14 = arith.addf %12, %13 : vector<16x1xf32>
    %15 = math.rsqrt %14 : vector<16x1xf32>
    %16 = vector.broadcast %15 : vector<16x1xf32> to vector<16x128xf32>
    %17 = arith.mulf %7, %16 : vector<16x128xf32>
    %c0_5 = arith.constant 0 : index
    %c0_6 = arith.constant 0 : index
    %18 = vector.load %arg2[%c0_5, %c0_6] : memref<1x128xf32, #tpu.memory_space<vmem>>, vector<1x128xf32>
    %19 = vector.broadcast %18 : vector<1x128xf32> to vector<16x128xf32>
    %20 = arith.mulf %17, %19 : vector<16x128xf32>
    %c0_7 = arith.constant 0 : index
    %c0_8 = arith.constant 0 : index
    %21 = vector.load %arg3[%c0_7, %c0_8] : memref<16x128xf32, #tpu.memory_space<vmem>>, vector<16x128xf32>
    tpu.vector_store %arg3[%c0_7, %c0_8], %20 {strides = array<i32>} : memref<16x128xf32, #tpu.memory_space<vmem>>, vector<16x128xf32>,
    return
  }
  func.func @transform_0(%arg0: i32) -> (i32, i32) {
    %c0_i32 = arith.constant 0 : i32
    %c0_i32_0 = arith.constant 0 : i32
    return %arg0, %c0_i32 : i32, i32
  }
  func.func @transform_1(%arg0: i32) -> (i32, i32) {
    %c0_i32 = arith.constant 0 : i32
    %c0_i32_0 = arith.constant 0 : i32
    %c0_i32_1 = arith.constant 0 : i32
    return %c0_i32, %c0_i32_0 : i32, i32
  }
  func.func @transform_2(%arg0: i32) -> (i32, i32) {
    %c0_i32 = arith.constant 0 : i32
    %c0_i32_0 = arith.constant 0 : i32
    return %arg0, %c0_i32 : i32, i32
  }
}

</mosaic_0001>

<llo_original>
// kernel: tile.14
$region0: #{tile.14}
  %s0 = inlined_call_operand.vmem [shape: f32[8,2,64], index: 0, kind: input, shape index: {}]
  %s1 = inlined_call_operand.vmem [shape: f32[8,128], index: 1, kind: output, shape index: {}]
  $region1: #{tile.14} parent=0
    #allocation0 [shape = 'u8[32768]{0}', space=vmem, size = 0x8000, scoped, tag = 'scoped mem for input reshape']
    %s3 = sshll.u32 1, 2
    %s4 = ssub.s32 %s3, 1
    %s5 = smul.addr 2, 7
    %s6 = scalar_lea.vmem %s0, %s5
    %v7 = vld [vmem:[%s6] sm:%s4]
    %s8 = scalar_lea.vmem [#allocation0], 56
    %9 = vst [vmem:[%s8] sm:%s4] %v7
    %s10 = smul.addr 2, 6
    %s11 = scalar_lea.vmem %s0, %s10
    %v12 = vld [vmem:[%s11] sm:%s4]
    %s13 = scalar_lea.vmem [#allocation0], 48
    %14 = vst [vmem:[%s13] sm:%s4] %v12
    %s15 = smul.addr 2, 5
    %s16 = scalar_lea.vmem %s0, %s15
    %v17 = vld [vmem:[%s16] sm:%s4]
    %s18 = scalar_lea.vmem [#allocation0], 40
    %19 = vst [vmem:[%s18] sm:%s4] %v17
    %s20 = smul.addr 2, 4
    %s21 = scalar_lea.vmem %s0, %s20
    %v22 = vld [vmem:[%s21] sm:%s4]
    %s23 = scalar_lea.vmem [#allocation0], 32
    %24 = vst [vmem:[%s23] sm:%s4] %v22
    %s25 = smul.addr 2, 3
    %s26 = scalar_lea.vmem %s0, %s25
    %v27 = vld [vmem:[%s26] sm:%s4]
    %s28 = scalar_lea.vmem [#allocation0], 24
    %29 = vst [vmem:[%s28] sm:%s4] %v27
    %s30 = smul.addr 2, 2
    %s31 = scalar_lea.vmem %s0, %s30
    %v32 = vld [vmem:[%s31] sm:%s4]
    %s33 = scalar_lea.vmem [#allocation0], 16
    %34 = vst [vmem:[%s33] sm:%s4] %v32
    %s35 = scalar_lea.vmem %s0, 2
    %v36 = vld [vmem:[%s35] sm:%s4]
    %s37 = scalar_lea.vmem [#allocation0], 8
    %38 = vst [vmem:[%s37] sm:%s4] %v36
    %v39 = vld [vmem:[%s0] sm:%s4]
    %40 = vst [vmem:[#allocation0] sm:%s4] %v39
    %v41 = vld [vmem:[#allocation0] ss:$8 sm:$0xf]
    %v42 = vld [vmem:[#allocation0] ss:$8 sm:$0xf0]
    %vm43 = vcmask 1047556
    %v44 = vsel %vm43, %v42, %v41
    %vm45 = vcmask 523264
    %46 = vst.msk [vmem:[%s1] sm:$0xff] %vm45, %v44
    %s47 = scalar_lea.vmem [#allocation0], 1
    %v48 = vld [vmem:[%s47] ss:$8 sm:$0xf]
    %s49 = scalar_lea.vmem [#allocation0], 1
    %v50 = vld [vmem:[%s49] ss:$8 sm:$0xf0]
    %vm51 = vcmask 1047556
    %v52 = vsel %vm51, %v50, %v48
    %53 = vrot.lane.b32.xlu0 %v52, 64
    %v54 = vpop.permute.xlu0 %53
    %vm55 = vcmask 1048064
    %56 = vst.msk [vmem:[%s1] sm:$0xff] %vm55, %v54

// kernel: esmc_forward.16
$region0: #{esmc_forward.16}
  #allocation0 [shape = 'u32[]', space=smem, size = 0x4, offset = 0x4, fixed_abs, tag = 'smem constant byte address 0x4 - core index']
  #allocation1 [shape = 'u32[144,128]{1,0:T(1,128)}', space=vmem, size = 0x12000, scoped, tag = 'internal scratch']
  %s0 = inlined_call_operand.vmem [shape: bf16[16,384], index: 0, kind: input, shape index: {}]
  %s1 = inlined_call_operand.vmem [shape: f32[1,128], index: 1, kind: input, shape index: {}]
  %s2 = inlined_call_operand.vmem [shape: f32[1,128], index: 2, kind: input, shape index: {}]
  %s3 = inlined_call_operand.vmem [shape: f32[8,128], index: 3, kind: input, shape index: {}]
  %s4 = inlined_call_operand.vmem [shape: f32[8,128], index: 4, kind: input, shape index: {}]
  %s5 = inlined_call_operand.vmem [shape: bf16[16,128], index: 5, kind: output, shape index: {0}]
  %s6 = inlined_call_operand.vmem [shape: bf16[16,128], index: 6, kind: output, shape index: {1}]
  %s7 = inlined_call_operand.vmem [shape: bf16[16,128], index: 7, kind: output, shape index: {2}]
  %8 = xla_tuple %s5, %s6, %s7
  %s9 = sld [smem:[#allocation0]]
  $region69: #{esmc_forward.16} parent=0
    _
  %s11 = ssub.s32 1, %s9
  %s12 = scalar_select 0, %s11, %s9
  loop: start=0, step=1, limit=4
  $region2: #{esmc_forward.16} parent=0 // loop_pre_header
    _
  $region3: #{esmc_forward.16} parent=0 // loop_header
    %s14 = sphi 0, %s18
    %p15 = scmp.ge.s32.totalorder %s14, 4
    %s24 = sphi 0, %s26
    %s27 = sphi 0, %s24
    %s28 = sphi 0, %s27
    %s44 = sphi 0, %s28
    %s48 = sphi 0, %s48
    %s50 = sphi 0, %s48
    %s51 = sphi 0, %s50
    %s65 = sphi 0, %s51
    %s69 = sphi 0, %s69
    %s71 = sphi 0, %s69
    %s72 = sphi 0, %s71
    %s86 = sphi 0, %s72
    %s90 = sphi 0, %s90
    %s92 = sphi 0, %s90
    %s93 = sphi 0, %s92
    %s107 = sphi 0, %s93
    %s111 = sphi 0, %s111
    %s113 = sphi 0, %s111
    %s114 = sphi 0, %s113
    %s128 = sphi 0, %s114
    %s134 = sphi 0, %s136
    %s137 = sphi 0, %s134
    %s138 = sphi 0, %s137
    %s154 = sphi 0, %s138
    %s160 = sphi 0, %s162
    %s163 = sphi 0, %s160
    %s164 = sphi 0, %s163
    %s180 = sphi 0, %s164
    %s186 = sphi 0, %s188
    %s189 = sphi 0, %s186
    %s190 = sphi 0, %s189
    %s206 = sphi 0, %s190
  $region4: #{esmc_forward.16} parent=0 // loop_header_branch
    %17 = sbr.rel (%p15) target = $region8
  $region5: #{esmc_forward.16} parent=0 // loop_body
    %s19 = ssub.s32 %s14, 1
    %s20 = ssub.s32 %s14, 2
    %s21 = sadd.s32 %s14, 1
    %s22 = ssub.s32 %s14, %s21
    %p23 = scmp.eq.s32.totalorder %s22, 0
    %s25 = sadd.s32 %s24, 1
    %s26 = scalar_select %p23, %s24, %s25
    %p29 = pneg %p23
    %p30 = scmp.eq.s32.totalorder %s14, 1
    %p31 = por %p29, %p30
    %p32 = scmp.ne.s32.totalorder %s24, %s27
    %p33 = scmp.eq.s32.totalorder %s14, 0
    %p34 = por %p32, %p33
    %p35 = scmp.ne.s32.totalorder %s24, %s27
    %p36 = scmp.eq.s32.totalorder %s19, 1
    %p37 = por %p35, %p36
    %p38 = scmp.ne.s32.totalorder %s27, %s28
    %p39 = scmp.eq.s32.totalorder %s19, 0
    %p40 = por %p38, %p39
    %p41 = scmp.ne.s32.totalorder %s27, %s28
    %p42 = scmp.eq.s32.totalorder %s20, 1
    %p43 = por %p41, %p42
    %p45 = scmp.ne.s32.totalorder %s28, %s44
    %p46 = scmp.eq.s32.totalorder %s20, 0
    %p47 = por %p45, %p46
    %s49 = sadd.s32 %s48, 1
    %p52 = scmp.eq.s32.totalorder %s14, 1
    %p53 = scmp.ne.s32.totalorder %s48, %s50
    %p54 = scmp.eq.s32.totalorder %s14, 0
    %p55 = por %p53, %p54
    %p56 = scmp.ne.s32.totalorder %s48, %s50
    %p57 = scmp.eq.s32.totalorder %s19, 1
    %p58 = por %p56, %p57
    %p59 = scmp.ne.s32.totalorder %s50, %s51
    %p60 = scmp.eq.s32.totalorder %s19, 0
    %p61 = por %p59, %p60
    %p62 = scmp.ne.s32.totalorder %s50, %s51
    %p63 = scmp.eq.s32.totalorder %s20, 1
    %p64 = por %p62, %p63
    %p66 = scmp.ne.s32.totalorder %s51, %s65
    %p67 = scmp.eq.s32.totalorder %s20, 0
    %p68 = por %p66, %p67
    %s70 = sadd.s32 %s69, 1
    %p73 = scmp.eq.s32.totalorder %s14, 1
    %p74 = scmp.ne.s32.totalorder %s69, %s71
    %p75 = scmp.eq.s32.totalorder %s14, 0
    %p76 = por %p74, %p75
    %p77 = scmp.ne.s32.totalorder %s69, %s71
    %p78 = scmp.eq.s32.totalorder %s19, 1
    %p79 = por %p77, %p78
    %p80 = scmp.ne.s32.totalorder %s71, %s72
    %p81 = scmp.eq.s32.totalorder %s19, 0
    %p82 = por %p80, %p81
    %p83 = scmp.ne.s32.totalorder %s71, %s72
    %p84 = scmp.eq.s32.totalorder %s20, 1
    %p85 = por %p83, %p84
    %p87 = scmp.ne.s32.totalorder %s72, %s86
    %p88 = scmp.eq.s32.totalorder %s20, 0
    %p89 = por %p87, %p88
    %s91 = sadd.s32 %s90, 1
    %p94 = scmp.eq.s32.totalorder %s14, 1
    %p95 = scmp.ne.s32.totalorder %s90, %s92
    %p96 = scmp.eq.s32.totalorder %s14, 0
    %p97 = por %p95, %p96
    %p98 = scmp.ne.s32.totalorder %s90, %s92
    %p99 = scmp.eq.s32.totalorder %s19, 1
    %p100 = por %p98, %p99
    %p101 = scmp.ne.s32.totalorder %s92, %s93
    %p102 = scmp.eq.s32.totalorder %s19, 0
    %p103 = por %p101, %p102
    %p104 = scmp.ne.s32.totalorder %s92, %s93
    %p105 = scmp.eq.s32.totalorder %s20, 1
    %p106 = por %p104, %p105
    %p108 = scmp.ne.s32.totalorder %s93, %s107
    %p109 = scmp.eq.s32.totalorder %s20, 0
    %p110 = por %p108, %p109
    %s112 = sadd.s32 %s111, 1
    %p115 = scmp.eq.s32.totalorder %s14, 1
    %p116 = scmp.ne.s32.totalorder %s111, %s113
    %p117 = scmp.eq.s32.totalorder %s14, 0
    %p118 = por %p116, %p117
    %p119 = scmp.ne.s32.totalorder %s111, %s113
    %p120 = scmp.eq.s32.totalorder %s19, 1
    %p121 = por %p119, %p120
    %p122 = scmp.ne.s32.totalorder %s113, %s114
    %p123 = scmp.eq.s32.totalorder %s19, 0
    %p124 = por %p122, %p123
    %p125 = scmp.ne.s32.totalorder %s113, %s114
    %p126 = scmp.eq.s32.totalorder %s20, 1
    %p127 = por %p125, %p126
    %p129 = scmp.ne.s32.totalorder %s114, %s128
    %p130 = scmp.eq.s32.totalorder %s20, 0
    %p131 = por %p129, %p130
    %s132 = ssub.s32 %s14, %s21
    %p133 = scmp.eq.s32.totalorder %s132, 0
    %s135 = sadd.s32 %s134, 1
    %s136 = scalar_select %p133, %s134, %s135
    %p139 = pneg %p133
    %p140 = scmp.eq.s32.totalorder %s14, 1
    %p141 = por %p139, %p140
    %p142 = scmp.ne.s32.totalorder %s134, %s137
    %p143 = scmp.eq.s32.totalorder %s14, 0
    %p144 = por %p142, %p143
    %p145 = scmp.ne.s32.totalorder %s134, %s137
    %p146 = scmp.eq.s32.totalorder %s19, 1
    %p147 = por %p145, %p146
    %p148 = scmp.ne.s32.totalorder %s137, %s138
    %p149 = scmp.eq.s32.totalorder %s19, 0
    %p150 = por %p148, %p149
    %p151 = scmp.ne.s32.totalorder %s137, %s138
    %p152 = scmp.eq.s32.totalorder %s20, 1
    %p153 = por %p151, %p152
    %p155 = scmp.ne.s32.totalorder %s138, %s154
    %p156 = scmp.eq.s32.totalorder %s20, 0
    %p157 = por %p155, %p156
    %s158 = ssub.s32 %s14, %s21
    %p159 = scmp.eq.s32.totalorder %s158, 0
    %s161 = sadd.s32 %s160, 1
    %s162 = scalar_select %p159, %s160, %s161
    %p165 = pneg %p159
    %p166 = scmp.eq.s32.totalorder %s14, 1
    %p167 = por %p165, %p166
    %p168 = scmp.ne.s32.totalorder %s160, %s163
    %p169 = scmp.eq.s32.totalorder %s14, 0
    %p170 = por %p168, %p169
    %p171 = scmp.ne.s32.totalorder %s160, %s163
    %p172 = scmp.eq.s32.totalorder %s19, 1
    %p173 = por %p171, %p172
    %p174 = scmp.ne.s32.totalorder %s163, %s164
    %p175 = scmp.eq.s32.totalorder %s19, 0
    %p176 = por %p174, %p175
    %p177 = scmp.ne.s32.totalorder %s163, %s164
    %p178 = scmp.eq.s32.totalorder %s20, 1
    %p179 = por %p177, %p178
    %p181 = scmp.ne.s32.totalorder %s164, %s180
    %p182 = scmp.eq.s32.totalorder %s20, 0
    %p183 = por %p181, %p182
    %s184 = ssub.s32 %s14, %s21
    %p185 = scmp.eq.s32.totalorder %s184, 0
    %s187 = sadd.s32 %s186, 1
    %s188 = scalar_select %p185, %s186, %s187
    %p191 = pneg %p185
    %p192 = scmp.eq.s32.totalorder %s14, 1
    %p193 = por %p191, %p192
    %p194 = scmp.ne.s32.totalorder %s186, %s189
    %p195 = scmp.eq.s32.totalorder %s14, 0
    %p196 = por %p194, %p195
    %p197 = scmp.ne.s32.totalorder %s186, %s189
    %p198 = scmp.eq.s32.totalorder %s19, 1
    %p199 = por %p197, %p198
    %p200 = scmp.ne.s32.totalorder %s189, %s190
    %p201 = scmp.eq.s32.totalorder %s19, 0
    %p202 = por %p200, %p201
    %p203 = scmp.ne.s32.totalorder %s189, %s190
    %p204 = scmp.eq.s32.totalorder %s20, 1
    %p205 = por %p203, %p204
    %p207 = scmp.ne.s32.totalorder %s190, %s206
    %p208 = scmp.eq.s32.totalorder %s20, 0
    %p209 = por %p207, %p208
    %p210 = scmp.le.s32.totalorder 1, %s14
    %p211 = scmp.lt.s32.totalorder %s14, 3
    %p212 = pnand %p210, %p211
    %p213 = pneg %p212
    // Predicated region
    $region9: #{esmc_forward.16} parent=5 // pred_check
      _
    $region10: #{esmc_forward.16} parent=5 // pred_check_branch
      %215 = sbr.rel (%p212) target = $region12
    $region11: #{esmc_forward.16} parent=5 // pred_region
      %s216 = ssub.s32 %s14, 1
      // Predicated region
      $region13: #{esmc_forward.16} parent=11 // pred_check
        %p217 = pneg %p61
      $region14: #{esmc_forward.16} parent=11 // pred_check_branch
        %219 = sbr.rel (%p217) target = $region16
      $region15: #{esmc_forward.16} parent=11 // pred_region
        _
      $region16: #{esmc_forward.16} parent=11 // pred_fallthru
        _
      // Predicated region
      $region17: #{esmc_forward.16} parent=11 // pred_check
        %p220 = pneg %p82
      $region18: #{esmc_forward.16} parent=11 // pred_check_branch
        %222 = sbr.rel (%p220) target = $region20
      $region19: #{esmc_forward.16} parent=11 // pred_region
        _
      $region20: #{esmc_forward.16} parent=11 // pred_fallthru
        _
      // Predicated region
      $region21: #{esmc_forward.16} parent=11 // pred_check
        %p223 = pneg %p103
      $region22: #{esmc_forward.16} parent=11 // pred_check_branch
        %225 = sbr.rel (%p223) target = $region24
      $region23: #{esmc_forward.16} parent=11 // pred_region
        _
      $region24: #{esmc_forward.16} parent=11 // pred_fallthru
        _
      // Predicated region
      $region25: #{esmc_forward.16} parent=11 // pred_check
        %p226 = pneg %p124
      $region26: #{esmc_forward.16} parent=11 // pred_check_branch
        %228 = sbr.rel (%p226) target = $region28
      $region27: #{esmc_forward.16} parent=11 // pred_region
        _
      $region28: #{esmc_forward.16} parent=11 // pred_fallthru
        _
    $region12: #{esmc_forward.16} parent=5 // pred_fallthru
      _
    %p229 = scmp.lt.s32.totalorder %s14, 2
    // Predicated region
    $region29: #{esmc_forward.16} parent=5 // pred_check
      %p230 = pneg %p229
    $region30: #{esmc_forward.16} parent=5 // pred_check_branch
      %232 = sbr.rel (%p230) target = $region32
    $region31: #{esmc_forward.16} parent=5 // pred_region
      // Predicated region
      $region33: #{esmc_forward.16} parent=31 // pred_check
        %p233 = pneg %p34
      $region34: #{esmc_forward.16} parent=31 // pred_check_branch
        %235 = sbr.rel (%p233) target = $region36
      $region35: #{esmc_forward.16} parent=31 // pred_region
        %p236 = scmp.lt.s32.totalorder %s14, 1
        %s237 = scalar_select %p236, %s14, 1
        %s238 = smul.addr %s237, 3
        %s239 = smul.addr %s238, 4
        %s240 = scalar_lea.vmem %s0, %s239
      $region36: #{esmc_forward.16} parent=31 // pred_fallthru
        _
    $region32: #{esmc_forward.16} parent=5 // pred_fallthru
      _
    %p241 = scmp.le.s32.totalorder 1, %s14
    %p242 = scmp.lt.s32.totalorder %s14, 3
    %p243 = pnand %p241, %p242
    %p244 = pneg %p243
    // Predicated region
    $region37: #{esmc_forward.16} parent=5 // pred_check
      _
    $region38: #{esmc_forward.16} parent=5 // pred_check_branch
      %246 = sbr.rel (%p243) target = $region40
    $region39: #{esmc_forward.16} parent=5 // pred_region
      %s247 = ssub.s32 %s14, 1
      %p248 = scmp.lt.s32.totalorder %s19, 1
      %s249 = scalar_select %p248, %s19, 1
      %s250 = smul.addr %s249, 3
      %s251 = smul.addr %s250, 4
      %s252 = scalar_lea.vmem %s0, %s251
      %p253 = pneg %p40
      %p254 = pneg %p37
      %p255 = pneg %p61
      %p256 = pneg %p58
      %p257 = pneg %p82
      %p258 = pneg %p79
      %p259 = pneg %p103
      %p260 = pneg %p100
      %p261 = pneg %p124
      %p262 = pneg %p121
      %p263 = pneg %p150
      %p264 = pneg %p147
      %p265 = scmp.lt.s32.totalorder %s19, 1
      %s266 = scalar_select %p265, %s19, 1
      %s267 = smul.addr %s266, 4
      %s268 = scalar_lea.vmem %s5, %s267
      %p269 = pneg %p176
      %p270 = pneg %p173
      %p271 = scmp.lt.s32.totalorder %s19, 1
      %s272 = scalar_select %p271, %s19, 1
      %s273 = smul.addr %s272, 4
      %s274 = scalar_lea.vmem %s6, %s273
      %p275 = pneg %p202
      %p276 = pneg %p199
      %p277 = scmp.lt.s32.totalorder %s19, 1
      %s278 = scalar_select %p277, %s19, 1
      %s279 = smul.addr %s278, 4
      %s280 = scalar_lea.vmem %s7, %s279
      %p281 = scmp.lt.s32.totalorder %s19, 1
      %s282 = scalar_select %p281, %s19, 1
      %s283 = smul.addr %s282, 3
      %s284 = smul.addr %s283, 4
      %s285 = scalar_lea.vmem %s0, %s284
      %p286 = scmp.lt.s32.totalorder %s19, 1
      %s287 = scalar_select %p286, %s19, 1
      %s288 = smul.addr %s287, 4
      %s289 = scalar_lea.vmem %s5, %s288
      %p290 = scmp.lt.s32.totalorder %s19, 1
      %s291 = scalar_select %p290, %s19, 1
      %s292 = smul.addr %s291, 4
      %s293 = scalar_lea.vmem %s6, %s292
      %p294 = scmp.lt.s32.totalorder %s19, 1
      %s295 = scalar_select %p294, %s19, 1
      %s296 = smul.addr %s295, 4
      %s297 = scalar_lea.vmem %s7, %s296
      %v298 = vld [vmem:[%s285] sm:$0xff]
      %v299 = vld [vmem:[%s285 + $0x8] sm:$0xf]
      %v300 = vunpack.c.l.bf16 %v298
      %v301 = vunpack.c.h.bf16 %v298
      %v302 = vunpack.c.l.bf16 %v299
      %v303 = vld [vmem:[%s3] sm:$0xff]
      %v304 = vld [vmem:[%s4] sm:$0xff]
      %v305 = vlaneseq
      %v306 = vand.u32 %v305, 127
      %vm307 = vcmp.lt.s32.totalorder %v306, 0
      %v308 = vsub.s32 0, %v306
      %v309 = vsel %vm307, %v308, %v306
      %v310 = vshrl.u32 %v309, 6
      %v311 = vand.u32 %v309, 63
      %v312 = vsub.s32 0, %v311
      %v313 = vsel %vm307, %v312, %v311
      %vm314 = vcmp.ne.s32.totalorder %v313, 0
      %vm315 = vcmp.lt.s32.totalorder %v313, 0
      %vm316 = vmand %vm315, %vm314
      %v317 = vadd.s32 %v313, 64
      %v318 = vsel %vm316, %v317, %v313
      %vm319 = vcmp.lt.s32.totalorder %v318, 32
      %v320 = vld [vmem:[%s1] sm:$0x1]
      %321 = vadd.xlane.f32.xlu0 %v300
      %v322 = vpop.xlane.xlu0 %321
      %v323 = vrcp.pop 128.0
      %v324 = vmul.f32 %v322, %v323
      %v325 = vsub.f32 %v300, %v324
      %v326 = vmul.f32 %v325, %v325
      %327 = vadd.xlane.f32.xlu0 %v326
      %v328 = vpop.xlane.xlu0 %327
      %v329 = vmul.f32 %v328, %v323
      %v330 = vadd.f32 %v329, 1e-05
      %v331 = vrsqrt.pop %v330
      %v332 = vmul.f32 %v325, %v331
      %v334 = vlaneseq
      %v335 = vshrl.u32 %v334, 7
      %v336 = vsub.s32 0, %v335
      %v337 = vrot.slane %v320, %v336
      %v339 = vmul.f32 %v332, %v337
      %341 = vrot.lane.b32.xlu0 %v339, 96
      %v342 = vpop.permute.xlu0 %341
      %344 = vrot.lane.b32.xlu0 %v339, 32
      %v345 = vpop.permute.xlu0 %344
      %v347 = vsel %vm319, 1, 0
      %vm348 = vcmp.eq.s32.totalorder %v347, 1
      %v349 = vsel %vm348, %v342, %v345
      %v350 = vmul.f32 %v339, %v303
      %v351 = vmul.f32 %v349, %v304
      %v352 = vadd.f32 %v350, %v351
      %v353 = vpack.c.bf16 %v352, %v352
      %354 = vst [vmem:[%s289] sm:$0xf] %v353
      %v355 = vld [vmem:[%s2] sm:$0x1]
      %356 = vadd.xlane.f32.xlu0 %v301
      %v357 = vpop.xlane.xlu0 %356
      %v358 = vmul.f32 %v357, %v323
      %v359 = vsub.f32 %v301, %v358
      %v360 = vmul.f32 %v359, %v359
      %361 = vadd.xlane.f32.xlu0 %v360
      %v362 = vpop.xlane.xlu0 %361
      %v363 = vmul.f32 %v362, %v323
      %v364 = vadd.f32 %v363, 1e-05
      %v365 = vrsqrt.pop %v364
      %v366 = vmul.f32 %v359, %v365
      %v368 = vlaneseq
      %v369 = vshrl.u32 %v368, 7
      %v370 = vsub.s32 0, %v369
      %v371 = vrot.slane %v355, %v370
      %v373 = vmul.f32 %v366, %v371
      %375 = vrot.lane.b32.xlu0 %v373, 96
      %v376 = vpop.permute.xlu0 %375
      %378 = vrot.lane.b32.xlu0 %v373, 32
      %v379 = vpop.permute.xlu0 %378
      %v381 = vsel %vm348, %v376, %v379
      %v382 = vmul.f32 %v373, %v303
      %v383 = vmul.f32 %v381, %v304
      %v384 = vadd.f32 %v382, %v383
      %v385 = vpack.c.bf16 %v384, %v384
      %386 = vst [vmem:[%s293] sm:$0xf] %v385
      %v387 = vpack.c.bf16 %v302, %v302
      %388 = vst [vmem:[%s297] sm:$0xf] %v387
      %p389 = scmp.lt.s32.totalorder %s19, 1
      %s390 = scalar_select %p389, %s19, 1
      %s391 = smul.addr %s390, 4
      %s392 = scalar_lea.vmem %s5, %s391
      %p393 = scmp.lt.s32.totalorder %s19, 1
      %s394 = scalar_select %p393, %s19, 1
      %s395 = smul.addr %s394, 4
      %s396 = scalar_lea.vmem %s6, %s395
      %p397 = scmp.lt.s32.totalorder %s19, 1
      %s398 = scalar_select %p397, %s19, 1
      %s399 = smul.addr %s398, 4
      %s400 = scalar_lea.vmem %s7, %s399
      // Predicated region
      $region41: #{esmc_forward.16} parent=39 // pred_check
        %p401 = pneg %p147
      $region42: #{esmc_forward.16} parent=39 // pred_check_branch
        %403 = sbr.rel (%p401) target = $region44
      $region43: #{esmc_forward.16} parent=39 // pred_region
        _
      $region44: #{esmc_forward.16} parent=39 // pred_fallthru
        _
      // Predicated region
      $region45: #{esmc_forward.16} parent=39 // pred_check
        %p404 = pneg %p173
      $region46: #{esmc_forward.16} parent=39 // pred_check_branch
        %406 = sbr.rel (%p404) target = $region48
      $region47: #{esmc_forward.16} parent=39 // pred_region
        _
      $region48: #{esmc_forward.16} parent=39 // pred_fallthru
        _
      // Predicated region
      $region49: #{esmc_forward.16} parent=39 // pred_check
        %p407 = pneg %p199
      $region50: #{esmc_forward.16} parent=39 // pred_check_branch
        %409 = sbr.rel (%p407) target = $region52
      $region51: #{esmc_forward.16} parent=39 // pred_region
        _
      $region52: #{esmc_forward.16} parent=39 // pred_fallthru
        _
    $region40: #{esmc_forward.16} parent=5 // pred_fallthru
      _
    %p410 = scmp.le.s32.totalorder 2, %s14
    // Predicated region
    $region53: #{esmc_forward.16} parent=5 // pred_check
      %p411 = pneg %p410
    $region54: #{esmc_forward.16} parent=5 // pred_check_branch
      %413 = sbr.rel (%p411) target = $region56
    $region55: #{esmc_forward.16} parent=5 // pred_region
      %s414 = ssub.s32 %s14, 2
      // Predicated region
      $region57: #{esmc_forward.16} parent=55 // pred_check
        %p415 = pneg %p153
      $region58: #{esmc_forward.16} parent=55 // pred_check_branch
        %417 = sbr.rel (%p415) target = $region60
      $region59: #{esmc_forward.16} parent=55 // pred_region
        %p418 = scmp.lt.s32.totalorder %s20, 1
        %s419 = scalar_select %p418, %s20, 1
        %s420 = smul.addr %s419, 4
        %s421 = scalar_lea.vmem %s5, %s420
      $region60: #{esmc_forward.16} parent=55 // pred_fallthru
        _
      // Predicated region
      $region61: #{esmc_forward.16} parent=55 // pred_check
        %p422 = pneg %p179
      $region62: #{esmc_forward.16} parent=55 // pred_check_branch
        %424 = sbr.rel (%p422) target = $region64
      $region63: #{esmc_forward.16} parent=55 // pred_region
        %p425 = scmp.lt.s32.totalorder %s20, 1
        %s426 = scalar_select %p425, %s20, 1
        %s427 = smul.addr %s426, 4
        %s428 = scalar_lea.vmem %s6, %s427
      $region64: #{esmc_forward.16} parent=55 // pred_fallthru
        _
      // Predicated region
      $region65: #{esmc_forward.16} parent=55 // pred_check
        %p429 = pneg %p205
      $region66: #{esmc_forward.16} parent=55 // pred_check_branch
        %431 = sbr.rel (%p429) target = $region68
      $region67: #{esmc_forward.16} parent=55 // pred_region
        %p432 = scmp.lt.s32.totalorder %s20, 1
        %s433 = scalar_select %p432, %s20, 1
        %s434 = smul.addr %s433, 4
        %s435 = scalar_lea.vmem %s7, %s434
      $region68: #{esmc_forward.16} parent=55 // pred_fallthru
        _
    $region56: #{esmc_forward.16} parent=5 // pred_fallthru
      _
  $region6: #{esmc_forward.16} parent=0 // loop_footer
    %s18 = sadd.s32 1, %s14
  $region7: #{esmc_forward.16} parent=0 // loop_footer_branch
    %13 = sbr.rel target = $region3
  $region8: #{esmc_forward.16} parent=0 // loop_exit
    _

// kernel: esmc_forward.17
$region0: #{esmc_forward.17}
  #allocation0 [shape = 'u32[]', space=smem, size = 0x4, offset = 0x4, fixed_abs, tag = 'smem constant byte address 0x4 - core index']
  #allocation1 [shape = 'u32[144,128]{1,0:T(1,128)}', space=vmem, size = 0x12000, scoped, tag = 'internal scratch']
  #allocation2 [shape = 'f32[8,1]{1,0:T(8,128)}', space=vmem, size = 0x1000, scoped, tag = 'scratch operand']
  #allocation3 [shape = 'f32[8,1]{1,0:T(8,128)}', space=vmem, size = 0x1000, scoped, tag = 'scratch operand']
  #allocation4 [shape = 'f32[8,64]{1,0:T(8,128)}', space=vmem, size = 0x1000, scoped, tag = 'scratch operand']
  %s0 = inlined_call_operand.vmem [shape: bf16[2,2,8,64], index: 0, kind: input, shape index: {}]
  %s1 = inlined_call_operand.vmem [shape: bf16[2,2,8,64], index: 1, kind: input, shape index: {}]
  %s2 = inlined_call_operand.vmem [shape: bf16[2,2,8,64], index: 2, kind: input, shape index: {}]
  %s3 = inlined_call_operand.vmem [shape: s32[2,8,1], index: 3, kind: input, shape index: {}]
  %s4 = inlined_call_operand.vmem [shape: s32[2,1,8], index: 4, kind: input, shape index: {}]
  %s5 = inlined_call_operand.vmem [shape: bf16[2,2,8,64], index: 5, kind: output, shape index: {}]
  %s6 = sld [smem:[#allocation0]]
  $region61: #{esmc_forward.17} parent=0
    _
  %s8 = ssub.s32 1, %s6
  %s9 = scalar_select 0, %s8, %s6
  loop: start=0, step=1, limit=6
  $region2: #{esmc_forward.17} parent=0 // loop_pre_header
    _
  $region3: #{esmc_forward.17} parent=0 // loop_header
    %s11 = sphi 0, %s15
    %p12 = scmp.ge.s32.totalorder %s11, 6
    %s18 = sphi 0, %s44
    %s19 = sphi 0, %s40
    %s20 = sphi 0, %s36
    %s21 = sphi 0, %s32
    %s22 = sphi 0, %s18
    %s23 = sphi 0, %s19
    %s24 = sphi 0, %s20
    %s25 = sphi 0, %s21
    %s26 = sphi 0, %s22
    %s27 = sphi 0, %s23
    %s28 = sphi 0, %s24
    %s29 = sphi 0, %s25
    %s51 = sphi 0, %s53
    %s54 = sphi 0, %s51
    %s55 = sphi 0, %s54
    %s71 = sphi 0, %s55
    %s81 = sphi 0, %s83
    %s84 = sphi 0, %s81
    %s85 = sphi 0, %s84
    %s101 = sphi 0, %s85
    %s111 = sphi 0, %s113
    %s114 = sphi 0, %s111
    %s115 = sphi 0, %s114
    %s131 = sphi 0, %s115
    %s139 = sphi 0, %s141
    %s142 = sphi 0, %s139
    %s143 = sphi 0, %s142
    %s159 = sphi 0, %s143
    %s167 = sphi 0, %s169
    %s170 = sphi 0, %s167
    %s171 = sphi 0, %s170
    %s187 = sphi 0, %s171
    %s197 = sphi 0, %s199
    %s200 = sphi 0, %s197
    %s201 = sphi 0, %s200
    %s217 = sphi 0, %s201
  $region4: #{esmc_forward.17} parent=0 // loop_header_branch
    %14 = sbr.rel (%p12) target = $region8
  $region5: #{esmc_forward.17} parent=0 // loop_body
    %s16 = ssub.s32 %s11, 1
    %s17 = ssub.s32 %s11, 2
    %s30 = sadd.s32 1, %s21
    %p31 = scmp.ge.s32.totalorder %s30, 1
    %s32 = scalar_select %p31, 0, %s30
    %s33 = sadd.s32 1, %s20
    %s34 = scalar_select %p31, %s33, %s20
    %p35 = scmp.ge.s32.totalorder %s34, 1
    %s36 = scalar_select %p35, 0, %s34
    %s37 = sadd.s32 1, %s19
    %s38 = scalar_select %p35, %s37, %s19
    %p39 = scmp.ge.s32.totalorder %s38, 2
    %s40 = scalar_select %p39, 0, %s38
    %s41 = sadd.s32 1, %s18
    %s42 = scalar_select %p39, %s41, %s18
    %p43 = scmp.ge.s32.totalorder %s42, 2
    %s44 = scalar_select %p43, 0, %s42
    %s45 = ssub.s32 %s18, %s44
    %s46 = ssub.s32 %s19, %s40
    %s47 = sor.u32 %s45, %s46
    %s48 = ssub.s32 %s20, %s36
    %s49 = sor.u32 %s47, %s48
    %p50 = scmp.eq.s32.totalorder %s49, 0
    %s52 = sadd.s32 %s51, 1
    %s53 = scalar_select %p50, %s51, %s52
    %p56 = pneg %p50
    %p57 = scmp.eq.s32.totalorder %s11, 3
    %p58 = por %p56, %p57
    %p59 = scmp.ne.s32.totalorder %s51, %s54
    %p60 = scmp.eq.s32.totalorder %s11, 0
    %p61 = por %p59, %p60
    %p62 = scmp.ne.s32.totalorder %s51, %s54
    %p63 = scmp.eq.s32.totalorder %s16, 3
    %p64 = por %p62, %p63
    %p65 = scmp.ne.s32.totalorder %s54, %s55
    %p66 = scmp.eq.s32.totalorder %s16, 0
    %p67 = por %p65, %p66
    %p68 = scmp.ne.s32.totalorder %s54, %s55
    %p69 = scmp.eq.s32.totalorder %s17, 3
    %p70 = por %p68, %p69
    %p72 = scmp.ne.s32.totalorder %s55, %s71
    %p73 = scmp.eq.s32.totalorder %s17, 0
    %p74 = por %p72, %p73
    %s75 = ssub.s32 %s18, %s44
    %s76 = ssub.s32 %s19, %s40
    %s77 = sor.u32 %s75, %s76
    %s78 = ssub.s32 %s21, %s32
    %s79 = sor.u32 %s77, %s78
    %p80 = scmp.eq.s32.totalorder %s79, 0
    %s82 = sadd.s32 %s81, 1
    %s83 = scalar_select %p80, %s81, %s82
    %p86 = pneg %p80
    %p87 = scmp.eq.s32.totalorder %s11, 3
    %p88 = por %p86, %p87
    %p89 = scmp.ne.s32.totalorder %s81, %s84
    %p90 = scmp.eq.s32.totalorder %s11, 0
    %p91 = por %p89, %p90
    %p92 = scmp.ne.s32.totalorder %s81, %s84
    %p93 = scmp.eq.s32.totalorder %s16, 3
    %p94 = por %p92, %p93
    %p95 = scmp.ne.s32.totalorder %s84, %s85
    %p96 = scmp.eq.s32.totalorder %s16, 0
    %p97 = por %p95, %p96
    %p98 = scmp.ne.s32.totalorder %s84, %s85
    %p99 = scmp.eq.s32.totalorder %s17, 3
    %p100 = por %p98, %p99
    %p102 = scmp.ne.s32.totalorder %s85, %s101
    %p103 = scmp.eq.s32.totalorder %s17, 0
    %p104 = por %p102, %p103
    %s105 = ssub.s32 %s18, %s44
    %s106 = ssub.s32 %s19, %s40
    %s107 = sor.u32 %s105, %s106
    %s108 = ssub.s32 %s21, %s32
    %s109 = sor.u32 %s107, %s108
    %p110 = scmp.eq.s32.totalorder %s109, 0
    %s112 = sadd.s32 %s111, 1
    %s113 = scalar_select %p110, %s111, %s112
    %p116 = pneg %p110
    %p117 = scmp.eq.s32.totalorder %s11, 3
    %p118 = por %p116, %p117
    %p119 = scmp.ne.s32.totalorder %s111, %s114
    %p120 = scmp.eq.s32.totalorder %s11, 0
    %p121 = por %p119, %p120
    %p122 = scmp.ne.s32.totalorder %s111, %s114
    %p123 = scmp.eq.s32.totalorder %s16, 3
    %p124 = por %p122, %p123
    %p125 = scmp.ne.s32.totalorder %s114, %s115
    %p126 = scmp.eq.s32.totalorder %s16, 0
    %p127 = por %p125, %p126
    %p128 = scmp.ne.s32.totalorder %s114, %s115
    %p129 = scmp.eq.s32.totalorder %s17, 3
    %p130 = por %p128, %p129
    %p132 = scmp.ne.s32.totalorder %s115, %s131
    %p133 = scmp.eq.s32.totalorder %s17, 0
    %p134 = por %p132, %p133
    %s135 = ssub.s32 %s18, %s44
    %s136 = ssub.s32 %s20, %s36
    %s137 = sor.u32 %s135, %s136
    %p138 = scmp.eq.s32.totalorder %s137, 0
    %s140 = sadd.s32 %s139, 1
    %s141 = scalar_select %p138, %s139, %s140
    %p144 = pneg %p138
    %p145 = scmp.eq.s32.totalorder %s11, 3
    %p146 = por %p144, %p145
    %p147 = scmp.ne.s32.totalorder %s139, %s142
    %p148 = scmp.eq.s32.totalorder %s11, 0
    %p149 = por %p147, %p148
    %p150 = scmp.ne.s32.totalorder %s139, %s142
    %p151 = scmp.eq.s32.totalorder %s16, 3
    %p152 = por %p150, %p151
    %p153 = scmp.ne.s32.totalorder %s142, %s143
    %p154 = scmp.eq.s32.totalorder %s16, 0
    %p155 = por %p153, %p154
    %p156 = scmp.ne.s32.totalorder %s142, %s143
    %p157 = scmp.eq.s32.totalorder %s17, 3
    %p158 = por %p156, %p157
    %p160 = scmp.ne.s32.totalorder %s143, %s159
    %p161 = scmp.eq.s32.totalorder %s17, 0
    %p162 = por %p160, %p161
    %s163 = ssub.s32 %s18, %s44
    %s164 = ssub.s32 %s21, %s32
    %s165 = sor.u32 %s163, %s164
    %p166 = scmp.eq.s32.totalorder %s165, 0
    %s168 = sadd.s32 %s167, 1
    %s169 = scalar_select %p166, %s167, %s168
    %p172 = pneg %p166
    %p173 = scmp.eq.s32.totalorder %s11, 3
    %p174 = por %p172, %p173
    %p175 = scmp.ne.s32.totalorder %s167, %s170
    %p176 = scmp.eq.s32.totalorder %s11, 0
    %p177 = por %p175, %p176
    %p178 = scmp.ne.s32.totalorder %s167, %s170
    %p179 = scmp.eq.s32.totalorder %s16, 3
    %p180 = por %p178, %p179
    %p181 = scmp.ne.s32.totalorder %s170, %s171
    %p182 = scmp.eq.s32.totalorder %s16, 0
    %p183 = por %p181, %p182
    %p184 = scmp.ne.s32.totalorder %s170, %s171
    %p185 = scmp.eq.s32.totalorder %s17, 3
    %p186 = por %p184, %p185
    %p188 = scmp.ne.s32.totalorder %s171, %s187
    %p189 = scmp.eq.s32.totalorder %s17, 0
    %p190 = por %p188, %p189
    %s191 = ssub.s32 %s18, %s44
    %s192 = ssub.s32 %s19, %s40
    %s193 = sor.u32 %s191, %s192
    %s194 = ssub.s32 %s20, %s36
    %s195 = sor.u32 %s193, %s194
    %p196 = scmp.eq.s32.totalorder %s195, 0
    %s198 = sadd.s32 %s197, 1
    %s199 = scalar_select %p196, %s197, %s198
    %p202 = pneg %p196
    %p203 = scmp.eq.s32.totalorder %s11, 3
    %p204 = por %p202, %p203
    %p205 = scmp.ne.s32.totalorder %s197, %s200
    %p206 = scmp.eq.s32.totalorder %s11, 0
    %p207 = por %p205, %p206
    %p208 = scmp.ne.s32.totalorder %s197, %s200
    %p209 = scmp.eq.s32.totalorder %s16, 3
    %p210 = por %p208, %p209
    %p211 = scmp.ne.s32.totalorder %s200, %s201
    %p212 = scmp.eq.s32.totalorder %s16, 0
    %p213 = por %p211, %p212
    %p214 = scmp.ne.s32.totalorder %s200, %s201
    %p215 = scmp.eq.s32.totalorder %s17, 3
    %p216 = por %p214, %p215
    %p218 = scmp.ne.s32.totalorder %s201, %s217
    %p219 = scmp.eq.s32.totalorder %s17, 0
    %p220 = por %p218, %p219
    %p221 = scmp.le.s32.totalorder 1, %s11
    %p222 = scmp.lt.s32.totalorder %s11, 5
    %p223 = pnand %p221, %p222
    %p224 = pneg %p223
    // Predicated region
    $region9: #{esmc_forward.17} parent=5 // pred_check
      _
    $region10: #{esmc_forward.17} parent=5 // pred_check_branch
      %226 = sbr.rel (%p223) target = $region12
    $region11: #{esmc_forward.17} parent=5 // pred_region
      %s227 = ssub.s32 %s11, 1
    $region12: #{esmc_forward.17} parent=5 // pred_fallthru
      _
    %p228 = scmp.lt.s32.totalorder %s11, 4
    // Predicated region
    $region13: #{esmc_forward.17} parent=5 // pred_check
      %p229 = pneg %p228
    $region14: #{esmc_forward.17} parent=5 // pred_check_branch
      %231 = sbr.rel (%p229) target = $region16
    $region15: #{esmc_forward.17} parent=5 // pred_region
      // Predicated region
      $region17: #{esmc_forward.17} parent=15 // pred_check
        %p232 = pneg %p61
      $region18: #{esmc_forward.17} parent=15 // pred_check_branch
        %234 = sbr.rel (%p232) target = $region20
      $region19: #{esmc_forward.17} parent=15 // pred_region
        %p235 = scmp.lt.s32.totalorder %s18, 1
        %s236 = scalar_select %p235, %s18, 1
        %p237 = scmp.lt.s32.totalorder %s19, 1
        %s238 = scalar_select %p237, %s19, 1
        %p239 = scmp.lt.s32.totalorder %s20, 0
        %s240 = scalar_select %p239, %s20, 0
        %s241 = sadd.s32 %s240, %s238
        %s242 = smul.addr %s236, 2
        %s243 = sadd.s32 %s241, %s242
        %s244 = smul.addr %s243, 4
        %s245 = scalar_lea.vmem %s0, %s244
      $region20: #{esmc_forward.17} parent=15 // pred_fallthru
        _
      // Predicated region
      $region21: #{esmc_forward.17} parent=15 // pred_check
        %p246 = pneg %p91
      $region22: #{esmc_forward.17} parent=15 // pred_check_branch
        %248 = sbr.rel (%p246) target = $region24
      $region23: #{esmc_forward.17} parent=15 // pred_region
        %p249 = scmp.lt.s32.totalorder %s18, 1
        %s250 = scalar_select %p249, %s18, 1
        %p251 = scmp.lt.s32.totalorder %s19, 1
        %s252 = scalar_select %p251, %s19, 1
        %p253 = scmp.lt.s32.totalorder %s21, 0
        %s254 = scalar_select %p253, %s21, 0
        %s255 = sadd.s32 %s254, %s252
        %s256 = smul.addr %s250, 2
        %s257 = sadd.s32 %s255, %s256
        %s258 = smul.addr %s257, 4
        %s259 = scalar_lea.vmem %s1, %s258
      $region24: #{esmc_forward.17} parent=15 // pred_fallthru
        _
      // Predicated region
      $region25: #{esmc_forward.17} parent=15 // pred_check
        %p260 = pneg %p121
      $region26: #{esmc_forward.17} parent=15 // pred_check_branch
        %262 = sbr.rel (%p260) target = $region28
      $region27: #{esmc_forward.17} parent=15 // pred_region
        %p263 = scmp.lt.s32.totalorder %s18, 1
        %s264 = scalar_select %p263, %s18, 1
        %p265 = scmp.lt.s32.totalorder %s19, 1
        %s266 = scalar_select %p265, %s19, 1
        %p267 = scmp.lt.s32.totalorder %s21, 0
        %s268 = scalar_select %p267, %s21, 0
        %s269 = sadd.s32 %s268, %s266
        %s270 = smul.addr %s264, 2
        %s271 = sadd.s32 %s269, %s270
        %s272 = smul.addr %s271, 4
        %s273 = scalar_lea.vmem %s2, %s272
      $region28: #{esmc_forward.17} parent=15 // pred_fallthru
        _
      // Predicated region
      $region29: #{esmc_forward.17} parent=15 // pred_check
        %p274 = pneg %p149
      $region30: #{esmc_forward.17} parent=15 // pred_check_branch
        %276 = sbr.rel (%p274) target = $region32
      $region31: #{esmc_forward.17} parent=15 // pred_region
        %p277 = scmp.lt.s32.totalorder %s18, 1
        %s278 = scalar_select %p277, %s18, 1
        %p279 = scmp.lt.s32.totalorder %s20, 0
        %s280 = scalar_select %p279, %s20, 0
        %s281 = sadd.s32 %s280, %s278
        %s282 = smul.addr %s281, 8
        %s283 = scalar_lea.vmem %s3, %s282
      $region32: #{esmc_forward.17} parent=15 // pred_fallthru
        _
      // Predicated region
      $region33: #{esmc_forward.17} parent=15 // pred_check
        %p284 = pneg %p177
      $region34: #{esmc_forward.17} parent=15 // pred_check_branch
        %286 = sbr.rel (%p284) target = $region36
      $region35: #{esmc_forward.17} parent=15 // pred_region
        %p287 = scmp.lt.s32.totalorder %s18, 1
        %s288 = scalar_select %p287, %s18, 1
        %p289 = scmp.lt.s32.totalorder %s21, 0
        %s290 = scalar_select %p289, %s21, 0
        %s291 = sadd.s32 %s290, %s288
        %s292 = scalar_lea.vmem %s4, %s291
      $region36: #{esmc_forward.17} parent=15 // pred_fallthru
        _
    $region16: #{esmc_forward.17} parent=5 // pred_fallthru
      _
    %p293 = scmp.le.s32.totalorder 1, %s11
    %p294 = scmp.lt.s32.totalorder %s11, 5
    %p295 = pnand %p293, %p294
    %p296 = pneg %p295
    // Predicated region
    $region37: #{esmc_forward.17} parent=5 // pred_check
      _
    $region38: #{esmc_forward.17} parent=5 // pred_check_branch
      %298 = sbr.rel (%p295) target = $region40
    $region39: #{esmc_forward.17} parent=5 // pred_region
      %s299 = ssub.s32 %s11, 1
      %p300 = scmp.lt.s32.totalorder %s22, 1
      %s301 = scalar_select %p300, %s22, 1
      %p302 = scmp.lt.s32.totalorder %s23, 1
      %s303 = scalar_select %p302, %s23, 1
      %p304 = scmp.lt.s32.totalorder %s24, 0
      %s305 = scalar_select %p304, %s24, 0
      %s306 = sadd.s32 %s305, %s303
      %s307 = smul.addr %s301, 2
      %s308 = sadd.s32 %s306, %s307
      %s309 = smul.addr %s308, 4
      %s310 = scalar_lea.vmem %s0, %s309
      %p311 = pneg %p67
      %p312 = pneg %p64
      %p313 = scmp.lt.s32.totalorder %s22, 1
      %s314 = scalar_select %p313, %s22, 1
      %p315 = scmp.lt.s32.totalorder %s23, 1
      %s316 = scalar_select %p315, %s23, 1
      %p317 = scmp.lt.s32.totalorder %s25, 0
      %s318 = scalar_select %p317, %s25, 0
      %s319 = sadd.s32 %s318, %s316
      %s320 = smul.addr %s314, 2
      %s321 = sadd.s32 %s319, %s320
      %s322 = smul.addr %s321, 4
      %s323 = scalar_lea.vmem %s1, %s322
      %p324 = pneg %p97
      %p325 = pneg %p94
      %p326 = scmp.lt.s32.totalorder %s22, 1
      %s327 = scalar_select %p326, %s22, 1
      %p328 = scmp.lt.s32.totalorder %s23, 1
      %s329 = scalar_select %p328, %s23, 1
      %p330 = scmp.lt.s32.totalorder %s25, 0
      %s331 = scalar_select %p330, %s25, 0
      %s332 = sadd.s32 %s331, %s329
      %s333 = smul.addr %s327, 2
      %s334 = sadd.s32 %s332, %s333
      %s335 = smul.addr %s334, 4
      %s336 = scalar_lea.vmem %s2, %s335
      %p337 = pneg %p127
      %p338 = pneg %p124
      %p339 = scmp.lt.s32.totalorder %s22, 1
      %s340 = scalar_select %p339, %s22, 1
      %p341 = scmp.lt.s32.totalorder %s24, 0
      %s342 = scalar_select %p341, %s24, 0
      %s343 = sadd.s32 %s342, %s340
      %s344 = smul.addr %s343, 8
      %s345 = scalar_lea.vmem %s3, %s344
      %p346 = pneg %p155
      %p347 = pneg %p152
      %p348 = scmp.lt.s32.totalorder %s22, 1
      %s349 = scalar_select %p348, %s22, 1
      %p350 = scmp.lt.s32.totalorder %s25, 0
      %s351 = scalar_select %p350, %s25, 0
      %s352 = sadd.s32 %s351, %s349
      %s353 = scalar_lea.vmem %s4, %s352
      %p354 = pneg %p183
      %p355 = pneg %p180
      %p356 = pneg %p213
      %p357 = pneg %p210
      %p358 = scmp.lt.s32.totalorder %s22, 1
      %s359 = scalar_select %p358, %s22, 1
      %p360 = scmp.lt.s32.totalorder %s23, 1
      %s361 = scalar_select %p360, %s23, 1
      %p362 = scmp.lt.s32.totalorder %s24, 0
      %s363 = scalar_select %p362, %s24, 0
      %s364 = sadd.s32 %s363, %s361
      %s365 = smul.addr %s359, 2
      %s366 = sadd.s32 %s364, %s365
      %s367 = smul.addr %s366, 4
      %s368 = scalar_lea.vmem %s5, %s367
      %p369 = scmp.lt.s32.totalorder %s22, 1
      %s370 = scalar_select %p369, %s22, 1
      %p371 = scmp.lt.s32.totalorder %s23, 1
      %s372 = scalar_select %p371, %s23, 1
      %p373 = scmp.lt.s32.totalorder %s24, 0
      %s374 = scalar_select %p373, %s24, 0
      %s375 = sadd.s32 %s374, %s372
      %s376 = smul.addr %s370, 2
      %s377 = sadd.s32 %s375, %s376
      %s378 = smul.addr %s377, 4
      %s379 = scalar_lea.vmem %s0, %s378
      %p380 = scmp.lt.s32.totalorder %s22, 1
      %s381 = scalar_select %p380, %s22, 1
      %p382 = scmp.lt.s32.totalorder %s23, 1
      %s383 = scalar_select %p382, %s23, 1
      %p384 = scmp.lt.s32.totalorder %s25, 0
      %s385 = scalar_select %p384, %s25, 0
      %s386 = sadd.s32 %s385, %s383
      %s387 = smul.addr %s381, 2
      %s388 = sadd.s32 %s386, %s387
      %s389 = smul.addr %s388, 4
      %s390 = scalar_lea.vmem %s1, %s389
      %p391 = scmp.lt.s32.totalorder %s22, 1
      %s392 = scalar_select %p391, %s22, 1
      %p393 = scmp.lt.s32.totalorder %s23, 1
      %s394 = scalar_select %p393, %s23, 1
      %p395 = scmp.lt.s32.totalorder %s25, 0
      %s396 = scalar_select %p395, %s25, 0
      %s397 = sadd.s32 %s396, %s394
      %s398 = smul.addr %s392, 2
      %s399 = sadd.s32 %s397, %s398
      %s400 = smul.addr %s399, 4
      %s401 = scalar_lea.vmem %s2, %s400
      %p402 = scmp.lt.s32.totalorder %s22, 1
      %s403 = scalar_select %p402, %s22, 1
      %p404 = scmp.lt.s32.totalorder %s24, 0
      %s405 = scalar_select %p404, %s24, 0
      %s406 = sadd.s32 %s405, %s403
      %s407 = smul.addr %s406, 8
      %s408 = scalar_lea.vmem %s3, %s407
      %p409 = scmp.lt.s32.totalorder %s22, 1
      %s410 = scalar_select %p409, %s22, 1
      %p411 = scmp.lt.s32.totalorder %s25, 0
      %s412 = scalar_select %p411, %s25, 0
      %s413 = sadd.s32 %s412, %s410
      %s414 = scalar_lea.vmem %s4, %s413
      %p415 = scmp.lt.s32.totalorder %s22, 1
      %s416 = scalar_select %p415, %s22, 1
      %p417 = scmp.lt.s32.totalorder %s23, 1
      %s418 = scalar_select %p417, %s23, 1
      %p419 = scmp.lt.s32.totalorder %s24, 0
      %s420 = scalar_select %p419, %s24, 0
      %s421 = sadd.s32 %s420, %s418
      %s422 = smul.addr %s416, 2
      %s423 = sadd.s32 %s421, %s422
      %s424 = smul.addr %s423, 4
      %s425 = scalar_lea.vmem %s5, %s424
      %p427 = scmp.eq.s32.totalorder %s25, 0
      // Predicated region
      $region41: #{esmc_forward.17} parent=39 // pred_check
        %p428 = pneg %p427
      $region42: #{esmc_forward.17} parent=39 // pred_check_branch
        %430 = sbr.rel (%p428) target = $region44
      $region43: #{esmc_forward.17} parent=39 // pred_region
        %vm431 = vcmask 7168
        %432 = vst.msk [vmem:[#allocation2] sm:$0xff] %vm431, -1e+30
        %433 = vst.msk [vmem:[#allocation3] sm:$0xff] %vm431, 0.0
        %vm434 = vcmask 523264
        %435 = vst.msk [vmem:[#allocation4] sm:$0xff] %vm434, 0.0
      $region44: #{esmc_forward.17} parent=39 // pred_fallthru
        _
      %v436 = vld [vmem:[%s379] sm:$0xf]
      %v437 = vld [vmem:[%s390] sm:$0xf]
      %vm438 = vcmask 523264
      %v440 = vsel %vm438, %v436, 0
      %v443 = vsel %vm438, %v437, 0
      %445 = vmatprep.subr.bf16.mxu0 0
      %446 = vmatpush1.bf16.xpose.msra.mxu0 0
      %447 = vmatprep.subr.bf16.mxu0 0
      %448 = vmatpush1.bf16.xpose.msra.mxu0 0
      %449 = vmatprep.subr.bf16.mxu0 0
      %450 = vmatpush1.bf16.xpose.msra.mxu0 0
      %451 = vmatprep.subr.bf16.mxu0 0
      %452 = vmatpush1.bf16.xpose.msra.mxu0 0
      %453 = vmatprep.subr.bf16.mxu0 0
      %454 = vmatpush1.bf16.xpose.msra.mxu0 0
      %455 = vmatprep.subr.bf16.mxu0 0
      %456 = vmatpush1.bf16.xpose.msra.mxu0 0
      %457 = vmatprep.subr.bf16.mxu0 0
      %458 = vmatpush1.bf16.xpose.msra.mxu0 0
      %459 = vmatprep.subr.bf16.mxu0 0
      %460 = vmatpush1.bf16.xpose.msra.mxu0 %v443
      %461 = vmatprep.subr.bf16.mxu0 0
      %462 = vmatpush2.bf16.xpose.msra.mxu0 0
      %463 = vmatprep.subr.bf16.mxu0 0
      %464 = vmatpush2.bf16.xpose.msra.mxu0 0
      %465 = vmatprep.subr.bf16.mxu0 0
      %466 = vmatpush2.bf16.xpose.msra.mxu0 0
      %467 = vmatprep.subr.bf16.mxu0 0
      %468 = vmatpush2.bf16.xpose.msra.mxu0 0
      %469 = vmatprep.subr.bf16.mxu0 0
      %470 = vmatpush2.bf16.xpose.msra.mxu0 0
      %471 = vmatprep.subr.bf16.mxu0 0
      %472 = vmatpush2.bf16.xpose.msra.mxu0 0
      %473 = vmatprep.subr.bf16.mxu0 0
      %474 = vmatpush2.bf16.xpose.msra.mxu0 0
      %475 = vmatprep.subr.bf16.mxu0 0
      %476 = vmatpush2.bf16.xpose.msra.mxu0 0
      %477 = vmatprep.mubr.bf16.mxu0 0
      %478 = vmatmul.mubr.bf16.gmra.mxu0 %v440
      %v479 = vpop.f32.mrf.mxu0
      %v480 = vadd.f32 0.0, %v479
      %v481 = vpop.f32.mrf.mxu0
      %v482 = vpop.f32.mrf.mxu0
      %v483 = vpop.f32.mrf.mxu0
      %484 = vdwg.mxu0
      %v485 = vld [vmem:[%s408] sm:$0xff]
      %v486 = vld [vmem:[%s414] sm:$0x1]
      %487 = vset.pattern.permute.xlu0 0
      %488 = vperm.xlu0 %487, %v485
      %v489 = vpop.permute.xlu0 %488
      %v490 = vlaneseq
      %v491 = vshrl.u32 %v490, 7
      %v492 = vsub.s32 0, %v491
      %v493 = vrot.slane %v486, %v492
      %vm494 = vcmp.eq.s32.totalorder %v489, %v493
      %v495 = vsel %vm494, %v480, -1e+30
      %v496 = vld [vmem:[#allocation2] sm:$0xff]
      %vm497 = vcmask 64512
      %v498 = vsel %vm497, %v495, -inf
      %499 = vmax.xlane.f32.xlu0 %v498
      %v500 = vpop.xlane.xlu0 %499
      %v501 = vmax.f32 %v496, %v500
      %v502 = vsub.f32 %v496, %v501
      %v503 = vmul.f32 %v502, 1.442695
      %v504 = vpow.pop %v503
      %506 = vset.pattern.permute.xlu0 0
      %507 = vperm.xlu0 %506, %v501
      %v508 = vpop.permute.xlu0 %507
      %v510 = vsub.f32 %v495, %v508
      %v511 = vmul.f32 %v510, 1.442695
      %v512 = vpow.pop %v511
      %v513 = vsel %vm494, %v512, 0.0
      %v514 = vld [vmem:[#allocation3] sm:$0xff]
      %v515 = vmul.f32 %v504, %v514
      %v516 = vsel %vm497, %v513, 0.0
      %517 = vadd.xlane.f32.xlu0 %v516
      %v518 = vpop.xlane.xlu0 %517
      %v519 = vadd.f32 %v515, %v518
      %vm520 = vcmask 7168
      %521 = vst.msk [vmem:[#allocation3] sm:$0xff] %vm520, %v519
      %v522 = vld [vmem:[#allocation4] sm:$0xff]
      %524 = vset.pattern.permute.xlu0 0
      %525 = vperm.xlu0 %524, %v504
      %v526 = vpop.permute.xlu0 %525
      %v528 = vmul.f32 %v526, %v522
      %v529 = vpack.c.bf16 %v513, %v513
      %v530 = vld [vmem:[%s401] sm:$0xf]
      %v532 = vsel %vm497, %v529, 0
      %vm534 = vcmask 1043456
      %v536 = vsel %vm534, %v530, 0
      %538 = vmatprep.subr.bf16.mxu0 0
      %539 = vmatpush1.bf16.msra.mxu0 0
      %540 = vmatprep.subr.bf16.mxu0 0
      %541 = vmatpush1.bf16.msra.mxu0 0
      %542 = vmatprep.subr.bf16.mxu0 0
      %543 = vmatpush1.bf16.msra.mxu0 0
      %544 = vmatprep.subr.bf16.mxu0 0
      %545 = vmatpush1.bf16.msra.mxu0 0
      %546 = vmatprep.subr.bf16.mxu0 0
      %547 = vmatpush1.bf16.msra.mxu0 0
      %548 = vmatprep.subr.bf16.mxu0 0
      %549 = vmatpush1.bf16.msra.mxu0 0
      %550 = vmatprep.subr.bf16.mxu0 0
      %551 = vmatpush1.bf16.msra.mxu0 0
      %552 = vmatprep.subr.bf16.mxu0 0
      %553 = vmatpush1.bf16.msra.mxu0 %v536
      %554 = vmatprep.subr.bf16.mxu0 0
      %555 = vmatpush2.bf16.msra.mxu0 0
      %556 = vmatprep.subr.bf16.mxu0 0
      %557 = vmatpush2.bf16.msra.mxu0 0
      %558 = vmatprep.subr.bf16.mxu0 0
      %559 = vmatpush2.bf16.msra.mxu0 0
      %560 = vmatprep.subr.bf16.mxu0 0
      %561 = vmatpush2.bf16.msra.mxu0 0
      %562 = vmatprep.subr.bf16.mxu0 0
      %563 = vmatpush2.bf16.msra.mxu0 0
      %564 = vmatprep.subr.bf16.mxu0 0
      %565 = vmatpush2.bf16.msra.mxu0 0
      %566 = vmatprep.subr.bf16.mxu0 0
      %567 = vmatpush2.bf16.msra.mxu0 0
      %568 = vmatprep.subr.bf16.mxu0 0
      %569 = vmatpush2.bf16.msra.mxu0 0
      %570 = vmatprep.mubr.bf16.mxu0 0
      %571 = vmatmul.mubr.bf16.gmra.mxu0 %v532
      %v572 = vpop.f32.mrf.mxu0
      %v573 = vadd.f32 0.0, %v572
      %v574 = vpop.f32.mrf.mxu0
      %v575 = vpop.f32.mrf.mxu0
      %v576 = vpop.f32.mrf.mxu0
      %577 = vdwg.mxu0
      %v578 = vadd.f32 %v528, %v573
      %579 = vst.msk [vmem:[#allocation4] sm:$0xff] %vm438, %v578
      %580 = vst.msk [vmem:[#allocation2] sm:$0xff] %vm520, %v501
      // Predicated region
      $region45: #{esmc_forward.17} parent=39 // pred_check
        %p581 = pneg %p427
      $region46: #{esmc_forward.17} parent=39 // pred_check_branch
        %583 = sbr.rel (%p581) target = $region48
      $region47: #{esmc_forward.17} parent=39 // pred_region
        %v584 = vld [vmem:[#allocation4] sm:$0xff]
        %v585 = vld [vmem:[#allocation3] sm:$0xff]
        %v586 = vrcp.pop %v585
        %588 = vset.pattern.permute.xlu0 0
        %589 = vperm.xlu0 %588, %v586
        %v590 = vpop.permute.xlu0 %589
        %v592 = vmul.f32 %v584, %v590
        %v593 = vpack.c.bf16 %v592, %v592
        %vm594 = vcmask 519168
        %595 = vst.msk [vmem:[%s425] sm:$0xf] %vm594, %v593
      $region48: #{esmc_forward.17} parent=39 // pred_fallthru
        _
      %p596 = scmp.lt.s32.totalorder %s22, 1
      %s597 = scalar_select %p596, %s22, 1
      %p598 = scmp.lt.s32.totalorder %s23, 1
      %s599 = scalar_select %p598, %s23, 1
      %p600 = scmp.lt.s32.totalorder %s24, 0
      %s601 = scalar_select %p600, %s24, 0
      %s602 = sadd.s32 %s601, %s599
      %s603 = smul.addr %s597, 2
      %s604 = sadd.s32 %s602, %s603
      %s605 = smul.addr %s604, 4
      %s606 = scalar_lea.vmem %s5, %s605
      // Predicated region
      $region49: #{esmc_forward.17} parent=39 // pred_check
        %p607 = pneg %p210
      $region50: #{esmc_forward.17} parent=39 // pred_check_branch
        %609 = sbr.rel (%p607) target = $region52
      $region51: #{esmc_forward.17} parent=39 // pred_region
        _
      $region52: #{esmc_forward.17} parent=39 // pred_fallthru
        _
    $region40: #{esmc_forward.17} parent=5 // pred_fallthru
      _
    %p610 = scmp.le.s32.totalorder 2, %s11
    // Predicated region
    $region53: #{esmc_forward.17} parent=5 // pred_check
      %p611 = pneg %p610
    $region54: #{esmc_forward.17} parent=5 // pred_check_branch
      %613 = sbr.rel (%p611) target = $region56
    $region55: #{esmc_forward.17} parent=5 // pred_region
      %s614 = ssub.s32 %s11, 2
      // Predicated region
      $region57: #{esmc_forward.17} parent=55 // pred_check
        %p615 = pneg %p216
      $region58: #{esmc_forward.17} parent=55 // pred_check_branch
        %617 = sbr.rel (%p615) target = $region60
      $region59: #{esmc_forward.17} parent=55 // pred_region
        %p618 = scmp.lt.s32.totalorder %s26, 1
        %s619 = scalar_select %p618, %s26, 1
        %p620 = scmp.lt.s32.totalorder %s27, 1
        %s621 = scalar_select %p620, %s27, 1
        %p622 = scmp.lt.s32.totalorder %s28, 0
        %s623 = scalar_select %p622, %s28, 0
        %s624 = sadd.s32 %s623, %s621
        %s625 = smul.addr %s619, 2
        %s626 = sadd.s32 %s624, %s625
        %s627 = smul.addr %s626, 4
        %s628 = scalar_lea.vmem %s5, %s627
      $region60: #{esmc_forward.17} parent=55 // pred_fallthru
        _
    $region56: #{esmc_forward.17} parent=5 // pred_fallthru
      _
  $region6: #{esmc_forward.17} parent=0 // loop_footer
    %s15 = sadd.s32 1, %s11
  $region7: #{esmc_forward.17} parent=0 // loop_footer_branch
    %10 = sbr.rel target = $region3
  $region8: #{esmc_forward.17} parent=0 // loop_exit
    _

// kernel: esmc_forward.15
$region0: #{esmc_forward.15}
  #allocation0 [shape = 'u32[]', space=smem, size = 0x4, offset = 0x4, fixed_abs, tag = 'smem constant byte address 0x4 - core index']
  #allocation1 [shape = 'u32[144,128]{1,0:T(1,128)}', space=vmem, size = 0x12000, scoped, tag = 'internal scratch']
  #allocation2 [shape = 'bf16[16,128]{1,0:T(8,128)(2,1)}', space=vmem, size = 0x1000, scoped, tag = 'scratch operand']
  %s0 = inlined_call_operand.vmem [shape: bf16[16,128], index: 0, kind: input, shape index: {}]
  %s1 = inlined_call_operand.vmem [shape: f32[1,128], index: 1, kind: input, shape index: {}]
  %s2 = inlined_call_operand.vmem [shape: f32[1,128], index: 2, kind: input, shape index: {}]
  %s3 = inlined_call_operand.vmem [shape: bf16[128,384], index: 3, kind: input, shape index: {}]
  %s4 = inlined_call_operand.vmem [shape: bf16[16,384], index: 4, kind: output, shape index: {}]
  %s5 = sld [smem:[#allocation0]]
  $region30: #{esmc_forward.15} parent=0
    _
  %s7 = ssub.s32 1, %s5
  %s8 = scalar_select 0, %s7, %s5
  // Predicated region
  $region2: #{esmc_forward.15} parent=0 // pred_check
    _
  $region3: #{esmc_forward.15} parent=0 // pred_check_branch
    %10 = sbr.rel (0) target = $region5
  $region4: #{esmc_forward.15} parent=0 // pred_region
    _
  $region5: #{esmc_forward.15} parent=0 // pred_fallthru
    _
  // Predicated region
  $region6: #{esmc_forward.15} parent=0 // pred_check
    _
  $region7: #{esmc_forward.15} parent=0 // pred_check_branch
    %12 = sbr.rel (0) target = $region9
  $region8: #{esmc_forward.15} parent=0 // pred_region
    _
  $region9: #{esmc_forward.15} parent=0 // pred_fallthru
    _
  // Predicated region
  $region10: #{esmc_forward.15} parent=0 // pred_check
    _
  $region11: #{esmc_forward.15} parent=0 // pred_check_branch
    %14 = sbr.rel (0) target = $region13
  $region12: #{esmc_forward.15} parent=0 // pred_region
    _
  $region13: #{esmc_forward.15} parent=0 // pred_fallthru
    _
  // Predicated region
  $region14: #{esmc_forward.15} parent=0 // pred_check
    _
  $region15: #{esmc_forward.15} parent=0 // pred_check_branch
    %16 = sbr.rel (0) target = $region17
  $region16: #{esmc_forward.15} parent=0 // pred_region
    _
  $region17: #{esmc_forward.15} parent=0 // pred_fallthru
    _
  %p18 = scmp.eq.s32.totalorder 0, 0
  // Predicated region
  $region18: #{esmc_forward.15} parent=0 // pred_check
    %p19 = pneg %p18
  $region19: #{esmc_forward.15} parent=0 // pred_check_branch
    %21 = sbr.rel (%p19) target = $region21
  $region20: #{esmc_forward.15} parent=0 // pred_region
    %v22 = vld [vmem:[%s0] sm:$0xf]
    %v23 = vld [vmem:[%s0 + $0x4] sm:$0xf]
    %v24 = vunpack.c.l.bf16 %v22
    %v25 = vunpack.c.l.bf16 %v23
    %26 = vadd.xlane.f32.xlu0 %v24
    %v27 = vpop.xlane.xlu0 %26
    %28 = vadd.xlane.f32.xlu0 %v25
    %v29 = vpop.xlane.xlu0 %28
    %v30 = vrcp.pop 128.0
    %v31 = vmul.f32 %v27, %v30
    %v32 = vmul.f32 %v29, %v30
    %v33 = vsub.f32 %v24, %v31
    %v34 = vsub.f32 %v25, %v32
    %v35 = vmul.f32 %v33, %v33
    %v36 = vmul.f32 %v34, %v34
    %37 = vadd.xlane.f32.xlu0 %v35
    %v38 = vpop.xlane.xlu0 %37
    %39 = vadd.xlane.f32.xlu0 %v36
    %v40 = vpop.xlane.xlu0 %39
    %v41 = vmul.f32 %v38, %v30
    %v42 = vmul.f32 %v40, %v30
    %v43 = vadd.f32 %v41, 1e-05
    %v44 = vadd.f32 %v42, 1e-05
    %v45 = vrsqrt.pop %v43
    %v46 = vrsqrt.pop %v44
    %v47 = vmul.f32 %v33, %v45
    %v48 = vmul.f32 %v34, %v46
    %v49 = vld [vmem:[%s1] sm:$0x1]
    %v51 = vlaneseq
    %v52 = vshrl.u32 %v51, 7
    %v53 = vsub.s32 0, %v52
    %v54 = vrot.slane %v49, %v53
    %v56 = vmul.f32 %v47, %v54
    %v57 = vmul.f32 %v48, %v54
    %v58 = vld [vmem:[%s2] sm:$0x1]
    %v60 = vlaneseq
    %v61 = vshrl.u32 %v60, 7
    %v62 = vsub.s32 0, %v61
    %v63 = vrot.slane %v58, %v62
    %v65 = vadd.f32 %v56, %v63
    %v66 = vadd.f32 %v57, %v63
    %v67 = vpack.c.bf16 %v66, %v65
    %v69 = vunpack.c.l.b16 %v67
    %v70 = vunpack.c.h.b16 %v67
    %v71 = vpack.c.b16 %v69, %v69
    %v72 = vpack.c.b16 %v70, %v70
    %75 = vst [vmem:[#allocation2] sm:$0xf] %v71
    %76 = vst [vmem:[#allocation2 + $0x4] sm:$0xf] %v72
  $region21: #{esmc_forward.15} parent=0 // pred_fallthru
    _
  %v77 = vld [vmem:[#allocation2] sm:$0xf]
  %v78 = vld [vmem:[#allocation2 + $0x4] sm:$0xf]
  %v79 = vld [vmem:[%s3] sm:$0xff]
  %v80 = vld [vmem:[%s3 + $0x8] sm:$0xf]
  %v81 = vld [vmem:[%s3 + $0xc] sm:$0xff]
  %v82 = vld [vmem:[%s3 + $0x14] sm:$0xf]
  %v83 = vld [vmem:[%s3 + $0x18] sm:$0xff]
  %v84 = vld [vmem:[%s3 + $0x20] sm:$0xf]
  %v85 = vld [vmem:[%s3 + $0x24] sm:$0xff]
  %v86 = vld [vmem:[%s3 + $0x2c] sm:$0xf]
  %v87 = vld [vmem:[%s3 + $0x30] sm:$0xff]
  %v88 = vld [vmem:[%s3 + $0x38] sm:$0xf]
  %v89 = vld [vmem:[%s3 + $0x3c] sm:$0xff]
  %v90 = vld [vmem:[%s3 + $0x44] sm:$0xf]
  %v91 = vld [vmem:[%s3 + $0x48] sm:$0xff]
  %v92 = vld [vmem:[%s3 + $0x50] sm:$0xf]
  %v93 = vld [vmem:[%s3 + $0x54] sm:$0xff]
  %v94 = vld [vmem:[%s3 + $0x5c] sm:$0xf]
  %v95 = vld [vmem:[%s3 + $0x60] sm:$0xff]
  %v96 = vld [vmem:[%s3 + $0x68] sm:$0xf]
  %v97 = vld [vmem:[%s3 + $0x6c] sm:$0xff]
  %v98 = vld [vmem:[%s3 + $0x74] sm:$0xf]
  %v99 = vld [vmem:[%s3 + $0x78] sm:$0xff]
  %v100 = vld [vmem:[%s3 + $0x80] sm:$0xf]
  %v101 = vld [vmem:[%s3 + $0x84] sm:$0xff]
  %v102 = vld [vmem:[%s3 + $0x8c] sm:$0xf]
  %v103 = vld [vmem:[%s3 + $0x90] sm:$0xff]
  %v104 = vld [vmem:[%s3 + $0x98] sm:$0xf]
  %v105 = vld [vmem:[%s3 + $0x9c] sm:$0xff]
  %v106 = vld [vmem:[%s3 + $0xa4] sm:$0xf]
  %v107 = vld [vmem:[%s3 + $0xa8] sm:$0xff]
  %v108 = vld [vmem:[%s3 + $0xb0] sm:$0xf]
  %v109 = vld [vmem:[%s3 + $0xb4] sm:$0xff]
  %v110 = vld [vmem:[%s3 + $0xbc] sm:$0xf]
  %v113 = vunpack.c.l.b16 %v77
  %v114 = vunpack.c.l.b16 %v78
  %v115 = vpack.c.b16 %v114, %v113
  %v149 = vunpack.c.l.b16 %v79
  %v150 = vunpack.c.h.b16 %v79
  %v151 = vunpack.c.l.b16 %v80
  %v152 = vunpack.c.l.b16 %v81
  %v153 = vunpack.c.h.b16 %v81
  %v154 = vunpack.c.l.b16 %v82
  %v155 = vunpack.c.l.b16 %v83
  %v156 = vunpack.c.h.b16 %v83
  %v157 = vunpack.c.l.b16 %v84
  %v158 = vunpack.c.l.b16 %v85
  %v159 = vunpack.c.h.b16 %v85
  %v160 = vunpack.c.l.b16 %v86
  %v161 = vunpack.c.l.b16 %v87
  %v162 = vunpack.c.h.b16 %v87
  %v163 = vunpack.c.l.b16 %v88
  %v164 = vunpack.c.l.b16 %v89
  %v165 = vunpack.c.h.b16 %v89
  %v166 = vunpack.c.l.b16 %v90
  %v167 = vunpack.c.l.b16 %v91
  %v168 = vunpack.c.h.b16 %v91
  %v169 = vunpack.c.l.b16 %v92
  %v170 = vunpack.c.l.b16 %v93
  %v171 = vunpack.c.h.b16 %v93
  %v172 = vunpack.c.l.b16 %v94
  %v173 = vunpack.c.l.b16 %v95
  %v174 = vunpack.c.h.b16 %v95
  %v175 = vunpack.c.l.b16 %v96
  %v176 = vunpack.c.l.b16 %v97
  %v177 = vunpack.c.h.b16 %v97
  %v178 = vunpack.c.l.b16 %v98
  %v179 = vunpack.c.l.b16 %v99
  %v180 = vunpack.c.h.b16 %v99
  %v181 = vunpack.c.l.b16 %v100
  %v182 = vunpack.c.l.b16 %v101
  %v183 = vunpack.c.h.b16 %v101
  %v184 = vunpack.c.l.b16 %v102
  %v185 = vunpack.c.l.b16 %v103
  %v186 = vunpack.c.h.b16 %v103
  %v187 = vunpack.c.l.b16 %v104
  %v188 = vunpack.c.l.b16 %v105
  %v189 = vunpack.c.h.b16 %v105
  %v190 = vunpack.c.l.b16 %v106
  %v191 = vunpack.c.l.b16 %v107
  %v192 = vunpack.c.h.b16 %v107
  %v193 = vunpack.c.l.b16 %v108
  %v194 = vunpack.c.l.b16 %v109
  %v195 = vunpack.c.h.b16 %v109
  %v196 = vunpack.c.l.b16 %v110
  %v197 = vpack.c.b16 %v152, %v149
  %v198 = vpack.c.b16 %v153, %v150
  %v199 = vpack.c.b16 %v154, %v151
  %v200 = vpack.c.b16 %v158, %v155
  %v201 = vpack.c.b16 %v159, %v156
  %v202 = vpack.c.b16 %v160, %v157
  %v203 = vpack.c.b16 %v164, %v161
  %v204 = vpack.c.b16 %v165, %v162
  %v205 = vpack.c.b16 %v166, %v163
  %v206 = vpack.c.b16 %v170, %v167
  %v207 = vpack.c.b16 %v171, %v168
  %v208 = vpack.c.b16 %v172, %v169
  %v209 = vpack.c.b16 %v176, %v173
  %v210 = vpack.c.b16 %v177, %v174
  %v211 = vpack.c.b16 %v178, %v175
  %v212 = vpack.c.b16 %v182, %v179
  %v213 = vpack.c.b16 %v183, %v180
  %v214 = vpack.c.b16 %v184, %v181
  %v215 = vpack.c.b16 %v188, %v185
  %v216 = vpack.c.b16 %v189, %v186
  %v217 = vpack.c.b16 %v190, %v187
  %v218 = vpack.c.b16 %v194, %v191
  %v219 = vpack.c.b16 %v195, %v192
  %v220 = vpack.c.b16 %v196, %v193
  %245 = vmatprep.subr.bf16.mxu0 %v219
  %246 = vmatpush1.bf16.msra.mxu0 %v218
  %247 = vmatprep.subr.bf16.mxu0 %v216
  %248 = vmatpush1.bf16.msra.mxu0 %v215
  %249 = vmatprep.subr.bf16.mxu0 %v213
  %250 = vmatpush1.bf16.msra.mxu0 %v212
  %251 = vmatprep.subr.bf16.mxu0 %v210
  %252 = vmatpush1.bf16.msra.mxu0 %v209
  %253 = vmatprep.subr.bf16.mxu0 %v207
  %254 = vmatpush1.bf16.msra.mxu0 %v206
  %255 = vmatprep.subr.bf16.mxu0 %v204
  %256 = vmatpush1.bf16.msra.mxu0 %v203
  %257 = vmatprep.subr.bf16.mxu0 %v201
  %258 = vmatpush1.bf16.msra.mxu0 %v200
  %259 = vmatprep.subr.bf16.mxu0 %v198
  %260 = vmatpush1.bf16.msra.mxu0 %v197
  %261 = vmatprep.subr.bf16.mxu0 0
  %262 = vmatpush2.bf16.msra.mxu0 0
  %263 = vmatprep.subr.bf16.mxu0 0
  %264 = vmatpush2.bf16.msra.mxu0 0
  %265 = vmatprep.subr.bf16.mxu0 0
  %266 = vmatpush2.bf16.msra.mxu0 0
  %267 = vmatprep.subr.bf16.mxu0 0
  %268 = vmatpush2.bf16.msra.mxu0 0
  %269 = vmatprep.subr.bf16.mxu0 0
  %270 = vmatpush2.bf16.msra.mxu0 0
  %271 = vmatprep.subr.bf16.mxu0 0
  %272 = vmatpush2.bf16.msra.mxu0 0
  %273 = vmatprep.subr.bf16.mxu0 0
  %274 = vmatpush2.bf16.msra.mxu0 0
  %275 = vmatprep.subr.bf16.mxu0 0
  %276 = vmatpush2.bf16.msra.mxu0 0
  %277 = vmatprep.mubr.bf16.mxu0 0
  %278 = vmatmul.mubr.bf16.gmra.mxu0 %v115
  %v279 = vpop.f32.mrf.mxu0
  %v280 = vadd.f32 0.0, %v279
  %v281 = vpop.f32.mrf.mxu0
  %v282 = vadd.f32 0.0, %v281
  %v283 = vpop.f32.mrf.mxu0
  %v284 = vadd.f32 0.0, %v283
  %v285 = vpop.f32.mrf.mxu0
  %v286 = vadd.f32 0.0, %v285
  %287 = vdwg.mxu0
  %288 = vmatprep.subr.bf16.mxu0 0
  %289 = vmatpush1.bf16.msra.mxu0 %v220
  %290 = vmatprep.subr.bf16.mxu0 0
  %291 = vmatpush1.bf16.msra.mxu0 %v217
  %292 = vmatprep.subr.bf16.mxu0 0
  %293 = vmatpush1.bf16.msra.mxu0 %v214
  %294 = vmatprep.subr.bf16.mxu0 0
  %295 = vmatpush1.bf16.msra.mxu0 %v211
  %296 = vmatprep.subr.bf16.mxu0 0
  %297 = vmatpush1.bf16.msra.mxu0 %v208
  %298 = vmatprep.subr.bf16.mxu0 0
  %299 = vmatpush1.bf16.msra.mxu0 %v205
  %300 = vmatprep.subr.bf16.mxu0 0
  %301 = vmatpush1.bf16.msra.mxu0 %v202
  %302 = vmatprep.subr.bf16.mxu0 0
  %303 = vmatpush1.bf16.msra.mxu0 %v199
  %304 = vmatprep.subr.bf16.mxu0 0
  %305 = vmatpush2.bf16.msra.mxu0 0
  %306 = vmatprep.subr.bf16.mxu0 0
  %307 = vmatpush2.bf16.msra.mxu0 0
  %308 = vmatprep.subr.bf16.mxu0 0
  %309 = vmatpush2.bf16.msra.mxu0 0
  %310 = vmatprep.subr.bf16.mxu0 0
  %311 = vmatpush2.bf16.msra.mxu0 0
  %312 = vmatprep.subr.bf16.mxu0 0
  %313 = vmatpush2.bf16.msra.mxu0 0
  %314 = vmatprep.subr.bf16.mxu0 0
  %315 = vmatpush2.bf16.msra.mxu0 0
  %316 = vmatprep.subr.bf16.mxu0 0
  %317 = vmatpush2.bf16.msra.mxu0 0
  %318 = vmatprep.subr.bf16.mxu0 0
  %319 = vmatpush2.bf16.msra.mxu0 0
  %320 = vmatprep.mubr.bf16.mxu0 0
  %321 = vmatmul.mubr.bf16.gmra.mxu0 %v115
  %v322 = vpop.f32.mrf.mxu0
  %v323 = vadd.f32 0.0, %v322
  %v324 = vpop.f32.mrf.mxu0
  %v325 = vpop.f32.mrf.mxu0
  %v326 = vadd.f32 0.0, %v325
  %v327 = vpop.f32.mrf.mxu0
  %328 = vdwg.mxu0
  %v329 = vpack.c.bf16 %v284, %v280
  %v330 = vpack.c.bf16 %v286, %v282
  %v331 = vpack.c.bf16 %v326, %v323
  %v335 = vunpack.c.l.b16 %v329
  %v336 = vunpack.c.l.b16 %v330
  %v337 = vunpack.c.l.b16 %v331
  %v338 = vunpack.c.h.b16 %v329
  %v339 = vunpack.c.h.b16 %v330
  %v340 = vunpack.c.h.b16 %v331
  %v341 = vpack.c.b16 %v336, %v335
  %v342 = vpack.c.b16 %v337, %v337
  %v343 = vpack.c.b16 %v339, %v338
  %v344 = vpack.c.b16 %v340, %v340
  %349 = vst [vmem:[%s4] sm:$0xff] %v341
  %350 = vst [vmem:[%s4 + $0x8] sm:$0xf] %v342
  %351 = vst [vmem:[%s4 + $0xc] sm:$0xff] %v343
  %352 = vst [vmem:[%s4 + $0x14] sm:$0xf] %v344
  // Predicated region
  $region22: #{esmc_forward.15} parent=0 // pred_check
    _
  $region23: #{esmc_forward.15} parent=0 // pred_check_branch
    %354 = sbr.rel (0) target = $region25
  $region24: #{esmc_forward.15} parent=0 // pred_region
    _
  $region25: #{esmc_forward.15} parent=0 // pred_fallthru
    _
  // Predicated region
  $region26: #{esmc_forward.15} parent=0 // pred_check
    _
  $region27: #{esmc_forward.15} parent=0 // pred_check_branch
    %356 = sbr.rel (0) target = $region29
  $region28: #{esmc_forward.15} parent=0 // pred_region
    _
  $region29: #{esmc_forward.15} parent=0 // pred_fallthru
    _

// kernel: esmc_forward.18
$region0: #{esmc_forward.18}
  #allocation0 [shape = 'u32[]', space=smem, size = 0x4, offset = 0x4, fixed_abs, tag = 'smem constant byte address 0x4 - core index']
  #allocation1 [shape = 'u32[144,128]{1,0:T(1,128)}', space=vmem, size = 0x12000, scoped, tag = 'internal scratch']
  %s0 = inlined_call_operand.vmem [shape: bf16[16,128], index: 0, kind: input, shape index: {}]
  %s1 = inlined_call_operand.vmem [shape: bf16[128,128], index: 1, kind: input, shape index: {}]
  %s2 = inlined_call_operand.vmem [shape: bf16[16,128], index: 2, kind: input, shape index: {}]
  %s3 = inlined_call_operand.vmem [shape: bf16[16,128], index: 3, kind: output, shape index: {}]
  %s4 = sld [smem:[#allocation0]]
  $region22: #{esmc_forward.18} parent=0
    _
  %s6 = ssub.s32 1, %s4
  %s7 = scalar_select 0, %s6, %s4
  // Predicated region
  $region2: #{esmc_forward.18} parent=0 // pred_check
    _
  $region3: #{esmc_forward.18} parent=0 // pred_check_branch
    %9 = sbr.rel (0) target = $region5
  $region4: #{esmc_forward.18} parent=0 // pred_region
    _
  $region5: #{esmc_forward.18} parent=0 // pred_fallthru
    _
  // Predicated region
  $region6: #{esmc_forward.18} parent=0 // pred_check
    _
  $region7: #{esmc_forward.18} parent=0 // pred_check_branch
    %11 = sbr.rel (0) target = $region9
  $region8: #{esmc_forward.18} parent=0 // pred_region
    _
  $region9: #{esmc_forward.18} parent=0 // pred_fallthru
    _
  // Predicated region
  $region10: #{esmc_forward.18} parent=0 // pred_check
    _
  $region11: #{esmc_forward.18} parent=0 // pred_check_branch
    %13 = sbr.rel (0) target = $region13
  $region12: #{esmc_forward.18} parent=0 // pred_region
    _
  $region13: #{esmc_forward.18} parent=0 // pred_fallthru
    _
  %v15 = vld [vmem:[%s0] sm:$0xf]
  %v16 = vld [vmem:[%s0 + $0x4] sm:$0xf]
  %v17 = vld [vmem:[%s1] sm:$0xf]
  %v18 = vld [vmem:[%s1 + $0x4] sm:$0xf]
  %v19 = vld [vmem:[%s1 + $0x8] sm:$0xf]
  %v20 = vld [vmem:[%s1 + $0xc] sm:$0xf]
  %v21 = vld [vmem:[%s1 + $0x10] sm:$0xf]
  %v22 = vld [vmem:[%s1 + $0x14] sm:$0xf]
  %v23 = vld [vmem:[%s1 + $0x18] sm:$0xf]
  %v24 = vld [vmem:[%s1 + $0x1c] sm:$0xf]
  %v25 = vld [vmem:[%s1 + $0x20] sm:$0xf]
  %v26 = vld [vmem:[%s1 + $0x24] sm:$0xf]
  %v27 = vld [vmem:[%s1 + $0x28] sm:$0xf]
  %v28 = vld [vmem:[%s1 + $0x2c] sm:$0xf]
  %v29 = vld [vmem:[%s1 + $0x30] sm:$0xf]
  %v30 = vld [vmem:[%s1 + $0x34] sm:$0xf]
  %v31 = vld [vmem:[%s1 + $0x38] sm:$0xf]
  %v32 = vld [vmem:[%s1 + $0x3c] sm:$0xf]
  %v35 = vunpack.c.l.b16 %v15
  %v36 = vunpack.c.l.b16 %v16
  %v37 = vpack.c.b16 %v36, %v35
  %v55 = vunpack.c.l.b16 %v17
  %v56 = vunpack.c.l.b16 %v18
  %v57 = vunpack.c.l.b16 %v19
  %v58 = vunpack.c.l.b16 %v20
  %v59 = vunpack.c.l.b16 %v21
  %v60 = vunpack.c.l.b16 %v22
  %v61 = vunpack.c.l.b16 %v23
  %v62 = vunpack.c.l.b16 %v24
  %v63 = vunpack.c.l.b16 %v25
  %v64 = vunpack.c.l.b16 %v26
  %v65 = vunpack.c.l.b16 %v27
  %v66 = vunpack.c.l.b16 %v28
  %v67 = vunpack.c.l.b16 %v29
  %v68 = vunpack.c.l.b16 %v30
  %v69 = vunpack.c.l.b16 %v31
  %v70 = vunpack.c.l.b16 %v32
  %v71 = vpack.c.b16 %v56, %v55
  %v72 = vpack.c.b16 %v58, %v57
  %v73 = vpack.c.b16 %v60, %v59
  %v74 = vpack.c.b16 %v62, %v61
  %v75 = vpack.c.b16 %v64, %v63
  %v76 = vpack.c.b16 %v66, %v65
  %v77 = vpack.c.b16 %v68, %v67
  %v78 = vpack.c.b16 %v70, %v69
  %87 = vmatprep.subr.bf16.mxu0 0
  %88 = vmatpush1.bf16.msra.mxu0 %v78
  %89 = vmatprep.subr.bf16.mxu0 0
  %90 = vmatpush1.bf16.msra.mxu0 %v77
  %91 = vmatprep.subr.bf16.mxu0 0
  %92 = vmatpush1.bf16.msra.mxu0 %v76
  %93 = vmatprep.subr.bf16.mxu0 0
  %94 = vmatpush1.bf16.msra.mxu0 %v75
  %95 = vmatprep.subr.bf16.mxu0 0
  %96 = vmatpush1.bf16.msra.mxu0 %v74
  %97 = vmatprep.subr.bf16.mxu0 0
  %98 = vmatpush1.bf16.msra.mxu0 %v73
  %99 = vmatprep.subr.bf16.mxu0 0
  %100 = vmatpush1.bf16.msra.mxu0 %v72
  %101 = vmatprep.subr.bf16.mxu0 0
  %102 = vmatpush1.bf16.msra.mxu0 %v71
  %103 = vmatprep.subr.bf16.mxu0 0
  %104 = vmatpush2.bf16.msra.mxu0 0
  %105 = vmatprep.subr.bf16.mxu0 0
  %106 = vmatpush2.bf16.msra.mxu0 0
  %107 = vmatprep.subr.bf16.mxu0 0
  %108 = vmatpush2.bf16.msra.mxu0 0
  %109 = vmatprep.subr.bf16.mxu0 0
  %110 = vmatpush2.bf16.msra.mxu0 0
  %111 = vmatprep.subr.bf16.mxu0 0
  %112 = vmatpush2.bf16.msra.mxu0 0
  %113 = vmatprep.subr.bf16.mxu0 0
  %114 = vmatpush2.bf16.msra.mxu0 0
  %115 = vmatprep.subr.bf16.mxu0 0
  %116 = vmatpush2.bf16.msra.mxu0 0
  %117 = vmatprep.subr.bf16.mxu0 0
  %118 = vmatpush2.bf16.msra.mxu0 0
  %119 = vmatprep.mubr.bf16.mxu0 0
  %120 = vmatmul.mubr.bf16.gmra.mxu0 %v37
  %v121 = vpop.f32.mrf.mxu0
  %v122 = vadd.f32 0.0, %v121
  %v123 = vpop.f32.mrf.mxu0
  %v124 = vpop.f32.mrf.mxu0
  %v125 = vadd.f32 0.0, %v124
  %v126 = vpop.f32.mrf.mxu0
  %127 = vdwg.mxu0
  %v128 = vld [vmem:[%s2] sm:$0xf]
  %v129 = vld [vmem:[%s2 + $0x4] sm:$0xf]
  %v130 = vunpack.c.l.bf16 %v128
  %v131 = vunpack.c.l.bf16 %v129
  %v132 = vmul.f32 %v122, 4.2426405
  %v133 = vmul.f32 %v125, 4.2426405
  %v134 = vadd.f32 %v130, %v132
  %v135 = vadd.f32 %v131, %v133
  %v136 = vpack.c.bf16 %v135, %v134
  %v138 = vunpack.c.l.b16 %v136
  %v139 = vunpack.c.h.b16 %v136
  %v140 = vpack.c.b16 %v138, %v138
  %v141 = vpack.c.b16 %v139, %v139
  %144 = vst [vmem:[%s3] sm:$0xf] %v140
  %145 = vst [vmem:[%s3 + $0x4] sm:$0xf] %v141
  // Predicated region
  $region14: #{esmc_forward.18} parent=0 // pred_check
    _
  $region15: #{esmc_forward.18} parent=0 // pred_check_branch
    %147 = sbr.rel (0) target = $region17
  $region16: #{esmc_forward.18} parent=0 // pred_region
    _
  $region17: #{esmc_forward.18} parent=0 // pred_fallthru
    _
  // Predicated region
  $region18: #{esmc_forward.18} parent=0 // pred_check
    _
  $region19: #{esmc_forward.18} parent=0 // pred_check_branch
    %149 = sbr.rel (0) target = $region21
  $region20: #{esmc_forward.18} parent=0 // pred_region
    _
  $region21: #{esmc_forward.18} parent=0 // pred_fallthru
    _

// kernel: esmc_forward.28
$region0: #{esmc_forward.28}
  #allocation0 [shape = 'u32[]', space=smem, size = 0x4, offset = 0x4, fixed_abs, tag = 'smem constant byte address 0x4 - core index']
  #allocation1 [shape = 'u32[144,128]{1,0:T(1,128)}', space=vmem, size = 0x12000, scoped, tag = 'internal scratch']
  #allocation2 [shape = 'bf16[16,128]{1,0:T(8,128)(2,1)}', space=vmem, size = 0x1000, scoped, tag = 'scratch operand']
  %s0 = inlined_call_operand.vmem [shape: bf16[16,128], index: 0, kind: input, shape index: {}]
  %s1 = inlined_call_operand.vmem [shape: f32[1,128], index: 1, kind: input, shape index: {}]
  %s2 = inlined_call_operand.vmem [shape: bf16[128,128], index: 2, kind: input, shape index: {}]
  %s3 = inlined_call_operand.vmem [shape: f32[1,128], index: 3, kind: input, shape index: {}]
  %s4 = inlined_call_operand.vmem [shape: f32[16,128], index: 4, kind: output, shape index: {}]
  %s5 = sld [smem:[#allocation0]]
  $region30: #{esmc_forward.28} parent=0
    _
  %s7 = ssub.s32 1, %s5
  %s8 = scalar_select 0, %s7, %s5
  // Predicated region
  $region2: #{esmc_forward.28} parent=0 // pred_check
    _
  $region3: #{esmc_forward.28} parent=0 // pred_check_branch
    %10 = sbr.rel (0) target = $region5
  $region4: #{esmc_forward.28} parent=0 // pred_region
    _
  $region5: #{esmc_forward.28} parent=0 // pred_fallthru
    _
  // Predicated region
  $region6: #{esmc_forward.28} parent=0 // pred_check
    _
  $region7: #{esmc_forward.28} parent=0 // pred_check_branch
    %12 = sbr.rel (0) target = $region9
  $region8: #{esmc_forward.28} parent=0 // pred_region
    _
  $region9: #{esmc_forward.28} parent=0 // pred_fallthru
    _
  // Predicated region
  $region10: #{esmc_forward.28} parent=0 // pred_check
    _
  $region11: #{esmc_forward.28} parent=0 // pred_check_branch
    %14 = sbr.rel (0) target = $region13
  $region12: #{esmc_forward.28} parent=0 // pred_region
    _
  $region13: #{esmc_forward.28} parent=0 // pred_fallthru
    _
  // Predicated region
  $region14: #{esmc_forward.28} parent=0 // pred_check
    _
  $region15: #{esmc_forward.28} parent=0 // pred_check_branch
    %16 = sbr.rel (0) target = $region17
  $region16: #{esmc_forward.28} parent=0 // pred_region
    _
  $region17: #{esmc_forward.28} parent=0 // pred_fallthru
    _
  %p18 = scmp.eq.s32.totalorder 0, 0
  // Predicated region
  $region18: #{esmc_forward.28} parent=0 // pred_check
    %p19 = pneg %p18
  $region19: #{esmc_forward.28} parent=0 // pred_check_branch
    %21 = sbr.rel (%p19) target = $region21
  $region20: #{esmc_forward.28} parent=0 // pred_region
    %v22 = vld [vmem:[%s0] sm:$0xf]
    %v23 = vld [vmem:[%s0 + $0x4] sm:$0xf]
    %v24 = vunpack.c.l.bf16 %v22
    %v25 = vunpack.c.l.bf16 %v23
    %26 = vadd.xlane.f32.xlu0 %v24
    %v27 = vpop.xlane.xlu0 %26
    %28 = vadd.xlane.f32.xlu0 %v25
    %v29 = vpop.xlane.xlu0 %28
    %v30 = vrcp.pop 128.0
    %v31 = vmul.f32 %v27, %v30
    %v32 = vmul.f32 %v29, %v30
    %v33 = vsub.f32 %v24, %v31
    %v34 = vsub.f32 %v25, %v32
    %v35 = vmul.f32 %v33, %v33
    %v36 = vmul.f32 %v34, %v34
    %37 = vadd.xlane.f32.xlu0 %v35
    %v38 = vpop.xlane.xlu0 %37
    %39 = vadd.xlane.f32.xlu0 %v36
    %v40 = vpop.xlane.xlu0 %39
    %v41 = vmul.f32 %v38, %v30
    %v42 = vmul.f32 %v40, %v30
    %v43 = vadd.f32 %v41, 1e-05
    %v44 = vadd.f32 %v42, 1e-05
    %v45 = vrsqrt.pop %v43
    %v46 = vrsqrt.pop %v44
    %v47 = vmul.f32 %v33, %v45
    %v48 = vmul.f32 %v34, %v46
    %v49 = vld [vmem:[%s1] sm:$0x1]
    %v51 = vlaneseq
    %v52 = vshrl.u32 %v51, 7
    %v53 = vsub.s32 0, %v52
    %v54 = vrot.slane %v49, %v53
    %v56 = vmul.f32 %v47, %v54
    %v57 = vmul.f32 %v48, %v54
    %v58 = vpack.c.bf16 %v57, %v56
    %v60 = vunpack.c.l.b16 %v58
    %v61 = vunpack.c.h.b16 %v58
    %v62 = vpack.c.b16 %v60, %v60
    %v63 = vpack.c.b16 %v61, %v61
    %66 = vst [vmem:[#allocation2] sm:$0xf] %v62
    %67 = vst [vmem:[#allocation2 + $0x4] sm:$0xf] %v63
  $region21: #{esmc_forward.28} parent=0 // pred_fallthru
    _
  %v68 = vld [vmem:[#allocation2] sm:$0xf]
  %v69 = vld [vmem:[#allocation2 + $0x4] sm:$0xf]
  %v70 = vld [vmem:[%s2] sm:$0xf]
  %v71 = vld [vmem:[%s2 + $0x4] sm:$0xf]
  %v72 = vld [vmem:[%s2 + $0x8] sm:$0xf]
  %v73 = vld [vmem:[%s2 + $0xc] sm:$0xf]
  %v74 = vld [vmem:[%s2 + $0x10] sm:$0xf]
  %v75 = vld [vmem:[%s2 + $0x14] sm:$0xf]
  %v76 = vld [vmem:[%s2 + $0x18] sm:$0xf]
  %v77 = vld [vmem:[%s2 + $0x1c] sm:$0xf]
  %v78 = vld [vmem:[%s2 + $0x20] sm:$0xf]
  %v79 = vld [vmem:[%s2 + $0x24] sm:$0xf]
  %v80 = vld [vmem:[%s2 + $0x28] sm:$0xf]
  %v81 = vld [vmem:[%s2 + $0x2c] sm:$0xf]
  %v82 = vld [vmem:[%s2 + $0x30] sm:$0xf]
  %v83 = vld [vmem:[%s2 + $0x34] sm:$0xf]
  %v84 = vld [vmem:[%s2 + $0x38] sm:$0xf]
  %v85 = vld [vmem:[%s2 + $0x3c] sm:$0xf]
  %v86 = vld [vmem:[%s3] sm:$0x1]
  %v88 = vlaneseq
  %v89 = vshrl.u32 %v88, 7
  %v90 = vsub.s32 0, %v89
  %v91 = vrot.slane %v86, %v90
  %v95 = vunpack.c.l.b16 %v68
  %v96 = vunpack.c.l.b16 %v69
  %v97 = vpack.c.b16 %v96, %v95
  %v115 = vunpack.c.l.b16 %v70
  %v116 = vunpack.c.l.b16 %v71
  %v117 = vunpack.c.l.b16 %v72
  %v118 = vunpack.c.l.b16 %v73
  %v119 = vunpack.c.l.b16 %v74
  %v120 = vunpack.c.l.b16 %v75
  %v121 = vunpack.c.l.b16 %v76
  %v122 = vunpack.c.l.b16 %v77
  %v123 = vunpack.c.l.b16 %v78
  %v124 = vunpack.c.l.b16 %v79
  %v125 = vunpack.c.l.b16 %v80
  %v126 = vunpack.c.l.b16 %v81
  %v127 = vunpack.c.l.b16 %v82
  %v128 = vunpack.c.l.b16 %v83
  %v129 = vunpack.c.l.b16 %v84
  %v130 = vunpack.c.l.b16 %v85
  %v131 = vpack.c.b16 %v116, %v115
  %v132 = vpack.c.b16 %v118, %v117
  %v133 = vpack.c.b16 %v120, %v119
  %v134 = vpack.c.b16 %v122, %v121
  %v135 = vpack.c.b16 %v124, %v123
  %v136 = vpack.c.b16 %v126, %v125
  %v137 = vpack.c.b16 %v128, %v127
  %v138 = vpack.c.b16 %v130, %v129
  %147 = vmatprep.subr.bf16.mxu0 0
  %148 = vmatpush1.bf16.msra.mxu0 %v138
  %149 = vmatprep.subr.bf16.mxu0 0
  %150 = vmatpush1.bf16.msra.mxu0 %v137
  %151 = vmatprep.subr.bf16.mxu0 0
  %152 = vmatpush1.bf16.msra.mxu0 %v136
  %153 = vmatprep.subr.bf16.mxu0 0
  %154 = vmatpush1.bf16.msra.mxu0 %v135
  %155 = vmatprep.subr.bf16.mxu0 0
  %156 = vmatpush1.bf16.msra.mxu0 %v134
  %157 = vmatprep.subr.bf16.mxu0 0
  %158 = vmatpush1.bf16.msra.mxu0 %v133
  %159 = vmatprep.subr.bf16.mxu0 0
  %160 = vmatpush1.bf16.msra.mxu0 %v132
  %161 = vmatprep.subr.bf16.mxu0 0
  %162 = vmatpush1.bf16.msra.mxu0 %v131
  %163 = vmatprep.subr.bf16.mxu0 0
  %164 = vmatpush2.bf16.msra.mxu0 0
  %165 = vmatprep.subr.bf16.mxu0 0
  %166 = vmatpush2.bf16.msra.mxu0 0
  %167 = vmatprep.subr.bf16.mxu0 0
  %168 = vmatpush2.bf16.msra.mxu0 0
  %169 = vmatprep.subr.bf16.mxu0 0
  %170 = vmatpush2.bf16.msra.mxu0 0
  %171 = vmatprep.subr.bf16.mxu0 0
  %172 = vmatpush2.bf16.msra.mxu0 0
  %173 = vmatprep.subr.bf16.mxu0 0
  %174 = vmatpush2.bf16.msra.mxu0 0
  %175 = vmatprep.subr.bf16.mxu0 0
  %176 = vmatpush2.bf16.msra.mxu0 0
  %177 = vmatprep.subr.bf16.mxu0 0
  %178 = vmatpush2.bf16.msra.mxu0 0
  %179 = vmatprep.mubr.bf16.mxu0 0
  %180 = vmatmul.mubr.bf16.gmra.mxu0 %v97
  %v181 = vpop.f32.mrf.mxu0
  %v182 = vadd.f32 %v91, %v181
  %v183 = vpop.f32.mrf.mxu0
  %v184 = vpop.f32.mrf.mxu0
  %v185 = vadd.f32 %v91, %v184
  %v186 = vpop.f32.mrf.mxu0
  %187 = vdwg.mxu0
  %188 = vst [vmem:[%s4] sm:$0xff] %v182
  %189 = vst [vmem:[%s4 + $0x8] sm:$0xff] %v185
  // Predicated region
  $region22: #{esmc_forward.28} parent=0 // pred_check
    _
  $region23: #{esmc_forward.28} parent=0 // pred_check_branch
    %191 = sbr.rel (0) target = $region25
  $region24: #{esmc_forward.28} parent=0 // pred_region
    _
  $region25: #{esmc_forward.28} parent=0 // pred_fallthru
    _
  // Predicated region
  $region26: #{esmc_forward.28} parent=0 // pred_check
    _
  $region27: #{esmc_forward.28} parent=0 // pred_check_branch
    %193 = sbr.rel (0) target = $region29
  $region28: #{esmc_forward.28} parent=0 // pred_region
    _
  $region29: #{esmc_forward.28} parent=0 // pred_fallthru
    _

// kernel: esmc_forward.20
$region0: #{esmc_forward.20}
  #allocation0 [shape = 'u32[]', space=smem, size = 0x4, offset = 0x4, fixed_abs, tag = 'smem constant byte address 0x4 - core index']
  #allocation1 [shape = 'u32[144,128]{1,0:T(1,128)}', space=vmem, size = 0x12000, scoped, tag = 'internal scratch']
  %s0 = inlined_call_operand.vmem [shape: bf16[16,512], index: 0, kind: input, shape index: {}]
  %s1 = inlined_call_operand.vmem [shape: bf16[512,128], index: 1, kind: input, shape index: {}]
  %s2 = inlined_call_operand.vmem [shape: bf16[16,128], index: 2, kind: input, shape index: {}]
  %s3 = inlined_call_operand.vmem [shape: bf16[16,128], index: 3, kind: output, shape index: {}]
  %s4 = sld [smem:[#allocation0]]
  $region22: #{esmc_forward.20} parent=0
    _
  %s6 = ssub.s32 1, %s4
  %s7 = scalar_select 0, %s6, %s4
  // Predicated region
  $region2: #{esmc_forward.20} parent=0 // pred_check
    _
  $region3: #{esmc_forward.20} parent=0 // pred_check_branch
    %9 = sbr.rel (0) target = $region5
  $region4: #{esmc_forward.20} parent=0 // pred_region
    _
  $region5: #{esmc_forward.20} parent=0 // pred_fallthru
    _
  // Predicated region
  $region6: #{esmc_forward.20} parent=0 // pred_check
    _
  $region7: #{esmc_forward.20} parent=0 // pred_check_branch
    %11 = sbr.rel (0) target = $region9
  $region8: #{esmc_forward.20} parent=0 // pred_region
    _
  $region9: #{esmc_forward.20} parent=0 // pred_fallthru
    _
  // Predicated region
  $region10: #{esmc_forward.20} parent=0 // pred_check
    _
  $region11: #{esmc_forward.20} parent=0 // pred_check_branch
    %13 = sbr.rel (0) target = $region13
  $region12: #{esmc_forward.20} parent=0 // pred_region
    _
  $region13: #{esmc_forward.20} parent=0 // pred_fallthru
    _
  %v15 = vld [vmem:[%s0] sm:$0xff]
  %v16 = vld [vmem:[%s0 + $0x8] sm:$0xff]
  %v17 = vld [vmem:[%s0 + $0x10] sm:$0xff]
  %v18 = vld [vmem:[%s0 + $0x18] sm:$0xff]
  %v19 = vld [vmem:[%s1] sm:$0xf]
  %v20 = vld [vmem:[%s1 + $0x4] sm:$0xf]
  %v21 = vld [vmem:[%s1 + $0x8] sm:$0xf]
  %v22 = vld [vmem:[%s1 + $0xc] sm:$0xf]
  %v23 = vld [vmem:[%s1 + $0x10] sm:$0xf]
  %v24 = vld [vmem:[%s1 + $0x14] sm:$0xf]
  %v25 = vld [vmem:[%s1 + $0x18] sm:$0xf]
  %v26 = vld [vmem:[%s1 + $0x1c] sm:$0xf]
  %v27 = vld [vmem:[%s1 + $0x20] sm:$0xf]
  %v28 = vld [vmem:[%s1 + $0x24] sm:$0xf]
  %v29 = vld [vmem:[%s1 + $0x28] sm:$0xf]
  %v30 = vld [vmem:[%s1 + $0x2c] sm:$0xf]
  %v31 = vld [vmem:[%s1 + $0x30] sm:$0xf]
  %v32 = vld [vmem:[%s1 + $0x34] sm:$0xf]
  %v33 = vld [vmem:[%s1 + $0x38] sm:$0xf]
  %v34 = vld [vmem:[%s1 + $0x3c] sm:$0xf]
  %v35 = vld [vmem:[%s1 + $0x40] sm:$0xf]
  %v36 = vld [vmem:[%s1 + $0x44] sm:$0xf]
  %v37 = vld [vmem:[%s1 + $0x48] sm:$0xf]
  %v38 = vld [vmem:[%s1 + $0x4c] sm:$0xf]
  %v39 = vld [vmem:[%s1 + $0x50] sm:$0xf]
  %v40 = vld [vmem:[%s1 + $0x54] sm:$0xf]
  %v41 = vld [vmem:[%s1 + $0x58] sm:$0xf]
  %v42 = vld [vmem:[%s1 + $0x5c] sm:$0xf]
  %v43 = vld [vmem:[%s1 + $0x60] sm:$0xf]
  %v44 = vld [vmem:[%s1 + $0x64] sm:$0xf]
  %v45 = vld [vmem:[%s1 + $0x68] sm:$0xf]
  %v46 = vld [vmem:[%s1 + $0x6c] sm:$0xf]
  %v47 = vld [vmem:[%s1 + $0x70] sm:$0xf]
  %v48 = vld [vmem:[%s1 + $0x74] sm:$0xf]
  %v49 = vld [vmem:[%s1 + $0x78] sm:$0xf]
  %v50 = vld [vmem:[%s1 + $0x7c] sm:$0xf]
  %v51 = vld [vmem:[%s1 + $0x80] sm:$0xf]
  %v52 = vld [vmem:[%s1 + $0x84] sm:$0xf]
  %v53 = vld [vmem:[%s1 + $0x88] sm:$0xf]
  %v54 = vld [vmem:[%s1 + $0x8c] sm:$0xf]
  %v55 = vld [vmem:[%s1 + $0x90] sm:$0xf]
  %v56 = vld [vmem:[%s1 + $0x94] sm:$0xf]
  %v57 = vld [vmem:[%s1 + $0x98] sm:$0xf]
  %v58 = vld [vmem:[%s1 + $0x9c] sm:$0xf]
  %v59 = vld [vmem:[%s1 + $0xa0] sm:$0xf]
  %v60 = vld [vmem:[%s1 + $0xa4] sm:$0xf]
  %v61 = vld [vmem:[%s1 + $0xa8] sm:$0xf]
  %v62 = vld [vmem:[%s1 + $0xac] sm:$0xf]
  %v63 = vld [vmem:[%s1 + $0xb0] sm:$0xf]
  %v64 = vld [vmem:[%s1 + $0xb4] sm:$0xf]
  %v65 = vld [vmem:[%s1 + $0xb8] sm:$0xf]
  %v66 = vld [vmem:[%s1 + $0xbc] sm:$0xf]
  %v67 = vld [vmem:[%s1 + $0xc0] sm:$0xf]
  %v68 = vld [vmem:[%s1 + $0xc4] sm:$0xf]
  %v69 = vld [vmem:[%s1 + $0xc8] sm:$0xf]
  %v70 = vld [vmem:[%s1 + $0xcc] sm:$0xf]
  %v71 = vld [vmem:[%s1 + $0xd0] sm:$0xf]
  %v72 = vld [vmem:[%s1 + $0xd4] sm:$0xf]
  %v73 = vld [vmem:[%s1 + $0xd8] sm:$0xf]
  %v74 = vld [vmem:[%s1 + $0xdc] sm:$0xf]
  %v75 = vld [vmem:[%s1 + $0xe0] sm:$0xf]
  %v76 = vld [vmem:[%s1 + $0xe4] sm:$0xf]
  %v77 = vld [vmem:[%s1 + $0xe8] sm:$0xf]
  %v78 = vld [vmem:[%s1 + $0xec] sm:$0xf]
  %v79 = vld [vmem:[%s1 + $0xf0] sm:$0xf]
  %v80 = vld [vmem:[%s1 + $0xf4] sm:$0xf]
  %v81 = vld [vmem:[%s1 + $0xf8] sm:$0xf]
  %v82 = vld [vmem:[%s1 + $0xfc] sm:$0xf]
  %v87 = vunpack.c.l.b16 %v15
  %v88 = vunpack.c.h.b16 %v15
  %v89 = vunpack.c.l.b16 %v16
  %v90 = vunpack.c.h.b16 %v16
  %v91 = vunpack.c.l.b16 %v17
  %v92 = vunpack.c.h.b16 %v17
  %v93 = vunpack.c.l.b16 %v18
  %v94 = vunpack.c.h.b16 %v18
  %v95 = vpack.c.b16 %v91, %v87
  %v96 = vpack.c.b16 %v92, %v88
  %v97 = vpack.c.b16 %v93, %v89
  %v98 = vpack.c.b16 %v94, %v90
  %v167 = vunpack.c.l.b16 %v19
  %v168 = vunpack.c.l.b16 %v20
  %v169 = vunpack.c.l.b16 %v21
  %v170 = vunpack.c.l.b16 %v22
  %v171 = vunpack.c.l.b16 %v23
  %v172 = vunpack.c.l.b16 %v24
  %v173 = vunpack.c.l.b16 %v25
  %v174 = vunpack.c.l.b16 %v26
  %v175 = vunpack.c.l.b16 %v27
  %v176 = vunpack.c.l.b16 %v28
  %v177 = vunpack.c.l.b16 %v29
  %v178 = vunpack.c.l.b16 %v30
  %v179 = vunpack.c.l.b16 %v31
  %v180 = vunpack.c.l.b16 %v32
  %v181 = vunpack.c.l.b16 %v33
  %v182 = vunpack.c.l.b16 %v34
  %v183 = vunpack.c.l.b16 %v35
  %v184 = vunpack.c.l.b16 %v36
  %v185 = vunpack.c.l.b16 %v37
  %v186 = vunpack.c.l.b16 %v38
  %v187 = vunpack.c.l.b16 %v39
  %v188 = vunpack.c.l.b16 %v40
  %v189 = vunpack.c.l.b16 %v41
  %v190 = vunpack.c.l.b16 %v42
  %v191 = vunpack.c.l.b16 %v43
  %v192 = vunpack.c.l.b16 %v44
  %v193 = vunpack.c.l.b16 %v45
  %v194 = vunpack.c.l.b16 %v46
  %v195 = vunpack.c.l.b16 %v47
  %v196 = vunpack.c.l.b16 %v48
  %v197 = vunpack.c.l.b16 %v49
  %v198 = vunpack.c.l.b16 %v50
  %v199 = vunpack.c.l.b16 %v51
  %v200 = vunpack.c.l.b16 %v52
  %v201 = vunpack.c.l.b16 %v53
  %v202 = vunpack.c.l.b16 %v54
  %v203 = vunpack.c.l.b16 %v55
  %v204 = vunpack.c.l.b16 %v56
  %v205 = vunpack.c.l.b16 %v57
  %v206 = vunpack.c.l.b16 %v58
  %v207 = vunpack.c.l.b16 %v59
  %v208 = vunpack.c.l.b16 %v60
  %v209 = vunpack.c.l.b16 %v61
  %v210 = vunpack.c.l.b16 %v62
  %v211 = vunpack.c.l.b16 %v63
  %v212 = vunpack.c.l.b16 %v64
  %v213 = vunpack.c.l.b16 %v65
  %v214 = vunpack.c.l.b16 %v66
  %v215 = vunpack.c.l.b16 %v67
  %v216 = vunpack.c.l.b16 %v68
  %v217 = vunpack.c.l.b16 %v69
  %v218 = vunpack.c.l.b16 %v70
  %v219 = vunpack.c.l.b16 %v71
  %v220 = vunpack.c.l.b16 %v72
  %v221 = vunpack.c.l.b16 %v73
  %v222 = vunpack.c.l.b16 %v74
  %v223 = vunpack.c.l.b16 %v75
  %v224 = vunpack.c.l.b16 %v76
  %v225 = vunpack.c.l.b16 %v77
  %v226 = vunpack.c.l.b16 %v78
  %v227 = vunpack.c.l.b16 %v79
  %v228 = vunpack.c.l.b16 %v80
  %v229 = vunpack.c.l.b16 %v81
  %v230 = vunpack.c.l.b16 %v82
  %v231 = vpack.c.b16 %v168, %v167
  %v232 = vpack.c.b16 %v170, %v169
  %v233 = vpack.c.b16 %v172, %v171
  %v234 = vpack.c.b16 %v174, %v173
  %v235 = vpack.c.b16 %v176, %v175
  %v236 = vpack.c.b16 %v178, %v177
  %v237 = vpack.c.b16 %v180, %v179
  %v238 = vpack.c.b16 %v182, %v181
  %v239 = vpack.c.b16 %v184, %v183
  %v240 = vpack.c.b16 %v186, %v185
  %v241 = vpack.c.b16 %v188, %v187
  %v242 = vpack.c.b16 %v190, %v189
  %v243 = vpack.c.b16 %v192, %v191
  %v244 = vpack.c.b16 %v194, %v193
  %v245 = vpack.c.b16 %v196, %v195
  %v246 = vpack.c.b16 %v198, %v197
  %v247 = vpack.c.b16 %v200, %v199
  %v248 = vpack.c.b16 %v202, %v201
  %v249 = vpack.c.b16 %v204, %v203
  %v250 = vpack.c.b16 %v206, %v205
  %v251 = vpack.c.b16 %v208, %v207
  %v252 = vpack.c.b16 %v210, %v209
  %v253 = vpack.c.b16 %v212, %v211
  %v254 = vpack.c.b16 %v214, %v213
  %v255 = vpack.c.b16 %v216, %v215
  %v256 = vpack.c.b16 %v218, %v217
  %v257 = vpack.c.b16 %v220, %v219
  %v258 = vpack.c.b16 %v222, %v221
  %v259 = vpack.c.b16 %v224, %v223
  %v260 = vpack.c.b16 %v226, %v225
  %v261 = vpack.c.b16 %v228, %v227
  %v262 = vpack.c.b16 %v230, %v229
  %295 = vmatprep.subr.bf16.mxu0 0
  %296 = vmatpush1.bf16.msra.mxu0 %v238
  %297 = vmatprep.subr.bf16.mxu0 0
  %298 = vmatpush1.bf16.msra.mxu0 %v237
  %299 = vmatprep.subr.bf16.mxu0 0
  %300 = vmatpush1.bf16.msra.mxu0 %v236
  %301 = vmatprep.subr.bf16.mxu0 0
  %302 = vmatpush1.bf16.msra.mxu0 %v235
  %303 = vmatprep.subr.bf16.mxu0 0
  %304 = vmatpush1.bf16.msra.mxu0 %v234
  %305 = vmatprep.subr.bf16.mxu0 0
  %306 = vmatpush1.bf16.msra.mxu0 %v233
  %307 = vmatprep.subr.bf16.mxu0 0
  %308 = vmatpush1.bf16.msra.mxu0 %v232
  %309 = vmatprep.subr.bf16.mxu0 0
  %310 = vmatpush1.bf16.msra.mxu0 %v231
  %311 = vmatprep.subr.bf16.mxu0 0
  %312 = vmatpush2.bf16.msra.mxu0 %v246
  %313 = vmatprep.subr.bf16.mxu0 0
  %314 = vmatpush2.bf16.msra.mxu0 %v245
  %315 = vmatprep.subr.bf16.mxu0 0
  %316 = vmatpush2.bf16.msra.mxu0 %v244
  %317 = vmatprep.subr.bf16.mxu0 0
  %318 = vmatpush2.bf16.msra.mxu0 %v243
  %319 = vmatprep.subr.bf16.mxu0 0
  %320 = vmatpush2.bf16.msra.mxu0 %v242
  %321 = vmatprep.subr.bf16.mxu0 0
  %322 = vmatpush2.bf16.msra.mxu0 %v241
  %323 = vmatprep.subr.bf16.mxu0 0
  %324 = vmatpush2.bf16.msra.mxu0 %v240
  %325 = vmatprep.subr.bf16.mxu0 0
  %326 = vmatpush2.bf16.msra.mxu0 %v239
  %327 = vmatprep.mubr.bf16.mxu0 %v96
  %328 = vmatmul.mubr.bf16.gmra.mxu0 %v95
  %v329 = vpop.f32.mrf.mxu0
  %v330 = vadd.f32 0.0, %v329
  %v331 = vpop.f32.mrf.mxu0
  %v332 = vpop.f32.mrf.mxu0
  %v333 = vadd.f32 0.0, %v332
  %v334 = vpop.f32.mrf.mxu0
  %335 = vdwg.mxu0
  %336 = vmatprep.subr.bf16.mxu0 0
  %337 = vmatpush1.bf16.msra.mxu0 %v254
  %338 = vmatprep.subr.bf16.mxu0 0
  %339 = vmatpush1.bf16.msra.mxu0 %v253
  %340 = vmatprep.subr.bf16.mxu0 0
  %341 = vmatpush1.bf16.msra.mxu0 %v252
  %342 = vmatprep.subr.bf16.mxu0 0
  %343 = vmatpush1.bf16.msra.mxu0 %v251
  %344 = vmatprep.subr.bf16.mxu0 0
  %345 = vmatpush1.bf16.msra.mxu0 %v250
  %346 = vmatprep.subr.bf16.mxu0 0
  %347 = vmatpush1.bf16.msra.mxu0 %v249
  %348 = vmatprep.subr.bf16.mxu0 0
  %349 = vmatpush1.bf16.msra.mxu0 %v248
  %350 = vmatprep.subr.bf16.mxu0 0
  %351 = vmatpush1.bf16.msra.mxu0 %v247
  %352 = vmatprep.subr.bf16.mxu0 0
  %353 = vmatpush2.bf16.msra.mxu0 %v262
  %354 = vmatprep.subr.bf16.mxu0 0
  %355 = vmatpush2.bf16.msra.mxu0 %v261
  %356 = vmatprep.subr.bf16.mxu0 0
  %357 = vmatpush2.bf16.msra.mxu0 %v260
  %358 = vmatprep.subr.bf16.mxu0 0
  %359 = vmatpush2.bf16.msra.mxu0 %v259
  %360 = vmatprep.subr.bf16.mxu0 0
  %361 = vmatpush2.bf16.msra.mxu0 %v258
  %362 = vmatprep.subr.bf16.mxu0 0
  %363 = vmatpush2.bf16.msra.mxu0 %v257
  %364 = vmatprep.subr.bf16.mxu0 0
  %365 = vmatpush2.bf16.msra.mxu0 %v256
  %366 = vmatprep.subr.bf16.mxu0 0
  %367 = vmatpush2.bf16.msra.mxu0 %v255
  %368 = vmatprep.mubr.bf16.mxu0 %v98
  %369 = vmatmul.mubr.bf16.gmra.mxu0 %v97
  %v370 = vpop.f32.mrf.mxu0
  %v371 = vadd.f32 %v330, %v370
  %v372 = vpop.f32.mrf.mxu0
  %v373 = vpop.f32.mrf.mxu0
  %v374 = vadd.f32 %v333, %v373
  %v375 = vpop.f32.mrf.mxu0
  %376 = vdwg.mxu0
  %v377 = vld [vmem:[%s2] sm:$0xf]
  %v378 = vld [vmem:[%s2 + $0x4] sm:$0xf]
  %v379 = vunpack.c.l.bf16 %v377
  %v380 = vunpack.c.l.bf16 %v378
  %v381 = vmul.f32 %v371, 4.2426405
  %v382 = vmul.f32 %v374, 4.2426405
  %v383 = vadd.f32 %v379, %v381
  %v384 = vadd.f32 %v380, %v382
  %v385 = vpack.c.bf16 %v384, %v383
  %v387 = vunpack.c.l.b16 %v385
  %v388 = vunpack.c.h.b16 %v385
  %v389 = vpack.c.b16 %v387, %v387
  %v390 = vpack.c.b16 %v388, %v388
  %393 = vst [vmem:[%s3] sm:$0xf] %v389
  %394 = vst [vmem:[%s3 + $0x4] sm:$0xf] %v390
  // Predicated region
  $region14: #{esmc_forward.20} parent=0 // pred_check
    _
  $region15: #{esmc_forward.20} parent=0 // pred_check_branch
    %396 = sbr.rel (0) target = $region17
  $region16: #{esmc_forward.20} parent=0 // pred_region
    _
  $region17: #{esmc_forward.20} parent=0 // pred_fallthru
    _
  // Predicated region
  $region18: #{esmc_forward.20} parent=0 // pred_check
    _
  $region19: #{esmc_forward.20} parent=0 // pred_check_branch
    %398 = sbr.rel (0) target = $region21
  $region20: #{esmc_forward.20} parent=0 // pred_region
    _
  $region21: #{esmc_forward.20} parent=0 // pred_fallthru
    _

// kernel: esmc_forward.19
$region0: #{esmc_forward.19}
  #allocation0 [shape = 'u32[]', space=smem, size = 0x4, offset = 0x4, fixed_abs, tag = 'smem constant byte address 0x4 - core index']
  #allocation1 [shape = 'u32[144,128]{1,0:T(1,128)}', space=vmem, size = 0x12000, scoped, tag = 'internal scratch']
  #allocation2 [shape = 'bf16[16,128]{1,0:T(8,128)(2,1)}', space=vmem, size = 0x1000, scoped, tag = 'scratch operand']
  %s0 = inlined_call_operand.vmem [shape: bf16[16,128], index: 0, kind: input, shape index: {}]
  %s1 = inlined_call_operand.vmem [shape: f32[1,128], index: 1, kind: input, shape index: {}]
  %s2 = inlined_call_operand.vmem [shape: f32[1,128], index: 2, kind: input, shape index: {}]
  %s3 = inlined_call_operand.vmem [shape: bf16[128,512], index: 3, kind: input, shape index: {}]
  %s4 = inlined_call_operand.vmem [shape: bf16[128,512], index: 4, kind: input, shape index: {}]
  %s5 = inlined_call_operand.vmem [shape: bf16[16,512], index: 5, kind: output, shape index: {}]
  %s6 = sld [smem:[#allocation0]]
  $region34: #{esmc_forward.19} parent=0
    _
  %s8 = ssub.s32 1, %s6
  %s9 = scalar_select 0, %s8, %s6
  // Predicated region
  $region2: #{esmc_forward.19} parent=0 // pred_check
    _
  $region3: #{esmc_forward.19} parent=0 // pred_check_branch
    %11 = sbr.rel (0) target = $region5
  $region4: #{esmc_forward.19} parent=0 // pred_region
    _
  $region5: #{esmc_forward.19} parent=0 // pred_fallthru
    _
  // Predicated region
  $region6: #{esmc_forward.19} parent=0 // pred_check
    _
  $region7: #{esmc_forward.19} parent=0 // pred_check_branch
    %13 = sbr.rel (0) target = $region9
  $region8: #{esmc_forward.19} parent=0 // pred_region
    _
  $region9: #{esmc_forward.19} parent=0 // pred_fallthru
    _
  // Predicated region
  $region10: #{esmc_forward.19} parent=0 // pred_check
    _
  $region11: #{esmc_forward.19} parent=0 // pred_check_branch
    %15 = sbr.rel (0) target = $region13
  $region12: #{esmc_forward.19} parent=0 // pred_region
    _
  $region13: #{esmc_forward.19} parent=0 // pred_fallthru
    _
  // Predicated region
  $region14: #{esmc_forward.19} parent=0 // pred_check
    _
  $region15: #{esmc_forward.19} parent=0 // pred_check_branch
    %17 = sbr.rel (0) target = $region17
  $region16: #{esmc_forward.19} parent=0 // pred_region
    _
  $region17: #{esmc_forward.19} parent=0 // pred_fallthru
    _
  // Predicated region
  $region18: #{esmc_forward.19} parent=0 // pred_check
    _
  $region19: #{esmc_forward.19} parent=0 // pred_check_branch
    %19 = sbr.rel (0) target = $region21
  $region20: #{esmc_forward.19} parent=0 // pred_region
    _
  $region21: #{esmc_forward.19} parent=0 // pred_fallthru
    _
  %p21 = scmp.eq.s32.totalorder 0, 0
  // Predicated region
  $region22: #{esmc_forward.19} parent=0 // pred_check
    %p22 = pneg %p21
  $region23: #{esmc_forward.19} parent=0 // pred_check_branch
    %24 = sbr.rel (%p22) target = $region25
  $region24: #{esmc_forward.19} parent=0 // pred_region
    %v25 = vld [vmem:[%s0] sm:$0xf]
    %v26 = vld [vmem:[%s0 + $0x4] sm:$0xf]
    %v27 = vunpack.c.l.bf16 %v25
    %v28 = vunpack.c.l.bf16 %v26
    %29 = vadd.xlane.f32.xlu0 %v27
    %v30 = vpop.xlane.xlu0 %29
    %31 = vadd.xlane.f32.xlu0 %v28
    %v32 = vpop.xlane.xlu0 %31
    %v33 = vrcp.pop 128.0
    %v34 = vmul.f32 %v30, %v33
    %v35 = vmul.f32 %v32, %v33
    %v36 = vsub.f32 %v27, %v34
    %v37 = vsub.f32 %v28, %v35
    %v38 = vmul.f32 %v36, %v36
    %v39 = vmul.f32 %v37, %v37
    %40 = vadd.xlane.f32.xlu0 %v38
    %v41 = vpop.xlane.xlu0 %40
    %42 = vadd.xlane.f32.xlu0 %v39
    %v43 = vpop.xlane.xlu0 %42
    %v44 = vmul.f32 %v41, %v33
    %v45 = vmul.f32 %v43, %v33
    %v46 = vadd.f32 %v44, 1e-05
    %v47 = vadd.f32 %v45, 1e-05
    %v48 = vrsqrt.pop %v46
    %v49 = vrsqrt.pop %v47
    %v50 = vmul.f32 %v36, %v48
    %v51 = vmul.f32 %v37, %v49
    %v52 = vld [vmem:[%s1] sm:$0x1]
    %v54 = vlaneseq
    %v55 = vshrl.u32 %v54, 7
    %v56 = vsub.s32 0, %v55
    %v57 = vrot.slane %v52, %v56
    %v59 = vmul.f32 %v50, %v57
    %v60 = vmul.f32 %v51, %v57
    %v61 = vld [vmem:[%s2] sm:$0x1]
    %v63 = vlaneseq
    %v64 = vshrl.u32 %v63, 7
    %v65 = vsub.s32 0, %v64
    %v66 = vrot.slane %v61, %v65
    %v68 = vadd.f32 %v59, %v66
    %v69 = vadd.f32 %v60, %v66
    %v70 = vpack.c.bf16 %v69, %v68
    %v72 = vunpack.c.l.b16 %v70
    %v73 = vunpack.c.h.b16 %v70
    %v74 = vpack.c.b16 %v72, %v72
    %v75 = vpack.c.b16 %v73, %v73
    %78 = vst [vmem:[#allocation2] sm:$0xf] %v74
    %79 = vst [vmem:[#allocation2 + $0x4] sm:$0xf] %v75
  $region25: #{esmc_forward.19} parent=0 // pred_fallthru
    _
  %v80 = vld [vmem:[#allocation2] sm:$0xf]
  %v81 = vld [vmem:[#allocation2 + $0x4] sm:$0xf]
  %v82 = vld [vmem:[%s3] sm:$0xff]
  %v83 = vld [vmem:[%s3 + $0x8] sm:$0xff]
  %v84 = vld [vmem:[%s3 + $0x10] sm:$0xff]
  %v85 = vld [vmem:[%s3 + $0x18] sm:$0xff]
  %v86 = vld [vmem:[%s3 + $0x20] sm:$0xff]
  %v87 = vld [vmem:[%s3 + $0x28] sm:$0xff]
  %v88 = vld [vmem:[%s3 + $0x30] sm:$0xff]
  %v89 = vld [vmem:[%s3 + $0x38] sm:$0xff]
  %v90 = vld [vmem:[%s3 + $0x40] sm:$0xff]
  %v91 = vld [vmem:[%s3 + $0x48] sm:$0xff]
  %v92 = vld [vmem:[%s3 + $0x50] sm:$0xff]
  %v93 = vld [vmem:[%s3 + $0x58] sm:$0xff]
  %v94 = vld [vmem:[%s3 + $0x60] sm:$0xff]
  %v95 = vld [vmem:[%s3 + $0x68] sm:$0xff]
  %v96 = vld [vmem:[%s3 + $0x70] sm:$0xff]
  %v97 = vld [vmem:[%s3 + $0x78] sm:$0xff]
  %v98 = vld [vmem:[%s3 + $0x80] sm:$0xff]
  %v99 = vld [vmem:[%s3 + $0x88] sm:$0xff]
  %v100 = vld [vmem:[%s3 + $0x90] sm:$0xff]
  %v101 = vld [vmem:[%s3 + $0x98] sm:$0xff]
  %v102 = vld [vmem:[%s3 + $0xa0] sm:$0xff]
  %v103 = vld [vmem:[%s3 + $0xa8] sm:$0xff]
  %v104 = vld [vmem:[%s3 + $0xb0] sm:$0xff]
  %v105 = vld [vmem:[%s3 + $0xb8] sm:$0xff]
  %v106 = vld [vmem:[%s3 + $0xc0] sm:$0xff]
  %v107 = vld [vmem:[%s3 + $0xc8] sm:$0xff]
  %v108 = vld [vmem:[%s3 + $0xd0] sm:$0xff]
  %v109 = vld [vmem:[%s3 + $0xd8] sm:$0xff]
  %v110 = vld [vmem:[%s3 + $0xe0] sm:$0xff]
  %v111 = vld [vmem:[%s3 + $0xe8] sm:$0xff]
  %v112 = vld [vmem:[%s3 + $0xf0] sm:$0xff]
  %v113 = vld [vmem:[%s3 + $0xf8] sm:$0xff]
  %v116 = vunpack.c.l.b16 %v80
  %v117 = vunpack.c.l.b16 %v81
  %v118 = vpack.c.b16 %v117, %v116
  %v152 = vunpack.c.l.b16 %v82
  %v153 = vunpack.c.h.b16 %v82
  %v154 = vunpack.c.l.b16 %v83
  %v155 = vunpack.c.h.b16 %v83
  %v156 = vunpack.c.l.b16 %v84
  %v157 = vunpack.c.h.b16 %v84
  %v158 = vunpack.c.l.b16 %v85
  %v159 = vunpack.c.h.b16 %v85
  %v160 = vunpack.c.l.b16 %v86
  %v161 = vunpack.c.h.b16 %v86
  %v162 = vunpack.c.l.b16 %v87
  %v163 = vunpack.c.h.b16 %v87
  %v164 = vunpack.c.l.b16 %v88
  %v165 = vunpack.c.h.b16 %v88
  %v166 = vunpack.c.l.b16 %v89
  %v167 = vunpack.c.h.b16 %v89
  %v168 = vunpack.c.l.b16 %v90
  %v169 = vunpack.c.h.b16 %v90
  %v170 = vunpack.c.l.b16 %v91
  %v171 = vunpack.c.h.b16 %v91
  %v172 = vunpack.c.l.b16 %v92
  %v173 = vunpack.c.h.b16 %v92
  %v174 = vunpack.c.l.b16 %v93
  %v175 = vunpack.c.h.b16 %v93
  %v176 = vunpack.c.l.b16 %v94
  %v177 = vunpack.c.h.b16 %v94
  %v178 = vunpack.c.l.b16 %v95
  %v179 = vunpack.c.h.b16 %v95
  %v180 = vunpack.c.l.b16 %v96
  %v181 = vunpack.c.h.b16 %v96
  %v182 = vunpack.c.l.b16 %v97
  %v183 = vunpack.c.h.b16 %v97
  %v184 = vunpack.c.l.b16 %v98
  %v185 = vunpack.c.h.b16 %v98
  %v186 = vunpack.c.l.b16 %v99
  %v187 = vunpack.c.h.b16 %v99
  %v188 = vunpack.c.l.b16 %v100
  %v189 = vunpack.c.h.b16 %v100
  %v190 = vunpack.c.l.b16 %v101
  %v191 = vunpack.c.h.b16 %v101
  %v192 = vunpack.c.l.b16 %v102
  %v193 = vunpack.c.h.b16 %v102
  %v194 = vunpack.c.l.b16 %v103
  %v195 = vunpack.c.h.b16 %v103
  %v196 = vunpack.c.l.b16 %v104
  %v197 = vunpack.c.h.b16 %v104
  %v198 = vunpack.c.l.b16 %v105
  %v199 = vunpack.c.h.b16 %v105
  %v200 = vunpack.c.l.b16 %v106
  %v201 = vunpack.c.h.b16 %v106
  %v202 = vunpack.c.l.b16 %v107
  %v203 = vunpack.c.h.b16 %v107
  %v204 = vunpack.c.l.b16 %v108
  %v205 = vunpack.c.h.b16 %v108
  %v206 = vunpack.c.l.b16 %v109
  %v207 = vunpack.c.h.b16 %v109
  %v208 = vunpack.c.l.b16 %v110
  %v209 = vunpack.c.h.b16 %v110
  %v210 = vunpack.c.l.b16 %v111
  %v211 = vunpack.c.h.b16 %v111
  %v212 = vunpack.c.l.b16 %v112
  %v213 = vunpack.c.h.b16 %v112
  %v214 = vunpack.c.l.b16 %v113
  %v215 = vunpack.c.h.b16 %v113
  %v216 = vpack.c.b16 %v156, %v152
  %v217 = vpack.c.b16 %v157, %v153
  %v218 = vpack.c.b16 %v158, %v154
  %v219 = vpack.c.b16 %v159, %v155
  %v220 = vpack.c.b16 %v164, %v160
  %v221 = vpack.c.b16 %v165, %v161
  %v222 = vpack.c.b16 %v166, %v162
  %v223 = vpack.c.b16 %v167, %v163
  %v224 = vpack.c.b16 %v172, %v168
  %v225 = vpack.c.b16 %v173, %v169
  %v226 = vpack.c.b16 %v174, %v170
  %v227 = vpack.c.b16 %v175, %v171
  %v228 = vpack.c.b16 %v180, %v176
  %v229 = vpack.c.b16 %v181, %v177
  %v230 = vpack.c.b16 %v182, %v178
  %v231 = vpack.c.b16 %v183, %v179
  %v232 = vpack.c.b16 %v188, %v184
  %v233 = vpack.c.b16 %v189, %v185
  %v234 = vpack.c.b16 %v190, %v186
  %v235 = vpack.c.b16 %v191, %v187
  %v236 = vpack.c.b16 %v196, %v192
  %v237 = vpack.c.b16 %v197, %v193
  %v238 = vpack.c.b16 %v198, %v194
  %v239 = vpack.c.b16 %v199, %v195
  %v240 = vpack.c.b16 %v204, %v200
  %v241 = vpack.c.b16 %v205, %v201
  %v242 = vpack.c.b16 %v206, %v202
  %v243 = vpack.c.b16 %v207, %v203
  %v244 = vpack.c.b16 %v212, %v208
  %v245 = vpack.c.b16 %v213, %v209
  %v246 = vpack.c.b16 %v214, %v210
  %v247 = vpack.c.b16 %v215, %v211
  %280 = vmatprep.subr.bf16.mxu0 %v245
  %281 = vmatpush1.bf16.msra.mxu0 %v244
  %282 = vmatprep.subr.bf16.mxu0 %v241
  %283 = vmatpush1.bf16.msra.mxu0 %v240
  %284 = vmatprep.subr.bf16.mxu0 %v237
  %285 = vmatpush1.bf16.msra.mxu0 %v236
  %286 = vmatprep.subr.bf16.mxu0 %v233
  %287 = vmatpush1.bf16.msra.mxu0 %v232
  %288 = vmatprep.subr.bf16.mxu0 %v229
  %289 = vmatpush1.bf16.msra.mxu0 %v228
  %290 = vmatprep.subr.bf16.mxu0 %v225
  %291 = vmatpush1.bf16.msra.mxu0 %v224
  %292 = vmatprep.subr.bf16.mxu0 %v221
  %293 = vmatpush1.bf16.msra.mxu0 %v220
  %294 = vmatprep.subr.bf16.mxu0 %v217
  %295 = vmatpush1.bf16.msra.mxu0 %v216
  %296 = vmatprep.subr.bf16.mxu0 0
  %297 = vmatpush2.bf16.msra.mxu0 0
  %298 = vmatprep.subr.bf16.mxu0 0
  %299 = vmatpush2.bf16.msra.mxu0 0
  %300 = vmatprep.subr.bf16.mxu0 0
  %301 = vmatpush2.bf16.msra.mxu0 0
  %302 = vmatprep.subr.bf16.mxu0 0
  %303 = vmatpush2.bf16.msra.mxu0 0
  %304 = vmatprep.subr.bf16.mxu0 0
  %305 = vmatpush2.bf16.msra.mxu0 0
  %306 = vmatprep.subr.bf16.mxu0 0
  %307 = vmatpush2.bf16.msra.mxu0 0
  %308 = vmatprep.subr.bf16.mxu0 0
  %309 = vmatpush2.bf16.msra.mxu0 0
  %310 = vmatprep.subr.bf16.mxu0 0
  %311 = vmatpush2.bf16.msra.mxu0 0
  %312 = vmatprep.mubr.bf16.mxu0 0
  %313 = vmatmul.mubr.bf16.gmra.mxu0 %v118
  %v314 = vpop.f32.mrf.mxu0
  %v315 = vadd.f32 0.0, %v314
  %v316 = vpop.f32.mrf.mxu0
  %v317 = vadd.f32 0.0, %v316
  %v318 = vpop.f32.mrf.mxu0
  %v319 = vadd.f32 0.0, %v318
  %v320 = vpop.f32.mrf.mxu0
  %v321 = vadd.f32 0.0, %v320
  %322 = vdwg.mxu0
  %323 = vmatprep.subr.bf16.mxu0 %v247
  %324 = vmatpush1.bf16.msra.mxu0 %v246
  %325 = vmatprep.subr.bf16.mxu0 %v243
  %326 = vmatpush1.bf16.msra.mxu0 %v242
  %327 = vmatprep.subr.bf16.mxu0 %v239
  %328 = vmatpush1.bf16.msra.mxu0 %v238
  %329 = vmatprep.subr.bf16.mxu0 %v235
  %330 = vmatpush1.bf16.msra.mxu0 %v234
  %331 = vmatprep.subr.bf16.mxu0 %v231
  %332 = vmatpush1.bf16.msra.mxu0 %v230
  %333 = vmatprep.subr.bf16.mxu0 %v227
  %334 = vmatpush1.bf16.msra.mxu0 %v226
  %335 = vmatprep.subr.bf16.mxu0 %v223
  %336 = vmatpush1.bf16.msra.mxu0 %v222
  %337 = vmatprep.subr.bf16.mxu0 %v219
  %338 = vmatpush1.bf16.msra.mxu0 %v218
  %339 = vmatprep.subr.bf16.mxu0 0
  %340 = vmatpush2.bf16.msra.mxu0 0
  %341 = vmatprep.subr.bf16.mxu0 0
  %342 = vmatpush2.bf16.msra.mxu0 0
  %343 = vmatprep.subr.bf16.mxu0 0
  %344 = vmatpush2.bf16.msra.mxu0 0
  %345 = vmatprep.subr.bf16.mxu0 0
  %346 = vmatpush2.bf16.msra.mxu0 0
  %347 = vmatprep.subr.bf16.mxu0 0
  %348 = vmatpush2.bf16.msra.mxu0 0
  %349 = vmatprep.subr.bf16.mxu0 0
  %350 = vmatpush2.bf16.msra.mxu0 0
  %351 = vmatprep.subr.bf16.mxu0 0
  %352 = vmatpush2.bf16.msra.mxu0 0
  %353 = vmatprep.subr.bf16.mxu0 0
  %354 = vmatpush2.bf16.msra.mxu0 0
  %355 = vmatprep.mubr.bf16.mxu0 0
  %356 = vmatmul.mubr.bf16.gmra.mxu0 %v118
  %v357 = vpop.f32.mrf.mxu0
  %v358 = vadd.f32 0.0, %v357
  %v359 = vpop.f32.mrf.mxu0
  %v360 = vadd.f32 0.0, %v359
  %v361 = vpop.f32.mrf.mxu0
  %v362 = vadd.f32 0.0, %v361
  %v363 = vpop.f32.mrf.mxu0
  %v364 = vadd.f32 0.0, %v363
  %365 = vdwg.mxu0
  %v366 = vld [vmem:[%s4] sm:$0xff]
  %v367 = vld [vmem:[%s4 + $0x8] sm:$0xff]
  %v368 = vld [vmem:[%s4 + $0x10] sm:$0xff]
  %v369 = vld [vmem:[%s4 + $0x18] sm:$0xff]
  %v370 = vld [vmem:[%s4 + $0x20] sm:$0xff]
  %v371 = vld [vmem:[%s4 + $0x28] sm:$0xff]
  %v372 = vld [vmem:[%s4 + $0x30] sm:$0xff]
  %v373 = vld [vmem:[%s4 + $0x38] sm:$0xff]
  %v374 = vld [vmem:[%s4 + $0x40] sm:$0xff]
  %v375 = vld [vmem:[%s4 + $0x48] sm:$0xff]
  %v376 = vld [vmem:[%s4 + $0x50] sm:$0xff]
  %v377 = vld [vmem:[%s4 + $0x58] sm:$0xff]
  %v378 = vld [vmem:[%s4 + $0x60] sm:$0xff]
  %v379 = vld [vmem:[%s4 + $0x68] sm:$0xff]
  %v380 = vld [vmem:[%s4 + $0x70] sm:$0xff]
  %v381 = vld [vmem:[%s4 + $0x78] sm:$0xff]
  %v382 = vld [vmem:[%s4 + $0x80] sm:$0xff]
  %v383 = vld [vmem:[%s4 + $0x88] sm:$0xff]
  %v384 = vld [vmem:[%s4 + $0x90] sm:$0xff]
  %v385 = vld [vmem:[%s4 + $0x98] sm:$0xff]
  %v386 = vld [vmem:[%s4 + $0xa0] sm:$0xff]
  %v387 = vld [vmem:[%s4 + $0xa8] sm:$0xff]
  %v388 = vld [vmem:[%s4 + $0xb0] sm:$0xff]
  %v389 = vld [vmem:[%s4 + $0xb8] sm:$0xff]
  %v390 = vld [vmem:[%s4 + $0xc0] sm:$0xff]
  %v391 = vld [vmem:[%s4 + $0xc8] sm:$0xff]
  %v392 = vld [vmem:[%s4 + $0xd0] sm:$0xff]
  %v393 = vld [vmem:[%s4 + $0xd8] sm:$0xff]
  %v394 = vld [vmem:[%s4 + $0xe0] sm:$0xff]
  %v395 = vld [vmem:[%s4 + $0xe8] sm:$0xff]
  %v396 = vld [vmem:[%s4 + $0xf0] sm:$0xff]
  %v397 = vld [vmem:[%s4 + $0xf8] sm:$0xff]
  %v430 = vunpack.c.l.b16 %v366
  %v431 = vunpack.c.h.b16 %v366
  %v432 = vunpack.c.l.b16 %v367
  %v433 = vunpack.c.h.b16 %v367
  %v434 = vunpack.c.l.b16 %v368
  %v435 = vunpack.c.h.b16 %v368
  %v436 = vunpack.c.l.b16 %v369
  %v437 = vunpack.c.h.b16 %v369
  %v438 = vunpack.c.l.b16 %v370
  %v439 = vunpack.c.h.b16 %v370
  %v440 = vunpack.c.l.b16 %v371
  %v441 = vunpack.c.h.b16 %v371
  %v442 = vunpack.c.l.b16 %v372
  %v443 = vunpack.c.h.b16 %v372
  %v444 = vunpack.c.l.b16 %v373
  %v445 = vunpack.c.h.b16 %v373
  %v446 = vunpack.c.l.b16 %v374
  %v447 = vunpack.c.h.b16 %v374
  %v448 = vunpack.c.l.b16 %v375
  %v449 = vunpack.c.h.b16 %v375
  %v450 = vunpack.c.l.b16 %v376
  %v451 = vunpack.c.h.b16 %v376
  %v452 = vunpack.c.l.b16 %v377
  %v453 = vunpack.c.h.b16 %v377
  %v454 = vunpack.c.l.b16 %v378
  %v455 = vunpack.c.h.b16 %v378
  %v456 = vunpack.c.l.b16 %v379
  %v457 = vunpack.c.h.b16 %v379
  %v458 = vunpack.c.l.b16 %v380
  %v459 = vunpack.c.h.b16 %v380
  %v460 = vunpack.c.l.b16 %v381
  %v461 = vunpack.c.h.b16 %v381
  %v462 = vunpack.c.l.b16 %v382
  %v463 = vunpack.c.h.b16 %v382
  %v464 = vunpack.c.l.b16 %v383
  %v465 = vunpack.c.h.b16 %v383
  %v466 = vunpack.c.l.b16 %v384
  %v467 = vunpack.c.h.b16 %v384
  %v468 = vunpack.c.l.b16 %v385
  %v469 = vunpack.c.h.b16 %v385
  %v470 = vunpack.c.l.b16 %v386
  %v471 = vunpack.c.h.b16 %v386
  %v472 = vunpack.c.l.b16 %v387
  %v473 = vunpack.c.h.b16 %v387
  %v474 = vunpack.c.l.b16 %v388
  %v475 = vunpack.c.h.b16 %v388
  %v476 = vunpack.c.l.b16 %v389
  %v477 = vunpack.c.h.b16 %v389
  %v478 = vunpack.c.l.b16 %v390
  %v479 = vunpack.c.h.b16 %v390
  %v480 = vunpack.c.l.b16 %v391
  %v481 = vunpack.c.h.b16 %v391
  %v482 = vunpack.c.l.b16 %v392
  %v483 = vunpack.c.h.b16 %v392
  %v484 = vunpack.c.l.b16 %v393
  %v485 = vunpack.c.h.b16 %v393
  %v486 = vunpack.c.l.b16 %v394
  %v487 = vunpack.c.h.b16 %v394
  %v488 = vunpack.c.l.b16 %v395
  %v489 = vunpack.c.h.b16 %v395
  %v490 = vunpack.c.l.b16 %v396
  %v491 = vunpack.c.h.b16 %v396
  %v492 = vunpack.c.l.b16 %v397
  %v493 = vunpack.c.h.b16 %v397
  %v494 = vpack.c.b16 %v434, %v430
  %v495 = vpack.c.b16 %v435, %v431
  %v496 = vpack.c.b16 %v436, %v432
  %v497 = vpack.c.b16 %v437, %v433
  %v498 = vpack.c.b16 %v442, %v438
  %v499 = vpack.c.b16 %v443, %v439
  %v500 = vpack.c.b16 %v444, %v440
  %v501 = vpack.c.b16 %v445, %v441
  %v502 = vpack.c.b16 %v450, %v446
  %v503 = vpack.c.b16 %v451, %v447
  %v504 = vpack.c.b16 %v452, %v448
  %v505 = vpack.c.b16 %v453, %v449
  %v506 = vpack.c.b16 %v458, %v454
  %v507 = vpack.c.b16 %v459, %v455
  %v508 = vpack.c.b16 %v460, %v456
  %v509 = vpack.c.b16 %v461, %v457
  %v510 = vpack.c.b16 %v466, %v462
  %v511 = vpack.c.b16 %v467, %v463
  %v512 = vpack.c.b16 %v468, %v464
  %v513 = vpack.c.b16 %v469, %v465
  %v514 = vpack.c.b16 %v474, %v470
  %v515 = vpack.c.b16 %v475, %v471
  %v516 = vpack.c.b16 %v476, %v472
  %v517 = vpack.c.b16 %v477, %v473
  %v518 = vpack.c.b16 %v482, %v478
  %v519 = vpack.c.b16 %v483, %v479
  %v520 = vpack.c.b16 %v484, %v480
  %v521 = vpack.c.b16 %v485, %v481
  %v522 = vpack.c.b16 %v490, %v486
  %v523 = vpack.c.b16 %v491, %v487
  %v524 = vpack.c.b16 %v492, %v488
  %v525 = vpack.c.b16 %v493, %v489
  %558 = vmatprep.subr.bf16.mxu0 %v523
  %559 = vmatpush1.bf16.msra.mxu0 %v522
  %560 = vmatprep.subr.bf16.mxu0 %v519
  %561 = vmatpush1.bf16.msra.mxu0 %v518
  %562 = vmatprep.subr.bf16.mxu0 %v515
  %563 = vmatpush1.bf16.msra.mxu0 %v514
  %564 = vmatprep.subr.bf16.mxu0 %v511
  %565 = vmatpush1.bf16.msra.mxu0 %v510
  %566 = vmatprep.subr.bf16.mxu0 %v507
  %567 = vmatpush1.bf16.msra.mxu0 %v506
  %568 = vmatprep.subr.bf16.mxu0 %v503
  %569 = vmatpush1.bf16.msra.mxu0 %v502
  %570 = vmatprep.subr.bf16.mxu0 %v499
  %571 = vmatpush1.bf16.msra.mxu0 %v498
  %572 = vmatprep.subr.bf16.mxu0 %v495
  %573 = vmatpush1.bf16.msra.mxu0 %v494
  %574 = vmatprep.subr.bf16.mxu0 0
  %575 = vmatpush2.bf16.msra.mxu0 0
  %576 = vmatprep.subr.bf16.mxu0 0
  %577 = vmatpush2.bf16.msra.mxu0 0
  %578 = vmatprep.subr.bf16.mxu0 0
  %579 = vmatpush2.bf16.msra.mxu0 0
  %580 = vmatprep.subr.bf16.mxu0 0
  %581 = vmatpush2.bf16.msra.mxu0 0
  %582 = vmatprep.subr.bf16.mxu0 0
  %583 = vmatpush2.bf16.msra.mxu0 0
  %584 = vmatprep.subr.bf16.mxu0 0
  %585 = vmatpush2.bf16.msra.mxu0 0
  %586 = vmatprep.subr.bf16.mxu0 0
  %587 = vmatpush2.bf16.msra.mxu0 0
  %588 = vmatprep.subr.bf16.mxu0 0
  %589 = vmatpush2.bf16.msra.mxu0 0
  %590 = vmatprep.mubr.bf16.mxu0 0
  %591 = vmatmul.mubr.bf16.gmra.mxu0 %v118
  %v592 = vpop.f32.mrf.mxu0
  %v593 = vadd.f32 0.0, %v592
  %v594 = vpop.f32.mrf.mxu0
  %v595 = vadd.f32 0.0, %v594
  %v596 = vpop.f32.mrf.mxu0
  %v597 = vadd.f32 0.0, %v596
  %v598 = vpop.f32.mrf.mxu0
  %v599 = vadd.f32 0.0, %v598
  %600 = vdwg.mxu0
  %601 = vmatprep.subr.bf16.mxu0 %v525
  %602 = vmatpush1.bf16.msra.mxu0 %v524
  %603 = vmatprep.subr.bf16.mxu0 %v521
  %604 = vmatpush1.bf16.msra.mxu0 %v520
  %605 = vmatprep.subr.bf16.mxu0 %v517
  %606 = vmatpush1.bf16.msra.mxu0 %v516
  %607 = vmatprep.subr.bf16.mxu0 %v513
  %608 = vmatpush1.bf16.msra.mxu0 %v512
  %609 = vmatprep.subr.bf16.mxu0 %v509
  %610 = vmatpush1.bf16.msra.mxu0 %v508
  %611 = vmatprep.subr.bf16.mxu0 %v505
  %612 = vmatpush1.bf16.msra.mxu0 %v504
  %613 = vmatprep.subr.bf16.mxu0 %v501
  %614 = vmatpush1.bf16.msra.mxu0 %v500
  %615 = vmatprep.subr.bf16.mxu0 %v497
  %616 = vmatpush1.bf16.msra.mxu0 %v496
  %617 = vmatprep.subr.bf16.mxu0 0
  %618 = vmatpush2.bf16.msra.mxu0 0
  %619 = vmatprep.subr.bf16.mxu0 0
  %620 = vmatpush2.bf16.msra.mxu0 0
  %621 = vmatprep.subr.bf16.mxu0 0
  %622 = vmatpush2.bf16.msra.mxu0 0
  %623 = vmatprep.subr.bf16.mxu0 0
  %624 = vmatpush2.bf16.msra.mxu0 0
  %625 = vmatprep.subr.bf16.mxu0 0
  %626 = vmatpush2.bf16.msra.mxu0 0
  %627 = vmatprep.subr.bf16.mxu0 0
  %628 = vmatpush2.bf16.msra.mxu0 0
  %629 = vmatprep.subr.bf16.mxu0 0
  %630 = vmatpush2.bf16.msra.mxu0 0
  %631 = vmatprep.subr.bf16.mxu0 0
  %632 = vmatpush2.bf16.msra.mxu0 0
  %633 = vmatprep.mubr.bf16.mxu0 0
  %634 = vmatmul.mubr.bf16.gmra.mxu0 %v118
  %v635 = vpop.f32.mrf.mxu0
  %v636 = vadd.f32 0.0, %v635
  %v637 = vpop.f32.mrf.mxu0
  %v638 = vadd.f32 0.0, %v637
  %v639 = vpop.f32.mrf.mxu0
  %v640 = vadd.f32 0.0, %v639
  %v641 = vpop.f32.mrf.mxu0
  %v642 = vadd.f32 0.0, %v641
  %643 = vdwg.mxu0
  %v644 = vxor.u32 %v315, 2147483648
  %v645 = vxor.u32 %v317, 2147483648
  %v646 = vxor.u32 %v358, 2147483648
  %v647 = vxor.u32 %v360, 2147483648
  %v648 = vxor.u32 %v319, 2147483648
  %v649 = vxor.u32 %v321, 2147483648
  %v650 = vxor.u32 %v362, 2147483648
  %v651 = vxor.u32 %v364, 2147483648
  %v652 = vmul.f32 %v644, 1.442695
  %v653 = vpow.pop %v652
  %v654 = vmul.f32 %v645, 1.442695
  %v655 = vpow.pop %v654
  %v656 = vmul.f32 %v646, 1.442695
  %v657 = vpow.pop %v656
  %v658 = vmul.f32 %v647, 1.442695
  %v659 = vpow.pop %v658
  %v660 = vmul.f32 %v648, 1.442695
  %v661 = vpow.pop %v660
  %v662 = vmul.f32 %v649, 1.442695
  %v663 = vpow.pop %v662
  %v664 = vmul.f32 %v650, 1.442695
  %v665 = vpow.pop %v664
  %v666 = vmul.f32 %v651, 1.442695
  %v667 = vpow.pop %v666
  %v668 = vadd.f32 %v653, 1.0
  %v669 = vadd.f32 %v655, 1.0
  %v670 = vadd.f32 %v657, 1.0
  %v671 = vadd.f32 %v659, 1.0
  %v672 = vadd.f32 %v661, 1.0
  %v673 = vadd.f32 %v663, 1.0
  %v674 = vadd.f32 %v665, 1.0
  %v675 = vadd.f32 %v667, 1.0
  %v676 = vrcp.pop %v668
  %v677 = vmul.f32 1.0, %v676
  %v678 = vrcp.pop %v669
  %v679 = vmul.f32 1.0, %v678
  %v680 = vrcp.pop %v670
  %v681 = vmul.f32 1.0, %v680
  %v682 = vrcp.pop %v671
  %v683 = vmul.f32 1.0, %v682
  %v684 = vrcp.pop %v672
  %v685 = vmul.f32 1.0, %v684
  %v686 = vrcp.pop %v673
  %v687 = vmul.f32 1.0, %v686
  %v688 = vrcp.pop %v674
  %v689 = vmul.f32 1.0, %v688
  %v690 = vrcp.pop %v675
  %v691 = vmul.f32 1.0, %v690
  %v692 = vmul.f32 %v315, %v677
  %v693 = vmul.f32 %v317, %v679
  %v694 = vmul.f32 %v358, %v681
  %v695 = vmul.f32 %v360, %v683
  %v696 = vmul.f32 %v319, %v685
  %v697 = vmul.f32 %v321, %v687
  %v698 = vmul.f32 %v362, %v689
  %v699 = vmul.f32 %v364, %v691
  %v700 = vmul.f32 %v692, %v593
  %v701 = vmul.f32 %v693, %v595
  %v702 = vmul.f32 %v694, %v636
  %v703 = vmul.f32 %v695, %v638
  %v704 = vmul.f32 %v696, %v597
  %v705 = vmul.f32 %v697, %v599
  %v706 = vmul.f32 %v698, %v640
  %v707 = vmul.f32 %v699, %v642
  %v708 = vpack.c.bf16 %v704, %v700
  %v709 = vpack.c.bf16 %v705, %v701
  %v710 = vpack.c.bf16 %v706, %v702
  %v711 = vpack.c.bf16 %v707, %v703
  %v716 = vunpack.c.l.b16 %v708
  %v717 = vunpack.c.l.b16 %v709
  %v718 = vunpack.c.l.b16 %v710
  %v719 = vunpack.c.l.b16 %v711
  %v720 = vunpack.c.h.b16 %v708
  %v721 = vunpack.c.h.b16 %v709
  %v722 = vunpack.c.h.b16 %v710
  %v723 = vunpack.c.h.b16 %v711
  %v724 = vpack.c.b16 %v717, %v716
  %v725 = vpack.c.b16 %v719, %v718
  %v726 = vpack.c.b16 %v721, %v720
  %v727 = vpack.c.b16 %v723, %v722
  %732 = vst [vmem:[%s5] sm:$0xff] %v724
  %733 = vst [vmem:[%s5 + $0x8] sm:$0xff] %v725
  %734 = vst [vmem:[%s5 + $0x10] sm:$0xff] %v726
  %735 = vst [vmem:[%s5 + $0x18] sm:$0xff] %v727
  // Predicated region
  $region26: #{esmc_forward.19} parent=0 // pred_check
    _
  $region27: #{esmc_forward.19} parent=0 // pred_check_branch
    %737 = sbr.rel (0) target = $region29
  $region28: #{esmc_forward.19} parent=0 // pred_region
    _
  $region29: #{esmc_forward.19} parent=0 // pred_fallthru
    _
  // Predicated region
  $region30: #{esmc_forward.19} parent=0 // pred_check
    _
  $region31: #{esmc_forward.19} parent=0 // pred_check_branch
    %739 = sbr.rel (0) target = $region33
  $region32: #{esmc_forward.19} parent=0 // pred_region
    _
  $region33: #{esmc_forward.19} parent=0 // pred_fallthru
    _

// kernel: esmc_forward.29
$region0: #{esmc_forward.29}
  #allocation0 [shape = 'u32[]', space=smem, size = 0x4, offset = 0x4, fixed_abs, tag = 'smem constant byte address 0x4 - core index']
  #allocation1 [shape = 'u32[144,128]{1,0:T(1,128)}', space=vmem, size = 0x12000, scoped, tag = 'internal scratch']
  #allocation2 [shape = 'bf16[16,128]{1,0:T(8,128)(2,1)}', space=vmem, size = 0x1000, scoped, tag = 'scratch operand']
  %s0 = inlined_call_operand.vmem [shape: bf16[16,128], index: 0, kind: input, shape index: {}]
  %s1 = inlined_call_operand.vmem [shape: f32[1,128], index: 1, kind: input, shape index: {}]
  %s2 = inlined_call_operand.vmem [shape: f32[1,128], index: 2, kind: input, shape index: {}]
  %s3 = inlined_call_operand.vmem [shape: bf16[128,128], index: 3, kind: input, shape index: {}]
  %s4 = inlined_call_operand.vmem [shape: f32[1,128], index: 4, kind: input, shape index: {}]
  %s5 = inlined_call_operand.vmem [shape: f32[16,128], index: 5, kind: output, shape index: {}]
  %s6 = sld [smem:[#allocation0]]
  $region34: #{esmc_forward.29} parent=0
    _
  %s8 = ssub.s32 1, %s6
  %s9 = scalar_select 0, %s8, %s6
  // Predicated region
  $region2: #{esmc_forward.29} parent=0 // pred_check
    _
  $region3: #{esmc_forward.29} parent=0 // pred_check_branch
    %11 = sbr.rel (0) target = $region5
  $region4: #{esmc_forward.29} parent=0 // pred_region
    _
  $region5: #{esmc_forward.29} parent=0 // pred_fallthru
    _
  // Predicated region
  $region6: #{esmc_forward.29} parent=0 // pred_check
    _
  $region7: #{esmc_forward.29} parent=0 // pred_check_branch
    %13 = sbr.rel (0) target = $region9
  $region8: #{esmc_forward.29} parent=0 // pred_region
    _
  $region9: #{esmc_forward.29} parent=0 // pred_fallthru
    _
  // Predicated region
  $region10: #{esmc_forward.29} parent=0 // pred_check
    _
  $region11: #{esmc_forward.29} parent=0 // pred_check_branch
    %15 = sbr.rel (0) target = $region13
  $region12: #{esmc_forward.29} parent=0 // pred_region
    _
  $region13: #{esmc_forward.29} parent=0 // pred_fallthru
    _
  // Predicated region
  $region14: #{esmc_forward.29} parent=0 // pred_check
    _
  $region15: #{esmc_forward.29} parent=0 // pred_check_branch
    %17 = sbr.rel (0) target = $region17
  $region16: #{esmc_forward.29} parent=0 // pred_region
    _
  $region17: #{esmc_forward.29} parent=0 // pred_fallthru
    _
  // Predicated region
  $region18: #{esmc_forward.29} parent=0 // pred_check
    _
  $region19: #{esmc_forward.29} parent=0 // pred_check_branch
    %19 = sbr.rel (0) target = $region21
  $region20: #{esmc_forward.29} parent=0 // pred_region
    _
  $region21: #{esmc_forward.29} parent=0 // pred_fallthru
    _
  %p21 = scmp.eq.s32.totalorder 0, 0
  // Predicated region
  $region22: #{esmc_forward.29} parent=0 // pred_check
    %p22 = pneg %p21
  $region23: #{esmc_forward.29} parent=0 // pred_check_branch
    %24 = sbr.rel (%p22) target = $region25
  $region24: #{esmc_forward.29} parent=0 // pred_region
    %v25 = vld [vmem:[%s0] sm:$0xf]
    %v26 = vld [vmem:[%s0 + $0x4] sm:$0xf]
    %v27 = vunpack.c.l.bf16 %v25
    %v28 = vunpack.c.l.bf16 %v26
    %29 = vadd.xlane.f32.xlu0 %v27
    %v30 = vpop.xlane.xlu0 %29
    %31 = vadd.xlane.f32.xlu0 %v28
    %v32 = vpop.xlane.xlu0 %31
    %v33 = vrcp.pop 128.0
    %v34 = vmul.f32 %v30, %v33
    %v35 = vmul.f32 %v32, %v33
    %v36 = vsub.f32 %v27, %v34
    %v37 = vsub.f32 %v28, %v35
    %v38 = vmul.f32 %v36, %v36
    %v39 = vmul.f32 %v37, %v37
    %40 = vadd.xlane.f32.xlu0 %v38
    %v41 = vpop.xlane.xlu0 %40
    %42 = vadd.xlane.f32.xlu0 %v39
    %v43 = vpop.xlane.xlu0 %42
    %v44 = vmul.f32 %v41, %v33
    %v45 = vmul.f32 %v43, %v33
    %v46 = vadd.f32 %v44, 1e-05
    %v47 = vadd.f32 %v45, 1e-05
    %v48 = vrsqrt.pop %v46
    %v49 = vrsqrt.pop %v47
    %v50 = vmul.f32 %v36, %v48
    %v51 = vmul.f32 %v37, %v49
    %v52 = vld [vmem:[%s1] sm:$0x1]
    %v54 = vlaneseq
    %v55 = vshrl.u32 %v54, 7
    %v56 = vsub.s32 0, %v55
    %v57 = vrot.slane %v52, %v56
    %v59 = vmul.f32 %v50, %v57
    %v60 = vmul.f32 %v51, %v57
    %v61 = vld [vmem:[%s2] sm:$0x1]
    %v63 = vlaneseq
    %v64 = vshrl.u32 %v63, 7
    %v65 = vsub.s32 0, %v64
    %v66 = vrot.slane %v61, %v65
    %v68 = vadd.f32 %v59, %v66
    %v69 = vadd.f32 %v60, %v66
    %v70 = vpack.c.bf16 %v69, %v68
    %v72 = vunpack.c.l.b16 %v70
    %v73 = vunpack.c.h.b16 %v70
    %v74 = vpack.c.b16 %v72, %v72
    %v75 = vpack.c.b16 %v73, %v73
    %78 = vst [vmem:[#allocation2] sm:$0xf] %v74
    %79 = vst [vmem:[#allocation2 + $0x4] sm:$0xf] %v75
  $region25: #{esmc_forward.29} parent=0 // pred_fallthru
    _
  %v80 = vld [vmem:[#allocation2] sm:$0xf]
  %v81 = vld [vmem:[#allocation2 + $0x4] sm:$0xf]
  %v82 = vld [vmem:[%s3] sm:$0xf]
  %v83 = vld [vmem:[%s3 + $0x4] sm:$0xf]
  %v84 = vld [vmem:[%s3 + $0x8] sm:$0xf]
  %v85 = vld [vmem:[%s3 + $0xc] sm:$0xf]
  %v86 = vld [vmem:[%s3 + $0x10] sm:$0xf]
  %v87 = vld [vmem:[%s3 + $0x14] sm:$0xf]
  %v88 = vld [vmem:[%s3 + $0x18] sm:$0xf]
  %v89 = vld [vmem:[%s3 + $0x1c] sm:$0xf]
  %v90 = vld [vmem:[%s3 + $0x20] sm:$0xf]
  %v91 = vld [vmem:[%s3 + $0x24] sm:$0xf]
  %v92 = vld [vmem:[%s3 + $0x28] sm:$0xf]
  %v93 = vld [vmem:[%s3 + $0x2c] sm:$0xf]
  %v94 = vld [vmem:[%s3 + $0x30] sm:$0xf]
  %v95 = vld [vmem:[%s3 + $0x34] sm:$0xf]
  %v96 = vld [vmem:[%s3 + $0x38] sm:$0xf]
  %v97 = vld [vmem:[%s3 + $0x3c] sm:$0xf]
  %v98 = vld [vmem:[%s4] sm:$0x1]
  %v100 = vlaneseq
  %v101 = vshrl.u32 %v100, 7
  %v102 = vsub.s32 0, %v101
  %v103 = vrot.slane %v98, %v102
  %v107 = vunpack.c.l.b16 %v80
  %v108 = vunpack.c.l.b16 %v81
  %v109 = vpack.c.b16 %v108, %v107
  %v127 = vunpack.c.l.b16 %v82
  %v128 = vunpack.c.l.b16 %v83
  %v129 = vunpack.c.l.b16 %v84
  %v130 = vunpack.c.l.b16 %v85
  %v131 = vunpack.c.l.b16 %v86
  %v132 = vunpack.c.l.b16 %v87
  %v133 = vunpack.c.l.b16 %v88
  %v134 = vunpack.c.l.b16 %v89
  %v135 = vunpack.c.l.b16 %v90
  %v136 = vunpack.c.l.b16 %v91
  %v137 = vunpack.c.l.b16 %v92
  %v138 = vunpack.c.l.b16 %v93
  %v139 = vunpack.c.l.b16 %v94
  %v140 = vunpack.c.l.b16 %v95
  %v141 = vunpack.c.l.b16 %v96
  %v142 = vunpack.c.l.b16 %v97
  %v143 = vpack.c.b16 %v128, %v127
  %v144 = vpack.c.b16 %v130, %v129
  %v145 = vpack.c.b16 %v132, %v131
  %v146 = vpack.c.b16 %v134, %v133
  %v147 = vpack.c.b16 %v136, %v135
  %v148 = vpack.c.b16 %v138, %v137
  %v149 = vpack.c.b16 %v140, %v139
  %v150 = vpack.c.b16 %v142, %v141
  %159 = vmatprep.subr.bf16.mxu0 0
  %160 = vmatpush1.bf16.msra.mxu0 %v150
  %161 = vmatprep.subr.bf16.mxu0 0
  %162 = vmatpush1.bf16.msra.mxu0 %v149
  %163 = vmatprep.subr.bf16.mxu0 0
  %164 = vmatpush1.bf16.msra.mxu0 %v148
  %165 = vmatprep.subr.bf16.mxu0 0
  %166 = vmatpush1.bf16.msra.mxu0 %v147
  %167 = vmatprep.subr.bf16.mxu0 0
  %168 = vmatpush1.bf16.msra.mxu0 %v146
  %169 = vmatprep.subr.bf16.mxu0 0
  %170 = vmatpush1.bf16.msra.mxu0 %v145
  %171 = vmatprep.subr.bf16.mxu0 0
  %172 = vmatpush1.bf16.msra.mxu0 %v144
  %173 = vmatprep.subr.bf16.mxu0 0
  %174 = vmatpush1.bf16.msra.mxu0 %v143
  %175 = vmatprep.subr.bf16.mxu0 0
  %176 = vmatpush2.bf16.msra.mxu0 0
  %177 = vmatprep.subr.bf16.mxu0 0
  %178 = vmatpush2.bf16.msra.mxu0 0
  %179 = vmatprep.subr.bf16.mxu0 0
  %180 = vmatpush2.bf16.msra.mxu0 0
  %181 = vmatprep.subr.bf16.mxu0 0
  %182 = vmatpush2.bf16.msra.mxu0 0
  %183 = vmatprep.subr.bf16.mxu0 0
  %184 = vmatpush2.bf16.msra.mxu0 0
  %185 = vmatprep.subr.bf16.mxu0 0
  %186 = vmatpush2.bf16.msra.mxu0 0
  %187 = vmatprep.subr.bf16.mxu0 0
  %188 = vmatpush2.bf16.msra.mxu0 0
  %189 = vmatprep.subr.bf16.mxu0 0
  %190 = vmatpush2.bf16.msra.mxu0 0
  %191 = vmatprep.mubr.bf16.mxu0 0
  %192 = vmatmul.mubr.bf16.gmra.mxu0 %v109
  %v193 = vpop.f32.mrf.mxu0
  %v194 = vadd.f32 %v103, %v193
  %v195 = vpop.f32.mrf.mxu0
  %v196 = vpop.f32.mrf.mxu0
  %v197 = vadd.f32 %v103, %v196
  %v198 = vpop.f32.mrf.mxu0
  %199 = vdwg.mxu0
  %200 = vst [vmem:[%s5] sm:$0xff] %v194
  %201 = vst [vmem:[%s5 + $0x8] sm:$0xff] %v197
  // Predicated region
  $region26: #{esmc_forward.29} parent=0 // pred_check
    _
  $region27: #{esmc_forward.29} parent=0 // pred_check_branch
    %203 = sbr.rel (0) target = $region29
  $region28: #{esmc_forward.29} parent=0 // pred_region
    _
  $region29: #{esmc_forward.29} parent=0 // pred_fallthru
    _
  // Predicated region
  $region30: #{esmc_forward.29} parent=0 // pred_check
    _
  $region31: #{esmc_forward.29} parent=0 // pred_check_branch
    %205 = sbr.rel (0) target = $region33
  $region32: #{esmc_forward.29} parent=0 // pred_region
    _
  $region33: #{esmc_forward.29} parent=0 // pred_fallthru
    _

// kernel: esmc_forward.27
$region0: #{esmc_forward.27}
  #allocation0 [shape = 'u32[]', space=smem, size = 0x4, offset = 0x4, fixed_abs, tag = 'smem constant byte address 0x4 - core index']
  #allocation1 [shape = 'u32[144,128]{1,0:T(1,128)}', space=vmem, size = 0x12000, scoped, tag = 'internal scratch']
  %s0 = inlined_call_operand.vmem [shape: bf16[16,128], index: 0, kind: input, shape index: {}]
  %s1 = inlined_call_operand.vmem [shape: f32[1,128], index: 1, kind: input, shape index: {}]
  %s2 = inlined_call_operand.hbm [shape: f32[16,128], index: 2, kind: output, shape index: {}]
  %s3 = sld [smem:[#allocation0]]
  $region18: #{esmc_forward.27} parent=0
    _
  %s5 = ssub.s32 1, %s3
  %s6 = scalar_select 0, %s5, %s3
  $region1: #{esmc_forward.27} parent=0
    #allocation2 [shape = 'u8[8192]{0}', space=vmem, size = 0x2000, scoped, tag = 'output window, operand 0, single buffered']
    #allocation3 [shape = 's32[1]{0}', space=sflag, size = 0x4, scoped, tag = 'scoped memory for esmc_forward.27']
    %7 = vsyncpa [#allocation3], 0
    // Predicated region
    $region2: #{esmc_forward.27} parent=1 // pred_check
      _
    $region3: #{esmc_forward.27} parent=1 // pred_check_branch
      %9 = sbr.rel (0) target = $region5
    $region4: #{esmc_forward.27} parent=1 // pred_region
      _
    $region5: #{esmc_forward.27} parent=1 // pred_fallthru
      _
    // Predicated region
    $region6: #{esmc_forward.27} parent=1 // pred_check
      _
    $region7: #{esmc_forward.27} parent=1 // pred_check_branch
      %11 = sbr.rel (0) target = $region9
    $region8: #{esmc_forward.27} parent=1 // pred_region
      _
    $region9: #{esmc_forward.27} parent=1 // pred_fallthru
      _
    %v12 = vld [vmem:[%s0] sm:$0xf]
    %v13 = vld [vmem:[%s0 + $0x4] sm:$0xf]
    %v14 = vunpack.c.l.bf16 %v12
    %v15 = vunpack.c.l.bf16 %v13
    %16 = vadd.xlane.f32.xlu0 %v14
    %v17 = vpop.xlane.xlu0 %16
    %18 = vadd.xlane.f32.xlu0 %v15
    %v19 = vpop.xlane.xlu0 %18
    %v20 = vrcp.pop 128.0
    %v21 = vmul.f32 %v17, %v20
    %v22 = vmul.f32 %v19, %v20
    %v23 = vsub.f32 %v14, %v21
    %v24 = vsub.f32 %v15, %v22
    %v25 = vmul.f32 %v23, %v23
    %v26 = vmul.f32 %v24, %v24
    %27 = vadd.xlane.f32.xlu0 %v25
    %v28 = vpop.xlane.xlu0 %27
    %29 = vadd.xlane.f32.xlu0 %v26
    %v30 = vpop.xlane.xlu0 %29
    %v31 = vmul.f32 %v28, %v20
    %v32 = vmul.f32 %v30, %v20
    %v33 = vadd.f32 %v31, 1e-05
    %v34 = vadd.f32 %v32, 1e-05
    %v35 = vrsqrt.pop %v33
    %v36 = vrsqrt.pop %v34
    %v37 = vmul.f32 %v23, %v35
    %v38 = vmul.f32 %v24, %v36
    %v39 = vld [vmem:[%s1] sm:$0x1]
    %v41 = vlaneseq
    %v42 = vshrl.u32 %v41, 7
    %v43 = vsub.s32 0, %v42
    %v44 = vrot.slane %v39, %v43
    %v46 = vmul.f32 %v37, %v44
    %v47 = vmul.f32 %v38, %v44
    %48 = vst [vmem:[#allocation2] sm:$0xff] %v46
    %49 = vst [vmem:[#allocation2 + $0x8] sm:$0xff] %v47
    // Predicated region
    $region10: #{esmc_forward.27} parent=1 // pred_check
      _
    $region11: #{esmc_forward.27} parent=1 // pred_check_branch
      %51 = sbr.rel (0) target = $region13
    $region12: #{esmc_forward.27} parent=1 // pred_region
      %s53 = ssub.s32 256, 256
      %54 = vsyncadd [#allocation3], %s53
      %s55 = sshll.u32 [#allocation2], 4
      %s56 = int_to_ptr.vmem [resolvable:$true] %s55
      %61 = dma.vmem_to_hbm [thread:$0]  %s56, 256, %s2, [#allocation3], 128, 128, 8
    $region13: #{esmc_forward.27} parent=1 // pred_fallthru
      _
    // Predicated region
    $region14: #{esmc_forward.27} parent=1 // pred_check
      _
    $region15: #{esmc_forward.27} parent=1 // pred_check_branch
      %63 = sbr.rel (0) target = $region17
    $region16: #{esmc_forward.27} parent=1 // pred_region
      %64 = dma.done [#allocation3], 256
    $region17: #{esmc_forward.27} parent=1 // pred_fallthru
      _
    %65 = vsyncpa [#allocation3], 1

</llo_original>
